<compile_context>
chip_gen: v7x
topology: tpu7x:2x2x1
jax: 0.10.0
libtpu: 0.0.40
codegen_flags: <defaults>
</compile_context>

<pallas_src>
import functools
import itertools
import math

import numpy as np
import jax
import jax.numpy as jnp
from jax import lax
from jax.experimental import pallas as pl
from jax.experimental.pallas import tpu as pltpu

# ----------------------------- config ---------------------------------------
IN_DIM = 4
HID_DIM = 32
Z_DIM = 16
MAX_NODES = 8
R_INT = 6                                    # number of "real" nodes per graph
NUM_OFF = MAX_NODES * (MAX_NODES - 1) // 2   # 28
NUM_LOGITS = NUM_OFF + MAX_NODES             # 36
NUM_LOGITS_PAD = 40                          # padded to a multiple of 8
NPERM = math.factorial(R_INT)                # 720
NPERM_PAD = 768                              # padded to a multiple of 128
MPM_ITERS = 50
MPM_UNROLL = 5                               # convergence check every 5 steps (<= 50 total)
MPM_TOL = 1e-4
BN_EPS = 1e-5
LANES = 128

# per-graph data slab (8,128) lane layout
_D_X = 0        # [:, 0:4]     node features
_D_ADJ = 8      # [:, 8:16]    dense ground-truth adjacency
_D_EPS = 16     # [0, 16:32]   reparameterisation noise

# per-graph output slab (8,128) lane layout
_O_AHAT = 0     # [:, 0:8]     adjacency logits (masked)
_O_X = 8        # [:, 8:16]    MPM assignment matrix
_O_Q = 16       # [:, 16:24]   selected permutation matrix
_O_SCAL = 24    # [0, 24:29]   rec, kl, loss, max_logit, logvar_max
_O_MU = 29      # [0, 29:45]
_O_LV = 45      # [0, 45:61]
_O_VEC = 61     # [0, 61:101]  raw decoder logits (padded to 40)
_STATS_W = LANES - _O_SCAL                                  # 104
_STATS_PAD = _STATS_W - (5 + Z_DIM + Z_DIM + NUM_LOGITS_PAD)  # 27


# ----------------------------- slab packing ----------------------------------
def _round8(r):
    return ((r + 7) // 8) * 8


class _SlabBuilder:
    """Packs many small f32 arrays into one (rows,128) slab at 8-row-aligned static offsets."""

    def __init__(self):
        self._chunks, self._offs, self._row = [], {}, 0

    def add(self, name, arr):
        arr = np.asarray(arr, np.float32)
        if arr.ndim == 1:
            arr = arr[None, :]
        r, c = arr.shape
        buf = np.zeros((_round8(r), LANES), np.float32)
        buf[:r, :c] = arr
        self._offs[name] = (self._row, r, c)
        self._chunks.append(buf)
        self._row += buf.shape[0]
        return self

    def finish(self):
        return np.concatenate(self._chunks, axis=0), dict(self._offs)


def _placement_constants():
    """Constant matrices so vec->adj, Q and Q^T are built with matmuls (no scatter/reshape)."""
    N, U, UP = MAX_NODES, NUM_OFF, NUM_LOGITS_PAD
    iu, ju = np.triu_indices(N, k=1)
    rsel = np.zeros((N, UP), np.float32)
    cselT = np.zeros((UP, N), np.float32)
    csel2 = np.zeros((N, UP), np.float32)
    rselT2 = np.zeros((UP, N), np.float32)
    for u, (i, j) in enumerate(zip(iu, ju)):        # upper-tri off-diag entries
        rsel[i, u] = 1.0
        cselT[u, j] = 1.0
        csel2[j, u] = 1.0                           # mirrored lower-tri
        rselT2[u, i] = 1.0
    for d in range(N):                              # diagonal entries (once)
        u = U + d
        rsel[d, u] = 1.0
        cselT[u, d] = 1.0
    stack_sel = np.concatenate([rsel, csel2], axis=1)   # (8, 80)
    stack_T = np.concatenate([cselT, rselT2], axis=0)   # (80, 8)

    # div/mod selectors over the flat index u = 8*a + i
    divsel = np.zeros((N, N * N), np.float32)       # divsel[r,u] = [u//8 == r]
    modsel = np.zeros((N, N * N), np.float32)       # modsel[r,u] = [u%8  == r]
    for a in range(N):
        for i in range(N):
            u = N * a + i
            divsel[a, u] = 1.0
            modsel[i, u] = 1.0
    return stack_sel, stack_T, divsel, divsel.T.copy(), modsel, modsel.T.copy()


def build_perm_tables():
    """All 6! permutations: score table (64,768) and full-Q table (768,64), lane/row padded."""
    perms = list(itertools.permutations(range(R_INT)))
    score_tab = np.zeros((MAX_NODES * MAX_NODES, NPERM_PAD), np.float32)
    q_tab = np.zeros((NPERM_PAD, MAX_NODES * MAX_NODES), np.float32)
    for k, p in enumerate(perms):
        pf = list(range(MAX_NODES))                 # perm_full:  pf[col] = row, identity on pad
        for i, a in enumerate(p):                   # row i assigned to column a = p(i)
            score_tab[MAX_NODES * i + a, k] = 1.0
            pf[a] = i
        for a in range(MAX_NODES):                  # Q[a, pf[a]] = 1
            q_tab[k, MAX_NODES * a + pf[a]] = 1.0
    return jnp.asarray(score_tab), jnp.asarray(q_tab)


# ----------------------------- fused kernel ----------------------------------
def _fused_kernel(p_ref, st_ref, qt_ref, d_ref, o_ref, *, offs, R, N):
    """encoder -> reparam -> decoder -> vec->adj -> MPM -> assignment -> losses, all on-chip."""
    f32 = jnp.float32

    def rd(name):
        r0, r, c = offs[name]
        return p_ref[r0:r0 + r, 0:c]

    def softplus(v):
        return jnp.maximum(v, 0.0) + jnp.log(1.0 + jnp.exp(-jnp.abs(v)))

    # ---- static masks from 2-D iota ----
    row_i = lax.broadcasted_iota(jnp.int32, (N, N), 0)
    col_i = lax.broadcasted_iota(jnp.int32, (N, N), 1)
    eye = (row_i == col_i).astype(f32)
    real = jnp.logical_and(row_i < R, col_i < R).astype(f32)
    offmask = real * (1.0 - eye)
    trimask = jnp.logical_and(row_i < col_i, col_i < R).astype(f32)     # 15 real upper pairs
    diagmask = eye * real                                               # 6 real diag entries

    x = d_ref[0:N, _D_X:_D_X + IN_DIM]
    a_gt = d_ref[0:N, _D_ADJ:_D_ADJ + N]
    eps = d_ref[0:1, _D_EPS:_D_EPS + Z_DIM]
    pos_w = rd("posw")                                                  # (1,1)

    # ---- GCN normalised adjacency: D^-1/2 (A + I) D^-1/2 ----
    a_tilde = a_gt + eye
    dinv_c = lax.rsqrt(jnp.sum(a_tilde, axis=1, keepdims=True))
    dinv_r = lax.rsqrt(jnp.sum(a_tilde, axis=0, keepdims=True))
    anorm = a_tilde * dinv_c * dinv_r

    def bn_relu(h, gamma, beta):
        mean = jnp.mean(h, axis=0, keepdims=True)
        var = jnp.mean((h - mean) * (h - mean), axis=0, keepdims=True)
        scale = gamma * lax.rsqrt(var + BN_EPS)
        shift = beta - mean * scale
        return jnp.maximum(h * scale + shift, 0.0)

    # ---- encoder ----
    h = jnp.dot(anorm, jnp.dot(x, rd("w1"), preferred_element_type=f32),
                preferred_element_type=f32) + rd("b1")
    h = bn_relu(h, rd("g1"), rd("be1"))
    h = jnp.dot(anorm, jnp.dot(h, rd("w2"), preferred_element_type=f32),
                preferred_element_type=f32) + rd("b2")
    h = bn_relu(h, rd("g2"), rd("be2"))

    gvec = jnp.sum(h, axis=0, keepdims=True) * (1.0 / R)
    mu = jnp.dot(gvec, rd("wmu"), preferred_element_type=f32) + rd("bmu")
    logvar = jnp.clip(jnp.dot(gvec, rd("wlv"), preferred_element_type=f32) + rd("blv"),
                      -4.0, 4.0)

    # ---- reparameterisation (noise supplied as input) ----
    z = mu + eps * jnp.exp(0.5 * logvar)

    # ---- decoder: Linear -> ReLU -> Linear -> Tanh (logit axis padded to 40) ----
    hd = jnp.maximum(jnp.dot(z, rd("wd1"), preferred_element_type=f32) + rd("bd1"), 0.0)
    vec = jnp.tanh(jnp.dot(hd, rd("wd2"), preferred_element_type=f32) + rd("bd2"))   # (1,40)

    # ---- vec -> symmetric adjacency logits via ONE stacked placement matmul ----
    vec2 = jnp.concatenate([vec, vec], axis=1)                                        # (1,80)
    sym = jnp.dot(rd("stack_sel") * vec2, rd("stack_T"), preferred_element_type=f32)  # (8,8)
    a_hat = jnp.where(real > 0.5, sym, -10.0)

    # ---- reduced edge-similarity quantities for MPM ----
    b0 = offmask / (1.0 + jnp.exp(-a_hat))      # sigmoid(A_hat), zero diag, real block only
    a0 = a_gt * offmask                         # A with zero diag, real block only
    deg_a = jnp.sum(a0, axis=1, keepdims=True) + 1.0
    deg_b = jnp.sum(b0, axis=0, keepdims=True) + 1.0          # b0 symmetric
    node_sim = 1.0 / (jnp.abs(deg_a - deg_b) + 1.0)
    x0 = real * (1.0 / R)

    divsel = rd("divsel")                                      # (8,64): [u//8 == r]
    # loop-invariant max-pool RHS: RHS[r, 8*b + a] = [r==b] * b0[b, a]
    rhs_big = jnp.concatenate([b0] * R, axis=1) * divsel[:, 0:N * R]          # (8,48)

    def mpm_step(X):
        # M_all[j, 8b+a] = X[j,b] * b0[b,a]  -> ONE matmul, then lane-group max over b
        m_all = jnp.dot(X, rhs_big, preferred_element_type=f32)               # (8,48)
        m = m_all[:, 0:N]
        for b in range(1, R):
            m = jnp.maximum(m, m_all[:, b * N:(b + 1) * N])
        xn = X * node_sim + jnp.dot(a0, m, preferred_element_type=f32)
        return xn * lax.rsqrt(jnp.sum(xn * xn))                # /||X||_F via EUP rsqrt

    def cond(carry):
        _, it, diff = carry
        return jnp.logical_and(it < MPM_ITERS, diff >= MPM_TOL)

    def body(carry):
        X, it, _ = carry
        xp = X
        for _ in range(MPM_UNROLL):                            # amortised convergence check
            X = mpm_step(X)
        return X, it + MPM_UNROLL, jnp.max(jnp.abs(X - xp))

    x_fin, _, _ = lax.while_loop(
        cond, body, (x0, jnp.array(0, jnp.int32), jnp.array(jnp.inf, jnp.float32)))

    # ---- exhaustive assignment over all 720 permutations, entirely on-chip ----
    # TODO(synk): general Hungarian (scipy.linear_sum_assignment) has no Pallas equivalent;
    # for R=6 the exhaustive 720-permutation argmax is exact.
    x_rep = jnp.concatenate([x_fin] * N, axis=1)                              # (8,64)
    x_flat = jnp.sum(x_rep * divsel, axis=0, keepdims=True)                   # (1,64) row-major
    scores = jnp.dot(x_flat, st_ref[...], preferred_element_type=f32)         # (1,768) lane-dense

    k_iota = lax.broadcasted_iota(jnp.int32, (1, NPERM_PAD), 1).astype(f32)
    s = jnp.where(k_iota < float(NPERM), scores, -1e30)
    smax = jnp.max(s, axis=1, keepdims=True)
    first = jnp.min(jnp.where(s >= smax, k_iota, float(NPERM_PAD)), axis=1, keepdims=True)
    sel = (k_iota == first).astype(f32)                                       # one-hot (1,768)

    q_flat = jnp.dot(sel, qt_ref[...], preferred_element_type=f32)            # (1,64)
    q_mat = jnp.dot(divsel * q_flat, rd("modselT"), preferred_element_type=f32)       # Q   (8,8)
    qt_mat = jnp.dot(rd("modsel") * q_flat, rd("divselT"), preferred_element_type=f32)  # Q^T

    a_gt_p = jnp.dot(jnp.dot(q_mat, a_gt, preferred_element_type=f32), qt_mat,
                     preferred_element_type=f32)
    a_pr_p = jnp.dot(jnp.dot(q_mat, a_hat, preferred_element_type=f32), qt_mat,
                     preferred_element_type=f32)

    # ---- losses (BCE-with-logits + KL) ----
    bce = pos_w * a_gt_p * softplus(-a_pr_p) + (1.0 - a_gt_p) * softplus(a_pr_p)
    loss_edges = jnp.sum(bce * trimask, keepdims=True) * (1.0 / (R * (R - 1) / 2))
    loss_nodes = jnp.sum(softplus(-a_pr_p) * diagmask, keepdims=True) * (1.0 / R)
    loss_rec = loss_edges + 0.1 * loss_nodes
    loss_kl = -0.5 * jnp.sum(1.0 + logvar - mu * mu - jnp.exp(logvar), keepdims=True) / Z_DIM
    max_logit = jnp.max(jnp.abs(vec), keepdims=True)
    lv_max = jnp.max(logvar, keepdims=True)

    # ---- assemble everything in registers; single unmasked (8,128) writeback ----
    stats = jnp.concatenate(
        [loss_rec, loss_kl, loss_rec + loss_kl, max_logit, lv_max,
         mu, logvar, vec, jnp.zeros((1, _STATS_PAD), f32)], axis=1)           # (1,104)
    stats_blk = jnp.concatenate([stats, jnp.zeros((N - 1, _STATS_W), f32)], axis=0)
    o_ref[...] = jnp.concatenate([a_hat, x_fin, q_mat, stats_blk], axis=1)


# ----------------------------- parameters ------------------------------------
def _xavier(key, fan_in, fan_out):
    gain = math.sqrt(2.0)                       # calculate_gain('relu')
    bound = gain * math.sqrt(6.0 / (fan_in + fan_out))
    return jax.random.uniform(key, (fan_in, fan_out), jnp.float32, -bound, bound)


def init_params(key):
    ks = jax.random.split(key, 6)
    return {
        "w1": _xavier(ks[0], IN_DIM, HID_DIM), "b1": jnp.zeros((1, HID_DIM), jnp.float32),
        "g1": jnp.ones((1, HID_DIM), jnp.float32), "be1": jnp.zeros((1, HID_DIM), jnp.float32),
        "w2": _xavier(ks[1], HID_DIM, HID_DIM), "b2": jnp.zeros((1, HID_DIM), jnp.float32),
        "g2": jnp.ones((1, HID_DIM), jnp.float32), "be2": jnp.zeros((1, HID_DIM), jnp.float32),
        "wmu": _xavier(ks[2], HID_DIM, Z_DIM), "bmu": jnp.zeros((1, Z_DIM), jnp.float32),
        "wlv": _xavier(ks[3], HID_DIM, Z_DIM), "blv": jnp.zeros((1, Z_DIM), jnp.float32),
        "wd1": _xavier(ks[4], Z_DIM, HID_DIM), "bd1": jnp.zeros((1, HID_DIM), jnp.float32),
        "wd2": _xavier(ks[5], HID_DIM, NUM_LOGITS), "bd2": jnp.zeros((1, NUM_LOGITS), jnp.float32),
    }


def build_param_slab(params, pos_weight):
    stack_sel, stack_T, divsel, divselT, modsel, modselT = _placement_constants()
    # pad the decoder output layer to 40 logits (extra columns are zero -> tanh(0) = 0)
    wd2p = np.zeros((HID_DIM, NUM_LOGITS_PAD), np.float32)
    wd2p[:, :NUM_LOGITS] = np.asarray(params["wd2"], np.float32)
    bd2p = np.zeros((1, NUM_LOGITS_PAD), np.float32)
    bd2p[0, :NUM_LOGITS] = np.asarray(params["bd2"], np.float32)[0]

    b = _SlabBuilder()
    for name in ("w1", "b1", "g1", "be1", "w2", "b2", "g2", "be2",
                 "wmu", "bmu", "wlv", "blv", "wd1", "bd1"):
        b.add(name, params[name])
    b.add("wd2", wd2p).add("bd2", bd2p)
    b.add("stack_sel", stack_sel).add("stack_T", stack_T)
    b.add("divsel", divsel).add("divselT", divselT)
    b.add("modsel", modsel).add("modselT", modselT)
    b.add("posw", np.array([[pos_weight]], np.float32))
    slab, offs = b.finish()
    return jnp.asarray(slab), offs


# ----------------------------- forward ----------------------------------------
def make_forward(offsets, n_param_rows, batch):
    kernel = functools.partial(_fused_kernel, offs=offsets, R=R_INT, N=MAX_NODES)
    fused = pl.pallas_call(
        kernel,
        grid=(batch,),
        in_specs=[
            pl.BlockSpec((n_param_rows, LANES), lambda b: (0, 0)),       # params: VMEM-resident
            pl.BlockSpec((MAX_NODES * MAX_NODES, NPERM_PAD), lambda b: (0, 0)),
            pl.BlockSpec((NPERM_PAD, MAX_NODES * MAX_NODES), lambda b: (0, 0)),
            pl.BlockSpec((None, MAX_NODES, LANES), lambda b: (b, 0, 0)),  # per-graph data
        ],
        out_specs=pl.BlockSpec((None, MAX_NODES, LANES), lambda b: (b, 0, 0)),
        out_shape=jax.ShapeDtypeStruct((batch, MAX_NODES, LANES), jnp.float32),
        compiler_params=pltpu.CompilerParams(dimension_semantics=("parallel",)),
    )

    @jax.jit
    def forward(param_slab, score_tab, q_tab, data_slabs):
        out = fused(param_slab, score_tab, q_tab, data_slabs)
        rec = out[:, 0, _O_SCAL + 0]
        kl = out[:, 0, _O_SCAL + 1]
        mlog = out[:, 0, _O_SCAL + 3]
        lvmax = out[:, 0, _O_SCAL + 4]
        loss_rec = jnp.mean(rec)
        loss_kl = jnp.mean(kl)
        return {"rec": loss_rec, "kl": loss_kl, "loss": loss_rec + loss_kl,
                "max_logit": jnp.max(mlog), "logvar_max": lvmax[-1]}

    return forward


# ----------------------------- main -------------------------------------------
if __name__ == "__main__":
    key = jax.random.PRNGKey(0)
    k_param, k_feat, k_eps = jax.random.split(key, 3)

    params = init_params(k_param)

    # two synthetic graphs, 6 real nodes each, 2 padded nodes
    graph_edges = [
        [(0, 1), (1, 2), (2, 3), (3, 4), (4, 5), (5, 0), (0, 3)],   # cycle + chord
        [(0, 1), (1, 2), (2, 3), (3, 4), (4, 5), (1, 4), (2, 5)],   # path + two chords
    ]
    B = len(graph_edges)
    adjs = np.zeros((B, MAX_NODES, MAX_NODES), np.float32)
    for g, edges in enumerate(graph_edges):
        for i, j in edges:
            adjs[g, i, j] = 1.0
            adjs[g, j, i] = 1.0

    # dataset-level pos_weight (precompute_dataset_rho over both graphs)
    iu, ju = np.triu_indices(MAX_NODES, k=1)
    rho = float(adjs[:, iu, ju].sum()) / (B * MAX_NODES * (MAX_NODES - 1) / 2 + 1e-8)
    pos_weight = float(np.clip((1.0 - rho) / (rho + 1e-8), 1.0, 20.0))

    param_slab, offsets = build_param_slab(params, pos_weight)
    score_tab, q_tab = build_perm_tables()
    forward = make_forward(offsets, param_slab.shape[0], B)

    x_feat = jax.random.normal(k_feat, (B, R_INT, IN_DIM), jnp.float32)
    eps = jax.random.normal(k_eps, (B, Z_DIM), jnp.float32)

    data_np = np.zeros((B, MAX_NODES, LANES), np.float32)
    data_np[:, :R_INT, _D_X:_D_X + IN_DIM] = np.asarray(x_feat)
    data_np[:, :, _D_ADJ:_D_ADJ + MAX_NODES] = adjs
    data_np[:, 0, _D_EPS:_D_EPS + Z_DIM] = np.asarray(eps)
    data_slabs = jnp.asarray(data_np)

    out = forward(param_slab, score_tab, q_tab, data_slabs)
    jax.block_until_ready(out["loss"])
    assert np.isfinite(float(out["loss"])), "non-finite loss"
    assert np.isfinite(float(out["rec"])) and np.isfinite(float(out["kl"]))
    print("KERNEL_OK")
</pallas_src>

<mosaic_0001>
module attributes {stable_mosaic.version = 11 : i64} {
  func.func @_fused_kernel(%arg0: i32, %arg1: memref<472x128xf32, #tpu.memory_space<vmem>>, %arg2: memref<64x768xf32, #tpu.memory_space<vmem>>, %arg3: memref<768x64xf32, #tpu.memory_space<vmem>>, %arg4: memref<1x8x128xf32, #tpu.memory_space<vmem>>, %arg5: memref<1x8x128xf32, #tpu.memory_space<vmem>>) attributes {dimension_semantics = [#tpu.dimension_semantics<parallel>], iteration_bounds = array<i64: 2>, scalar_prefetch = 0 : i64, scratch_operands = 0 : i64, tpu.core_type = #tpu.core_type<tc>, window_params = [{pipeline_mode = #tpu.pipeline_mode<synchronous>, transform_indices = @transform_0, window_bounds = array<i64: 472, 128>}, {pipeline_mode = #tpu.pipeline_mode<synchronous>, transform_indices = @transform_1, window_bounds = array<i64: 64, 768>}, {pipeline_mode = #tpu.pipeline_mode<synchronous>, transform_indices = @transform_2, window_bounds = array<i64: 768, 64>}, {transform_indices = @transform_3, window_bounds = array<i64: 1, 8, 128>}, {transform_indices = @transform_4, window_bounds = array<i64: 1, 8, 128>}]} {
    %0 = tpu.iota {dimensions = array<i32: 0>} : vector<8x8xi32>
    %1 = tpu.iota {dimensions = array<i32: 1>} : vector<8x8xi32>
    %2 = arith.cmpi eq, %0, %1 : vector<8x8xi32>
    %3 = arith.extui %2 : vector<8x8xi1> to vector<8x8xi32>
    %4 = arith.sitofp %3 : vector<8x8xi32> to vector<8x8xf32>
    %c6_i32 = arith.constant 6 : i32
    %5 = vector.broadcast %c6_i32 : i32 to vector<8x8xi32>
    %6 = arith.cmpi slt, %0, %5 : vector<8x8xi32>
    %c6_i32_0 = arith.constant 6 : i32
    %7 = vector.broadcast %c6_i32_0 : i32 to vector<8x8xi32>
    %8 = arith.cmpi slt, %1, %7 : vector<8x8xi32>
    %9 = arith.andi %6, %8 : vector<8x8xi1>
    %10 = arith.extui %9 : vector<8x8xi1> to vector<8x8xi32>
    %11 = arith.sitofp %10 : vector<8x8xi32> to vector<8x8xf32>
    %cst = arith.constant 1.000000e+00 : f32
    %12 = vector.broadcast %cst : f32 to vector<8x8xf32>
    %13 = arith.subf %12, %4 : vector<8x8xf32>
    %14 = arith.mulf %11, %13 : vector<8x8xf32>
    %15 = arith.cmpi slt, %0, %1 : vector<8x8xi32>
    %c6_i32_1 = arith.constant 6 : i32
    %16 = vector.broadcast %c6_i32_1 : i32 to vector<8x8xi32>
    %17 = arith.cmpi slt, %1, %16 : vector<8x8xi32>
    %18 = arith.andi %15, %17 : vector<8x8xi1>
    %19 = arith.extui %18 : vector<8x8xi1> to vector<8x8xi32>
    %20 = arith.sitofp %19 : vector<8x8xi32> to vector<8x8xf32>
    %21 = arith.mulf %4, %11 : vector<8x8xf32>
    %c0 = arith.constant 0 : index
    %c0_2 = arith.constant 0 : index
    %c0_3 = arith.constant 0 : index
    %22 = vector.load %arg4[%c0, %c0_2, %c0_3] : memref<1x8x128xf32, #tpu.memory_space<vmem>>, vector<1x8x4xf32>
    %23 = vector.shape_cast %22 : vector<1x8x4xf32> to vector<8x4xf32>
    %c0_4 = arith.constant 0 : index
    %c0_5 = arith.constant 0 : index
    %c8 = arith.constant 8 : index
    %24 = vector.load %arg4[%c0_4, %c0_5, %c8] : memref<1x8x128xf32, #tpu.memory_space<vmem>>, vector<1x8x8xf32>
    %25 = vector.shape_cast %24 : vector<1x8x8xf32> to vector<8x8xf32>
    %c0_6 = arith.constant 0 : index
    %c0_7 = arith.constant 0 : index
    %c16 = arith.constant 16 : index
    %26 = vector.load %arg4[%c0_6, %c0_7, %c16] : memref<1x8x128xf32, #tpu.memory_space<vmem>>, vector<1x1x16xf32>
    %27 = vector.shape_cast %26 : vector<1x1x16xf32> to vector<1x16xf32>
    %c464 = arith.constant 464 : index
    %c0_8 = arith.constant 0 : index
    %28 = vector.load %arg1[%c464, %c0_8] : memref<472x128xf32, #tpu.memory_space<vmem>>, vector<1x1xf32>
    %29 = arith.addf %25, %4 : vector<8x8xf32>
    %cst_9 = arith.constant dense<0.000000e+00> : vector<8xf32>
    %30 = vector.multi_reduction <add>, %29, %cst_9 [1] : vector<8x8xf32> to vector<8xf32>
    %31 = vector.shape_cast %30 : vector<8xf32> to vector<8x1xf32>
    %32 = math.rsqrt %31 : vector<8x1xf32>
    %cst_10 = arith.constant dense<0.000000e+00> : vector<8xf32>
    %33 = vector.multi_reduction <add>, %29, %cst_10 [0] : vector<8x8xf32> to vector<8xf32>
    %34 = vector.shape_cast %33 : vector<8xf32> to vector<1x8xf32>
    %35 = math.rsqrt %34 : vector<1x8xf32>
    %36 = vector.broadcast %32 : vector<8x1xf32> to vector<8x8xf32>
    %37 = arith.mulf %29, %36 : vector<8x8xf32>
    %38 = vector.broadcast %35 : vector<1x8xf32> to vector<8x8xf32>
    %39 = arith.mulf %37, %38 : vector<8x8xf32>
    %c0_11 = arith.constant 0 : index
    %c0_12 = arith.constant 0 : index
    %40 = vector.load %arg1[%c0_11, %c0_12] : memref<472x128xf32, #tpu.memory_space<vmem>>, vector<4x32xf32>
    %cst_13 = arith.constant dense<0.000000e+00> : vector<8x32xf32>
    %41 = tpu.matmul %23, %40, %cst_13 {dimension_numbers = #tpu.dot_dimension_numbers<[1], [0], [0], [1], [0, 0, 1, 1], [], []>} : vector<8x4xf32>, vector<4x32xf32>, vector<8x32xf32> -> vector<8x32xf32>
    %cst_14 = arith.constant dense<0.000000e+00> : vector<8x32xf32>
    %42 = tpu.matmul %39, %41, %cst_14 {dimension_numbers = #tpu.dot_dimension_numbers<[1], [0], [0], [1], [0, 0, 1, 1], [], []>} : vector<8x8xf32>, vector<8x32xf32>, vector<8x32xf32> -> vector<8x32xf32>
    %c8_15 = arith.constant 8 : index
    %c0_16 = arith.constant 0 : index
    %43 = vector.load %arg1[%c8_15, %c0_16] : memref<472x128xf32, #tpu.memory_space<vmem>>, vector<1x32xf32>
    %44 = vector.broadcast %43 : vector<1x32xf32> to vector<8x32xf32>
    %45 = arith.addf %42, %44 : vector<8x32xf32>
    %c16_17 = arith.constant 16 : index
    %c0_18 = arith.constant 0 : index
    %46 = vector.load %arg1[%c16_17, %c0_18] : memref<472x128xf32, #tpu.memory_space<vmem>>, vector<1x32xf32>
    %c24 = arith.constant 24 : index
    %c0_19 = arith.constant 0 : index
    %47 = vector.load %arg1[%c24, %c0_19] : memref<472x128xf32, #tpu.memory_space<vmem>>, vector<1x32xf32>
    %cst_20 = arith.constant dense<0.000000e+00> : vector<32xf32>
    %48 = vector.multi_reduction <add>, %45, %cst_20 [0] : vector<8x32xf32> to vector<32xf32>
    %49 = vector.shape_cast %48 : vector<32xf32> to vector<1x32xf32>
    %cst_21 = arith.constant 8.000000e+00 : f32
    %50 = vector.broadcast %cst_21 : f32 to vector<1x32xf32>
    %51 = arith.divf %49, %50 : vector<1x32xf32>
    %52 = vector.broadcast %51 : vector<1x32xf32> to vector<8x32xf32>
    %53 = arith.subf %45, %52 : vector<8x32xf32>
    %54 = vector.broadcast %51 : vector<1x32xf32> to vector<8x32xf32>
    %55 = arith.subf %45, %54 : vector<8x32xf32>
    %56 = arith.mulf %53, %55 : vector<8x32xf32>
    %cst_22 = arith.constant dense<0.000000e+00> : vector<32xf32>
    %57 = vector.multi_reduction <add>, %56, %cst_22 [0] : vector<8x32xf32> to vector<32xf32>
    %58 = vector.shape_cast %57 : vector<32xf32> to vector<1x32xf32>
    %cst_23 = arith.constant 8.000000e+00 : f32
    %59 = vector.broadcast %cst_23 : f32 to vector<1x32xf32>
    %60 = arith.divf %58, %59 : vector<1x32xf32>
    %cst_24 = arith.constant 9.99999974E-6 : f32
    %61 = vector.broadcast %cst_24 : f32 to vector<1x32xf32>
    %62 = arith.addf %60, %61 : vector<1x32xf32>
    %63 = math.rsqrt %62 : vector<1x32xf32>
    %64 = arith.mulf %46, %63 : vector<1x32xf32>
    %65 = arith.mulf %51, %64 : vector<1x32xf32>
    %66 = arith.subf %47, %65 : vector<1x32xf32>
    %67 = vector.broadcast %64 : vector<1x32xf32> to vector<8x32xf32>
    %68 = arith.mulf %45, %67 : vector<8x32xf32>
    %69 = vector.broadcast %66 : vector<1x32xf32> to vector<8x32xf32>
    %70 = arith.addf %68, %69 : vector<8x32xf32>
    %cst_25 = arith.constant 0.000000e+00 : f32
    %71 = vector.broadcast %cst_25 : f32 to vector<8x32xf32>
    %72 = arith.maximumf %70, %71 : vector<8x32xf32>
    %c32 = arith.constant 32 : index
    %c0_26 = arith.constant 0 : index
    %73 = vector.load %arg1[%c32, %c0_26] : memref<472x128xf32, #tpu.memory_space<vmem>>, vector<32x32xf32>
    %cst_27 = arith.constant dense<0.000000e+00> : vector<8x32xf32>
    %74 = tpu.matmul %72, %73, %cst_27 {dimension_numbers = #tpu.dot_dimension_numbers<[1], [0], [0], [1], [0, 0, 1, 1], [], []>} : vector<8x32xf32>, vector<32x32xf32>, vector<8x32xf32> -> vector<8x32xf32>
    %cst_28 = arith.constant dense<0.000000e+00> : vector<8x32xf32>
    %75 = tpu.matmul %39, %74, %cst_28 {dimension_numbers = #tpu.dot_dimension_numbers<[1], [0], [0], [1], [0, 0, 1, 1], [], []>} : vector<8x8xf32>, vector<8x32xf32>, vector<8x32xf32> -> vector<8x32xf32>
    %c64 = arith.constant 64 : index
    %c0_29 = arith.constant 0 : index
    %76 = vector.load %arg1[%c64, %c0_29] : memref<472x128xf32, #tpu.memory_space<vmem>>, vector<1x32xf32>
    %77 = vector.broadcast %76 : vector<1x32xf32> to vector<8x32xf32>
    %78 = arith.addf %75, %77 : vector<8x32xf32>
    %c72 = arith.constant 72 : index
    %c0_30 = arith.constant 0 : index
    %79 = vector.load %arg1[%c72, %c0_30] : memref<472x128xf32, #tpu.memory_space<vmem>>, vector<1x32xf32>
    %c80 = arith.constant 80 : index
    %c0_31 = arith.constant 0 : index
    %80 = vector.load %arg1[%c80, %c0_31] : memref<472x128xf32, #tpu.memory_space<vmem>>, vector<1x32xf32>
    %cst_32 = arith.constant dense<0.000000e+00> : vector<32xf32>
    %81 = vector.multi_reduction <add>, %78, %cst_32 [0] : vector<8x32xf32> to vector<32xf32>
    %82 = vector.shape_cast %81 : vector<32xf32> to vector<1x32xf32>
    %cst_33 = arith.constant 8.000000e+00 : f32
    %83 = vector.broadcast %cst_33 : f32 to vector<1x32xf32>
    %84 = arith.divf %82, %83 : vector<1x32xf32>
    %85 = vector.broadcast %84 : vector<1x32xf32> to vector<8x32xf32>
    %86 = arith.subf %78, %85 : vector<8x32xf32>
    %87 = vector.broadcast %84 : vector<1x32xf32> to vector<8x32xf32>
    %88 = arith.subf %78, %87 : vector<8x32xf32>
    %89 = arith.mulf %86, %88 : vector<8x32xf32>
    %cst_34 = arith.constant dense<0.000000e+00> : vector<32xf32>
    %90 = vector.multi_reduction <add>, %89, %cst_34 [0] : vector<8x32xf32> to vector<32xf32>
    %91 = vector.shape_cast %90 : vector<32xf32> to vector<1x32xf32>
    %cst_35 = arith.constant 8.000000e+00 : f32
    %92 = vector.broadcast %cst_35 : f32 to vector<1x32xf32>
    %93 = arith.divf %91, %92 : vector<1x32xf32>
    %cst_36 = arith.constant 9.99999974E-6 : f32
    %94 = vector.broadcast %cst_36 : f32 to vector<1x32xf32>
    %95 = arith.addf %93, %94 : vector<1x32xf32>
    %96 = math.rsqrt %95 : vector<1x32xf32>
    %97 = arith.mulf %79, %96 : vector<1x32xf32>
    %98 = arith.mulf %84, %97 : vector<1x32xf32>
    %99 = arith.subf %80, %98 : vector<1x32xf32>
    %100 = vector.broadcast %97 : vector<1x32xf32> to vector<8x32xf32>
    %101 = arith.mulf %78, %100 : vector<8x32xf32>
    %102 = vector.broadcast %99 : vector<1x32xf32> to vector<8x32xf32>
    %103 = arith.addf %101, %102 : vector<8x32xf32>
    %cst_37 = arith.constant 0.000000e+00 : f32
    %104 = vector.broadcast %cst_37 : f32 to vector<8x32xf32>
    %105 = arith.maximumf %103, %104 : vector<8x32xf32>
    %cst_38 = arith.constant dense<0.000000e+00> : vector<32xf32>
    %106 = vector.multi_reduction <add>, %105, %cst_38 [0] : vector<8x32xf32> to vector<32xf32>
    %107 = vector.shape_cast %106 : vector<32xf32> to vector<1x32xf32>
    %cst_39 = arith.constant 0.166666672 : f32
    %108 = vector.broadcast %cst_39 : f32 to vector<1x32xf32>
    %109 = arith.mulf %107, %108 : vector<1x32xf32>
    %c88 = arith.constant 88 : index
    %c0_40 = arith.constant 0 : index
    %110 = vector.load %arg1[%c88, %c0_40] : memref<472x128xf32, #tpu.memory_space<vmem>>, vector<32x16xf32>
    %cst_41 = arith.constant dense<0.000000e+00> : vector<1x16xf32>
    %111 = tpu.matmul %109, %110, %cst_41 {dimension_numbers = #tpu.dot_dimension_numbers<[1], [0], [0], [1], [0, 0, 1, 1], [], []>} : vector<1x32xf32>, vector<32x16xf32>, vector<1x16xf32> -> vector<1x16xf32>
    %c120 = arith.constant 120 : index
    %c0_42 = arith.constant 0 : index
    %112 = vector.load %arg1[%c120, %c0_42] : memref<472x128xf32, #tpu.memory_space<vmem>>, vector<1x16xf32>
    %113 = arith.addf %111, %112 : vector<1x16xf32>
    %c128 = arith.constant 128 : index
    %c0_43 = arith.constant 0 : index
    %114 = vector.load %arg1[%c128, %c0_43] : memref<472x128xf32, #tpu.memory_space<vmem>>, vector<32x16xf32>
    %cst_44 = arith.constant dense<0.000000e+00> : vector<1x16xf32>
    %115 = tpu.matmul %109, %114, %cst_44 {dimension_numbers = #tpu.dot_dimension_numbers<[1], [0], [0], [1], [0, 0, 1, 1], [], []>} : vector<1x32xf32>, vector<32x16xf32>, vector<1x16xf32> -> vector<1x16xf32>
    %c160 = arith.constant 160 : index
    %c0_45 = arith.constant 0 : index
    %116 = vector.load %arg1[%c160, %c0_45] : memref<472x128xf32, #tpu.memory_space<vmem>>, vector<1x16xf32>
    %117 = arith.addf %115, %116 : vector<1x16xf32>
    %cst_46 = arith.constant -4.000000e+00 : f32
    %cst_47 = arith.constant 4.000000e+00 : f32
    %118 = vector.broadcast %cst_46 : f32 to vector<1x16xf32>
    %119 = arith.maximumf %118, %117 : vector<1x16xf32>
    %120 = vector.broadcast %cst_47 : f32 to vector<1x16xf32>
    %121 = arith.minimumf %120, %119 : vector<1x16xf32>
    %cst_48 = arith.constant 5.000000e-01 : f32
    %122 = vector.broadcast %cst_48 : f32 to vector<1x16xf32>
    %123 = arith.mulf %122, %121 : vector<1x16xf32>
    %124 = math.exp %123 : vector<1x16xf32>
    %125 = arith.mulf %27, %124 : vector<1x16xf32>
    %126 = arith.addf %113, %125 : vector<1x16xf32>
    %c168 = arith.constant 168 : index
    %c0_49 = arith.constant 0 : index
    %127 = vector.load %arg1[%c168, %c0_49] : memref<472x128xf32, #tpu.memory_space<vmem>>, vector<16x32xf32>
    %cst_50 = arith.constant dense<0.000000e+00> : vector<1x32xf32>
    %128 = tpu.matmul %126, %127, %cst_50 {dimension_numbers = #tpu.dot_dimension_numbers<[1], [0], [0], [1], [0, 0, 1, 1], [], []>} : vector<1x16xf32>, vector<16x32xf32>, vector<1x32xf32> -> vector<1x32xf32>
    %c184 = arith.constant 184 : index
    %c0_51 = arith.constant 0 : index
    %129 = vector.load %arg1[%c184, %c0_51] : memref<472x128xf32, #tpu.memory_space<vmem>>, vector<1x32xf32>
    %130 = arith.addf %128, %129 : vector<1x32xf32>
    %cst_52 = arith.constant 0.000000e+00 : f32
    %131 = vector.broadcast %cst_52 : f32 to vector<1x32xf32>
    %132 = arith.maximumf %130, %131 : vector<1x32xf32>
    %c192 = arith.constant 192 : index
    %c0_53 = arith.constant 0 : index
    %133 = vector.load %arg1[%c192, %c0_53] : memref<472x128xf32, #tpu.memory_space<vmem>>, vector<32x40xf32>
    %cst_54 = arith.constant dense<0.000000e+00> : vector<1x40xf32>
    %134 = tpu.matmul %132, %133, %cst_54 {dimension_numbers = #tpu.dot_dimension_numbers<[1], [0], [0], [1], [0, 0, 1, 1], [], []>} : vector<1x32xf32>, vector<32x40xf32>, vector<1x40xf32> -> vector<1x40xf32>
    %c224 = arith.constant 224 : index
    %c0_55 = arith.constant 0 : index
    %135 = vector.load %arg1[%c224, %c0_55] : memref<472x128xf32, #tpu.memory_space<vmem>>, vector<1x40xf32>
    %136 = arith.addf %134, %135 : vector<1x40xf32>
    %137 = math.tanh %136 : vector<1x40xf32>
    %138 = tpu.concatenate %137, %137 in 1 : vector<1x40xf32>, vector<1x40xf32> -> vector<1x80xf32>
    %c232 = arith.constant 232 : index
    %c0_56 = arith.constant 0 : index
    %139 = vector.load %arg1[%c232, %c0_56] : memref<472x128xf32, #tpu.memory_space<vmem>>, vector<8x80xf32>
    %140 = vector.broadcast %138 : vector<1x80xf32> to vector<8x80xf32>
    %141 = arith.mulf %139, %140 : vector<8x80xf32>
    %c240 = arith.constant 240 : index
    %c0_57 = arith.constant 0 : index
    %142 = vector.load %arg1[%c240, %c0_57] : memref<472x128xf32, #tpu.memory_space<vmem>>, vector<80x8xf32>
    %cst_58 = arith.constant dense<0.000000e+00> : vector<8x8xf32>
    %143 = tpu.matmul %141, %142, %cst_58 {dimension_numbers = #tpu.dot_dimension_numbers<[1], [0], [0], [1], [0, 0, 1, 1], [], []>} : vector<8x80xf32>, vector<80x8xf32>, vector<8x8xf32> -> vector<8x8xf32>
    %cst_59 = arith.constant 5.000000e-01 : f32
    %144 = vector.broadcast %cst_59 : f32 to vector<8x8xf32>
    %145 = arith.cmpf ogt, %11, %144 : vector<8x8xf32>
    %cst_60 = arith.constant -1.000000e+01 : f32
    %146 = vector.broadcast %cst_60 : f32 to vector<8x8xf32>
    %147 = arith.select %145, %143, %146 : vector<8x8xi1>, vector<8x8xf32>
    %cst_61 = arith.constant 0.000000e+00 : f32
    %148 = vector.broadcast %cst_61 : f32 to vector<8x8xf32>
    %149 = arith.subf %148, %147 : vector<8x8xf32>
    %150 = math.exp %149 : vector<8x8xf32>
    %cst_62 = arith.constant 1.000000e+00 : f32
    %151 = vector.broadcast %cst_62 : f32 to vector<8x8xf32>
    %152 = arith.addf %151, %150 : vector<8x8xf32>
    %153 = arith.divf %14, %152 : vector<8x8xf32>
    %154 = arith.mulf %25, %14 : vector<8x8xf32>
    %cst_63 = arith.constant dense<0.000000e+00> : vector<8xf32>
    %155 = vector.multi_reduction <add>, %154, %cst_63 [1] : vector<8x8xf32> to vector<8xf32>
    %156 = vector.shape_cast %155 : vector<8xf32> to vector<8x1xf32>
    %cst_64 = arith.constant 1.000000e+00 : f32
    %157 = vector.broadcast %cst_64 : f32 to vector<8x1xf32>
    %158 = arith.addf %156, %157 : vector<8x1xf32>
    %cst_65 = arith.constant dense<0.000000e+00> : vector<8xf32>
    %159 = vector.multi_reduction <add>, %153, %cst_65 [0] : vector<8x8xf32> to vector<8xf32>
    %160 = vector.shape_cast %159 : vector<8xf32> to vector<1x8xf32>
    %cst_66 = arith.constant 1.000000e+00 : f32
    %161 = vector.broadcast %cst_66 : f32 to vector<1x8xf32>
    %162 = arith.addf %160, %161 : vector<1x8xf32>
    %163 = vector.broadcast %158 : vector<8x1xf32> to vector<8x8xf32>
    %164 = vector.broadcast %162 : vector<1x8xf32> to vector<8x8xf32>
    %165 = arith.subf %163, %164 : vector<8x8xf32>
    %166 = math.absf %165 : vector<8x8xf32>
    %cst_67 = arith.constant 1.000000e+00 : f32
    %167 = vector.broadcast %cst_67 : f32 to vector<8x8xf32>
    %168 = arith.addf %166, %167 : vector<8x8xf32>
    %cst_68 = arith.constant 1.000000e+00 : f32
    %169 = vector.broadcast %cst_68 : f32 to vector<8x8xf32>
    %170 = arith.divf %169, %168 : vector<8x8xf32>
    %cst_69 = arith.constant 0.166666672 : f32
    %171 = vector.broadcast %cst_69 : f32 to vector<8x8xf32>
    %172 = arith.mulf %11, %171 : vector<8x8xf32>
    %c320 = arith.constant 320 : index
    %c0_70 = arith.constant 0 : index
    %173 = vector.load %arg1[%c320, %c0_70] : memref<472x128xf32, #tpu.memory_space<vmem>>, vector<8x64xf32>
    %174 = tpu.concatenate %153, %153, %153, %153, %153, %153 in 1 : vector<8x8xf32>, vector<8x8xf32>, vector<8x8xf32>, vector<8x8xf32>, vector<8x8xf32>, vector<8x8xf32> -> vector<8x48xf32>
    %175 = vector.extract_strided_slice %173 {offsets = [0, 0], sizes = [8, 48], strides = [1, 1]} : vector<8x64xf32> to vector<8x48xf32>
    %176 = arith.mulf %174, %175 : vector<8x48xf32>
    %c0_i32 = arith.constant 0 : i32
    %cst_71 = arith.constant 0x7F800000 : f32
    %177:3 = scf.while (%arg6 = %172, %arg7 = %c0_i32, %arg8 = %cst_71) : (vector<8x8xf32>, i32, f32) -> (vector<8x8xf32>, i32, f32) {
      %c50_i32 = arith.constant 50 : i32
      %312 = arith.cmpi slt, %arg7, %c50_i32 : i32
      %cst_121 = arith.constant 9.99999974E-5 : f32
      %313 = arith.cmpf oge, %arg8, %cst_121 : f32
      %314 = arith.andi %312, %313 : i1
      scf.condition(%314) %arg6, %arg7, %arg8 : vector<8x8xf32>, i32, f32
    } do {
    ^bb0(%arg6: vector<8x8xf32>, %arg7: i32, %arg8: f32):
      %cst_121 = arith.constant dense<0.000000e+00> : vector<8x48xf32>
      %312 = tpu.matmul %arg6, %176, %cst_121 {dimension_numbers = #tpu.dot_dimension_numbers<[1], [0], [0], [1], [0, 0, 1, 1], [], []>} : vector<8x8xf32>, vector<8x48xf32>, vector<8x48xf32> -> vector<8x48xf32>
      %313 = vector.extract_strided_slice %312 {offsets = [0, 0], sizes = [8, 8], strides = [1, 1]} : vector<8x48xf32> to vector<8x8xf32>
      %314 = vector.extract_strided_slice %312 {offsets = [0, 8], sizes = [8, 8], strides = [1, 1]} : vector<8x48xf32> to vector<8x8xf32>
      %315 = arith.maximumf %313, %314 : vector<8x8xf32>
      %316 = vector.extract_strided_slice %312 {offsets = [0, 16], sizes = [8, 8], strides = [1, 1]} : vector<8x48xf32> to vector<8x8xf32>
      %317 = arith.maximumf %315, %316 : vector<8x8xf32>
      %318 = vector.extract_strided_slice %312 {offsets = [0, 24], sizes = [8, 8], strides = [1, 1]} : vector<8x48xf32> to vector<8x8xf32>
      %319 = arith.maximumf %317, %318 : vector<8x8xf32>
      %320 = vector.extract_strided_slice %312 {offsets = [0, 32], sizes = [8, 8], strides = [1, 1]} : vector<8x48xf32> to vector<8x8xf32>
      %321 = arith.maximumf %319, %320 : vector<8x8xf32>
      %322 = vector.extract_strided_slice %312 {offsets = [0, 40], sizes = [8, 8], strides = [1, 1]} : vector<8x48xf32> to vector<8x8xf32>
      %323 = arith.maximumf %321, %322 : vector<8x8xf32>
      %324 = arith.mulf %arg6, %170 : vector<8x8xf32>
      %cst_122 = arith.constant dense<0.000000e+00> : vector<8x8xf32>
      %325 = tpu.matmul %154, %323, %cst_122 {dimension_numbers = #tpu.dot_dimension_numbers<[1], [0], [0], [1], [0, 0, 1, 1], [], []>} : vector<8x8xf32>, vector<8x8xf32>, vector<8x8xf32> -> vector<8x8xf32>
      %326 = arith.addf %324, %325 : vector<8x8xf32>
      %327 = arith.mulf %326, %326 : vector<8x8xf32>
      %328 = vector.shape_cast %327 : vector<8x8xf32> to vector<1x8x8xf32>
      %cst_123 = arith.constant dense<0.000000e+00> : vector<1xf32>
      %329 = vector.multi_reduction <add>, %328, %cst_123 [1, 2] : vector<1x8x8xf32> to vector<1xf32>
      %330 = vector.shape_cast %329 : vector<1xf32> to vector<1x1x1xf32>
      %331 = vector.extract %330[0, 0, 0] : f32 from vector<1x1x1xf32>
      %332 = math.rsqrt %331 : f32
      %333 = vector.broadcast %332 : f32 to vector<8x8xf32>
      %334 = arith.mulf %326, %333 : vector<8x8xf32>
      %cst_124 = arith.constant dense<0.000000e+00> : vector<8x48xf32>
      %335 = tpu.matmul %334, %176, %cst_124 {dimension_numbers = #tpu.dot_dimension_numbers<[1], [0], [0], [1], [0, 0, 1, 1], [], []>} : vector<8x8xf32>, vector<8x48xf32>, vector<8x48xf32> -> vector<8x48xf32>
      %336 = vector.extract_strided_slice %335 {offsets = [0, 0], sizes = [8, 8], strides = [1, 1]} : vector<8x48xf32> to vector<8x8xf32>
      %337 = vector.extract_strided_slice %335 {offsets = [0, 8], sizes = [8, 8], strides = [1, 1]} : vector<8x48xf32> to vector<8x8xf32>
      %338 = arith.maximumf %336, %337 : vector<8x8xf32>
      %339 = vector.extract_strided_slice %335 {offsets = [0, 16], sizes = [8, 8], strides = [1, 1]} : vector<8x48xf32> to vector<8x8xf32>
      %340 = arith.maximumf %338, %339 : vector<8x8xf32>
      %341 = vector.extract_strided_slice %335 {offsets = [0, 24], sizes = [8, 8], strides = [1, 1]} : vector<8x48xf32> to vector<8x8xf32>
      %342 = arith.maximumf %340, %341 : vector<8x8xf32>
      %343 = vector.extract_strided_slice %335 {offsets = [0, 32], sizes = [8, 8], strides = [1, 1]} : vector<8x48xf32> to vector<8x8xf32>
      %344 = arith.maximumf %342, %343 : vector<8x8xf32>
      %345 = vector.extract_strided_slice %335 {offsets = [0, 40], sizes = [8, 8], strides = [1, 1]} : vector<8x48xf32> to vector<8x8xf32>
      %346 = arith.maximumf %344, %345 : vector<8x8xf32>
      %347 = arith.mulf %334, %170 : vector<8x8xf32>
      %cst_125 = arith.constant dense<0.000000e+00> : vector<8x8xf32>
      %348 = tpu.matmul %154, %346, %cst_125 {dimension_numbers = #tpu.dot_dimension_numbers<[1], [0], [0], [1], [0, 0, 1, 1], [], []>} : vector<8x8xf32>, vector<8x8xf32>, vector<8x8xf32> -> vector<8x8xf32>
      %349 = arith.addf %347, %348 : vector<8x8xf32>
      %350 = arith.mulf %349, %349 : vector<8x8xf32>
      %351 = vector.shape_cast %350 : vector<8x8xf32> to vector<1x8x8xf32>
      %cst_126 = arith.constant dense<0.000000e+00> : vector<1xf32>
      %352 = vector.multi_reduction <add>, %351, %cst_126 [1, 2] : vector<1x8x8xf32> to vector<1xf32>
      %353 = vector.shape_cast %352 : vector<1xf32> to vector<1x1x1xf32>
      %354 = vector.extract %353[0, 0, 0] : f32 from vector<1x1x1xf32>
      %355 = math.rsqrt %354 : f32
      %356 = vector.broadcast %355 : f32 to vector<8x8xf32>
      %357 = arith.mulf %349, %356 : vector<8x8xf32>
      %cst_127 = arith.constant dense<0.000000e+00> : vector<8x48xf32>
      %358 = tpu.matmul %357, %176, %cst_127 {dimension_numbers = #tpu.dot_dimension_numbers<[1], [0], [0], [1], [0, 0, 1, 1], [], []>} : vector<8x8xf32>, vector<8x48xf32>, vector<8x48xf32> -> vector<8x48xf32>
      %359 = vector.extract_strided_slice %358 {offsets = [0, 0], sizes = [8, 8], strides = [1, 1]} : vector<8x48xf32> to vector<8x8xf32>
      %360 = vector.extract_strided_slice %358 {offsets = [0, 8], sizes = [8, 8], strides = [1, 1]} : vector<8x48xf32> to vector<8x8xf32>
      %361 = arith.maximumf %359, %360 : vector<8x8xf32>
      %362 = vector.extract_strided_slice %358 {offsets = [0, 16], sizes = [8, 8], strides = [1, 1]} : vector<8x48xf32> to vector<8x8xf32>
      %363 = arith.maximumf %361, %362 : vector<8x8xf32>
      %364 = vector.extract_strided_slice %358 {offsets = [0, 24], sizes = [8, 8], strides = [1, 1]} : vector<8x48xf32> to vector<8x8xf32>
      %365 = arith.maximumf %363, %364 : vector<8x8xf32>
      %366 = vector.extract_strided_slice %358 {offsets = [0, 32], sizes = [8, 8], strides = [1, 1]} : vector<8x48xf32> to vector<8x8xf32>
      %367 = arith.maximumf %365, %366 : vector<8x8xf32>
      %368 = vector.extract_strided_slice %358 {offsets = [0, 40], sizes = [8, 8], strides = [1, 1]} : vector<8x48xf32> to vector<8x8xf32>
      %369 = arith.maximumf %367, %368 : vector<8x8xf32>
      %370 = arith.mulf %357, %170 : vector<8x8xf32>
      %cst_128 = arith.constant dense<0.000000e+00> : vector<8x8xf32>
      %371 = tpu.matmul %154, %369, %cst_128 {dimension_numbers = #tpu.dot_dimension_numbers<[1], [0], [0], [1], [0, 0, 1, 1], [], []>} : vector<8x8xf32>, vector<8x8xf32>, vector<8x8xf32> -> vector<8x8xf32>
      %372 = arith.addf %370, %371 : vector<8x8xf32>
      %373 = arith.mulf %372, %372 : vector<8x8xf32>
      %374 = vector.shape_cast %373 : vector<8x8xf32> to vector<1x8x8xf32>
      %cst_129 = arith.constant dense<0.000000e+00> : vector<1xf32>
      %375 = vector.multi_reduction <add>, %374, %cst_129 [1, 2] : vector<1x8x8xf32> to vector<1xf32>
      %376 = vector.shape_cast %375 : vector<1xf32> to vector<1x1x1xf32>
      %377 = vector.extract %376[0, 0, 0] : f32 from vector<1x1x1xf32>
      %378 = math.rsqrt %377 : f32
      %379 = vector.broadcast %378 : f32 to vector<8x8xf32>
      %380 = arith.mulf %372, %379 : vector<8x8xf32>
      %cst_130 = arith.constant dense<0.000000e+00> : vector<8x48xf32>
      %381 = tpu.matmul %380, %176, %cst_130 {dimension_numbers = #tpu.dot_dimension_numbers<[1], [0], [0], [1], [0, 0, 1, 1], [], []>} : vector<8x8xf32>, vector<8x48xf32>, vector<8x48xf32> -> vector<8x48xf32>
      %382 = vector.extract_strided_slice %381 {offsets = [0, 0], sizes = [8, 8], strides = [1, 1]} : vector<8x48xf32> to vector<8x8xf32>
      %383 = vector.extract_strided_slice %381 {offsets = [0, 8], sizes = [8, 8], strides = [1, 1]} : vector<8x48xf32> to vector<8x8xf32>
      %384 = arith.maximumf %382, %383 : vector<8x8xf32>
      %385 = vector.extract_strided_slice %381 {offsets = [0, 16], sizes = [8, 8], strides = [1, 1]} : vector<8x48xf32> to vector<8x8xf32>
      %386 = arith.maximumf %384, %385 : vector<8x8xf32>
      %387 = vector.extract_strided_slice %381 {offsets = [0, 24], sizes = [8, 8], strides = [1, 1]} : vector<8x48xf32> to vector<8x8xf32>
      %388 = arith.maximumf %386, %387 : vector<8x8xf32>
      %389 = vector.extract_strided_slice %381 {offsets = [0, 32], sizes = [8, 8], strides = [1, 1]} : vector<8x48xf32> to vector<8x8xf32>
      %390 = arith.maximumf %388, %389 : vector<8x8xf32>
      %391 = vector.extract_strided_slice %381 {offsets = [0, 40], sizes = [8, 8], strides = [1, 1]} : vector<8x48xf32> to vector<8x8xf32>
      %392 = arith.maximumf %390, %391 : vector<8x8xf32>
      %393 = arith.mulf %380, %170 : vector<8x8xf32>
      %cst_131 = arith.constant dense<0.000000e+00> : vector<8x8xf32>
      %394 = tpu.matmul %154, %392, %cst_131 {dimension_numbers = #tpu.dot_dimension_numbers<[1], [0], [0], [1], [0, 0, 1, 1], [], []>} : vector<8x8xf32>, vector<8x8xf32>, vector<8x8xf32> -> vector<8x8xf32>
      %395 = arith.addf %393, %394 : vector<8x8xf32>
      %396 = arith.mulf %395, %395 : vector<8x8xf32>
      %397 = vector.shape_cast %396 : vector<8x8xf32> to vector<1x8x8xf32>
      %cst_132 = arith.constant dense<0.000000e+00> : vector<1xf32>
      %398 = vector.multi_reduction <add>, %397, %cst_132 [1, 2] : vector<1x8x8xf32> to vector<1xf32>
      %399 = vector.shape_cast %398 : vector<1xf32> to vector<1x1x1xf32>
      %400 = vector.extract %399[0, 0, 0] : f32 from vector<1x1x1xf32>
      %401 = math.rsqrt %400 : f32
      %402 = vector.broadcast %401 : f32 to vector<8x8xf32>
      %403 = arith.mulf %395, %402 : vector<8x8xf32>
      %cst_133 = arith.constant dense<0.000000e+00> : vector<8x48xf32>
      %404 = tpu.matmul %403, %176, %cst_133 {dimension_numbers = #tpu.dot_dimension_numbers<[1], [0], [0], [1], [0, 0, 1, 1], [], []>} : vector<8x8xf32>, vector<8x48xf32>, vector<8x48xf32> -> vector<8x48xf32>
      %405 = vector.extract_strided_slice %404 {offsets = [0, 0], sizes = [8, 8], strides = [1, 1]} : vector<8x48xf32> to vector<8x8xf32>
      %406 = vector.extract_strided_slice %404 {offsets = [0, 8], sizes = [8, 8], strides = [1, 1]} : vector<8x48xf32> to vector<8x8xf32>
      %407 = arith.maximumf %405, %406 : vector<8x8xf32>
      %408 = vector.extract_strided_slice %404 {offsets = [0, 16], sizes = [8, 8], strides = [1, 1]} : vector<8x48xf32> to vector<8x8xf32>
      %409 = arith.maximumf %407, %408 : vector<8x8xf32>
      %410 = vector.extract_strided_slice %404 {offsets = [0, 24], sizes = [8, 8], strides = [1, 1]} : vector<8x48xf32> to vector<8x8xf32>
      %411 = arith.maximumf %409, %410 : vector<8x8xf32>
      %412 = vector.extract_strided_slice %404 {offsets = [0, 32], sizes = [8, 8], strides = [1, 1]} : vector<8x48xf32> to vector<8x8xf32>
      %413 = arith.maximumf %411, %412 : vector<8x8xf32>
      %414 = vector.extract_strided_slice %404 {offsets = [0, 40], sizes = [8, 8], strides = [1, 1]} : vector<8x48xf32> to vector<8x8xf32>
      %415 = arith.maximumf %413, %414 : vector<8x8xf32>
      %416 = arith.mulf %403, %170 : vector<8x8xf32>
      %cst_134 = arith.constant dense<0.000000e+00> : vector<8x8xf32>
      %417 = tpu.matmul %154, %415, %cst_134 {dimension_numbers = #tpu.dot_dimension_numbers<[1], [0], [0], [1], [0, 0, 1, 1], [], []>} : vector<8x8xf32>, vector<8x8xf32>, vector<8x8xf32> -> vector<8x8xf32>
      %418 = arith.addf %416, %417 : vector<8x8xf32>
      %419 = arith.mulf %418, %418 : vector<8x8xf32>
      %420 = vector.shape_cast %419 : vector<8x8xf32> to vector<1x8x8xf32>
      %cst_135 = arith.constant dense<0.000000e+00> : vector<1xf32>
      %421 = vector.multi_reduction <add>, %420, %cst_135 [1, 2] : vector<1x8x8xf32> to vector<1xf32>
      %422 = vector.shape_cast %421 : vector<1xf32> to vector<1x1x1xf32>
      %423 = vector.extract %422[0, 0, 0] : f32 from vector<1x1x1xf32>
      %424 = math.rsqrt %423 : f32
      %425 = vector.broadcast %424 : f32 to vector<8x8xf32>
      %426 = arith.mulf %418, %425 : vector<8x8xf32>
      %c5_i32 = arith.constant 5 : i32
      %427 = arith.addi %arg7, %c5_i32 : i32
      %428 = arith.subf %426, %arg6 : vector<8x8xf32>
      %429 = math.absf %428 : vector<8x8xf32>
      %430 = vector.shape_cast %429 : vector<8x8xf32> to vector<1x8x8xf32>
      %cst_136 = arith.constant dense<0xFF800000> : vector<1xf32>
      %431 = vector.multi_reduction <maximumf>, %430, %cst_136 [1, 2] : vector<1x8x8xf32> to vector<1xf32>
      %432 = vector.shape_cast %431 : vector<1xf32> to vector<1x1x1xf32>
      %433 = vector.extract %432[0, 0, 0] : f32 from vector<1x1x1xf32>
      scf.yield %426, %427, %433 : vector<8x8xf32>, i32, f32
    }
    %178 = tpu.concatenate %177#0, %177#0, %177#0, %177#0, %177#0, %177#0, %177#0, %177#0 in 1 : vector<8x8xf32>, vector<8x8xf32>, vector<8x8xf32>, vector<8x8xf32>, vector<8x8xf32>, vector<8x8xf32>, vector<8x8xf32>, vector<8x8xf32> -> vector<8x64xf32>
    %179 = arith.mulf %178, %173 : vector<8x64xf32>
    %cst_72 = arith.constant dense<0.000000e+00> : vector<64xf32>
    %180 = vector.multi_reduction <add>, %179, %cst_72 [0] : vector<8x64xf32> to vector<64xf32>
    %181 = vector.shape_cast %180 : vector<64xf32> to vector<1x64xf32>
    %c0_73 = arith.constant 0 : index
    %c0_74 = arith.constant 0 : index
    %182 = vector.load %arg2[%c0_73, %c0_74] : memref<64x768xf32, #tpu.memory_space<vmem>>, vector<64x768xf32>
    %cst_75 = arith.constant dense<0.000000e+00> : vector<1x768xf32>
    %183 = tpu.matmul %181, %182, %cst_75 {dimension_numbers = #tpu.dot_dimension_numbers<[1], [0], [0], [1], [0, 0, 1, 1], [], []>} : vector<1x64xf32>, vector<64x768xf32>, vector<1x768xf32> -> vector<1x768xf32>
    %184 = tpu.iota {dimensions = array<i32: 1>} : vector<1x768xi32>
    %185 = arith.sitofp %184 : vector<1x768xi32> to vector<1x768xf32>
    %cst_76 = arith.constant 7.200000e+02 : f32
    %186 = vector.broadcast %cst_76 : f32 to vector<1x768xf32>
    %187 = arith.cmpf olt, %185, %186 : vector<1x768xf32>
    %cst_77 = arith.constant -1.000000e+30 : f32
    %188 = vector.broadcast %cst_77 : f32 to vector<1x768xf32>
    %189 = arith.select %187, %183, %188 : vector<1x768xi1>, vector<1x768xf32>
    %cst_78 = arith.constant dense<0xFF800000> : vector<1xf32>
    %190 = vector.multi_reduction <maximumf>, %189, %cst_78 [1] : vector<1x768xf32> to vector<1xf32>
    %191 = vector.shape_cast %190 : vector<1xf32> to vector<1x1xf32>
    %192 = vector.broadcast %191 : vector<1x1xf32> to vector<1x768xf32>
    %193 = arith.cmpf oge, %189, %192 : vector<1x768xf32>
    %cst_79 = arith.constant 7.680000e+02 : f32
    %194 = vector.broadcast %cst_79 : f32 to vector<1x768xf32>
    %195 = arith.select %193, %185, %194 : vector<1x768xi1>, vector<1x768xf32>
    %cst_80 = arith.constant dense<0x7F800000> : vector<1xf32>
    %196 = vector.multi_reduction <minimumf>, %195, %cst_80 [1] : vector<1x768xf32> to vector<1xf32>
    %197 = vector.shape_cast %196 : vector<1xf32> to vector<1x1xf32>
    %198 = vector.broadcast %197 : vector<1x1xf32> to vector<1x768xf32>
    %199 = arith.cmpf oeq, %185, %198 : vector<1x768xf32>
    %200 = arith.extui %199 : vector<1x768xi1> to vector<1x768xi32>
    %201 = arith.sitofp %200 : vector<1x768xi32> to vector<1x768xf32>
    %c0_81 = arith.constant 0 : index
    %c0_82 = arith.constant 0 : index
    %202 = vector.load %arg3[%c0_81, %c0_82] : memref<768x64xf32, #tpu.memory_space<vmem>>, vector<768x64xf32>
    %cst_83 = arith.constant dense<0.000000e+00> : vector<1x64xf32>
    %203 = tpu.matmul %201, %202, %cst_83 {dimension_numbers = #tpu.dot_dimension_numbers<[1], [0], [0], [1], [0, 0, 1, 1], [], []>} : vector<1x768xf32>, vector<768x64xf32>, vector<1x64xf32> -> vector<1x64xf32>
    %204 = vector.broadcast %203 : vector<1x64xf32> to vector<8x64xf32>
    %205 = arith.mulf %173, %204 : vector<8x64xf32>
    %c400 = arith.constant 400 : index
    %c0_84 = arith.constant 0 : index
    %206 = vector.load %arg1[%c400, %c0_84] : memref<472x128xf32, #tpu.memory_space<vmem>>, vector<64x8xf32>
    %cst_85 = arith.constant dense<0.000000e+00> : vector<8x8xf32>
    %207 = tpu.matmul %205, %206, %cst_85 {dimension_numbers = #tpu.dot_dimension_numbers<[1], [0], [0], [1], [0, 0, 1, 1], [], []>} : vector<8x64xf32>, vector<64x8xf32>, vector<8x8xf32> -> vector<8x8xf32>
    %c392 = arith.constant 392 : index
    %c0_86 = arith.constant 0 : index
    %208 = vector.load %arg1[%c392, %c0_86] : memref<472x128xf32, #tpu.memory_space<vmem>>, vector<8x64xf32>
    %209 = vector.broadcast %203 : vector<1x64xf32> to vector<8x64xf32>
    %210 = arith.mulf %208, %209 : vector<8x64xf32>
    %c328 = arith.constant 328 : index
    %c0_87 = arith.constant 0 : index
    %211 = vector.load %arg1[%c328, %c0_87] : memref<472x128xf32, #tpu.memory_space<vmem>>, vector<64x8xf32>
    %cst_88 = arith.constant dense<0.000000e+00> : vector<8x8xf32>
    %212 = tpu.matmul %210, %211, %cst_88 {dimension_numbers = #tpu.dot_dimension_numbers<[1], [0], [0], [1], [0, 0, 1, 1], [], []>} : vector<8x64xf32>, vector<64x8xf32>, vector<8x8xf32> -> vector<8x8xf32>
    %cst_89 = arith.constant dense<0.000000e+00> : vector<8x8xf32>
    %213 = tpu.matmul %207, %25, %cst_89 {dimension_numbers = #tpu.dot_dimension_numbers<[1], [0], [0], [1], [0, 0, 1, 1], [], []>} : vector<8x8xf32>, vector<8x8xf32>, vector<8x8xf32> -> vector<8x8xf32>
    %cst_90 = arith.constant dense<0.000000e+00> : vector<8x8xf32>
    %214 = tpu.matmul %213, %212, %cst_90 {dimension_numbers = #tpu.dot_dimension_numbers<[1], [0], [0], [1], [0, 0, 1, 1], [], []>} : vector<8x8xf32>, vector<8x8xf32>, vector<8x8xf32> -> vector<8x8xf32>
    %cst_91 = arith.constant dense<0.000000e+00> : vector<8x8xf32>
    %215 = tpu.matmul %207, %147, %cst_91 {dimension_numbers = #tpu.dot_dimension_numbers<[1], [0], [0], [1], [0, 0, 1, 1], [], []>} : vector<8x8xf32>, vector<8x8xf32>, vector<8x8xf32> -> vector<8x8xf32>
    %cst_92 = arith.constant dense<0.000000e+00> : vector<8x8xf32>
    %216 = tpu.matmul %215, %212, %cst_92 {dimension_numbers = #tpu.dot_dimension_numbers<[1], [0], [0], [1], [0, 0, 1, 1], [], []>} : vector<8x8xf32>, vector<8x8xf32>, vector<8x8xf32> -> vector<8x8xf32>
    %217 = vector.broadcast %28 : vector<1x1xf32> to vector<8x8xf32>
    %218 = arith.mulf %217, %214 : vector<8x8xf32>
    %cst_93 = arith.constant 0.000000e+00 : f32
    %219 = vector.broadcast %cst_93 : f32 to vector<8x8xf32>
    %220 = arith.subf %219, %216 : vector<8x8xf32>
    %cst_94 = arith.constant 0.000000e+00 : f32
    %221 = vector.broadcast %cst_94 : f32 to vector<8x8xf32>
    %222 = arith.maximumf %220, %221 : vector<8x8xf32>
    %223 = math.absf %220 : vector<8x8xf32>
    %cst_95 = arith.constant 0.000000e+00 : f32
    %224 = vector.broadcast %cst_95 : f32 to vector<8x8xf32>
    %225 = arith.subf %224, %223 : vector<8x8xf32>
    %226 = math.exp %225 : vector<8x8xf32>
    %cst_96 = arith.constant 1.000000e+00 : f32
    %227 = vector.broadcast %cst_96 : f32 to vector<8x8xf32>
    %228 = arith.addf %227, %226 : vector<8x8xf32>
    %229 = math.log %228 : vector<8x8xf32>
    %230 = arith.addf %222, %229 : vector<8x8xf32>
    %231 = arith.mulf %218, %230 : vector<8x8xf32>
    %cst_97 = arith.constant 1.000000e+00 : f32
    %232 = vector.broadcast %cst_97 : f32 to vector<8x8xf32>
    %233 = arith.subf %232, %214 : vector<8x8xf32>
    %cst_98 = arith.constant 0.000000e+00 : f32
    %234 = vector.broadcast %cst_98 : f32 to vector<8x8xf32>
    %235 = arith.maximumf %216, %234 : vector<8x8xf32>
    %236 = math.absf %216 : vector<8x8xf32>
    %cst_99 = arith.constant 0.000000e+00 : f32
    %237 = vector.broadcast %cst_99 : f32 to vector<8x8xf32>
    %238 = arith.subf %237, %236 : vector<8x8xf32>
    %239 = math.exp %238 : vector<8x8xf32>
    %cst_100 = arith.constant 1.000000e+00 : f32
    %240 = vector.broadcast %cst_100 : f32 to vector<8x8xf32>
    %241 = arith.addf %240, %239 : vector<8x8xf32>
    %242 = math.log %241 : vector<8x8xf32>
    %243 = arith.addf %235, %242 : vector<8x8xf32>
    %244 = arith.mulf %233, %243 : vector<8x8xf32>
    %245 = arith.addf %231, %244 : vector<8x8xf32>
    %246 = arith.mulf %245, %20 : vector<8x8xf32>
    %247 = vector.shape_cast %246 : vector<8x8xf32> to vector<1x8x8xf32>
    %cst_101 = arith.constant dense<0.000000e+00> : vector<1xf32>
    %248 = vector.multi_reduction <add>, %247, %cst_101 [1, 2] : vector<1x8x8xf32> to vector<1xf32>
    %249 = vector.shape_cast %248 : vector<1xf32> to vector<1x1x1xf32>
    %250 = vector.extract %249[0, 0, 0] : f32 from vector<1x1x1xf32>
    %251 = vector.broadcast %250 : f32 to vector<1x1xf32>
    %cst_102 = arith.constant 0.0666666701 : f32
    %252 = vector.broadcast %cst_102 : f32 to vector<1x1xf32>
    %253 = arith.mulf %251, %252 : vector<1x1xf32>
    %cst_103 = arith.constant 0.000000e+00 : f32
    %254 = vector.broadcast %cst_103 : f32 to vector<8x8xf32>
    %255 = arith.subf %254, %216 : vector<8x8xf32>
    %cst_104 = arith.constant 0.000000e+00 : f32
    %256 = vector.broadcast %cst_104 : f32 to vector<8x8xf32>
    %257 = arith.maximumf %255, %256 : vector<8x8xf32>
    %258 = math.absf %255 : vector<8x8xf32>
    %cst_105 = arith.constant 0.000000e+00 : f32
    %259 = vector.broadcast %cst_105 : f32 to vector<8x8xf32>
    %260 = arith.subf %259, %258 : vector<8x8xf32>
    %261 = math.exp %260 : vector<8x8xf32>
    %cst_106 = arith.constant 1.000000e+00 : f32
    %262 = vector.broadcast %cst_106 : f32 to vector<8x8xf32>
    %263 = arith.addf %262, %261 : vector<8x8xf32>
    %264 = math.log %263 : vector<8x8xf32>
    %265 = arith.addf %257, %264 : vector<8x8xf32>
    %266 = arith.mulf %265, %21 : vector<8x8xf32>
    %267 = vector.shape_cast %266 : vector<8x8xf32> to vector<1x8x8xf32>
    %cst_107 = arith.constant dense<0.000000e+00> : vector<1xf32>
    %268 = vector.multi_reduction <add>, %267, %cst_107 [1, 2] : vector<1x8x8xf32> to vector<1xf32>
    %269 = vector.shape_cast %268 : vector<1xf32> to vector<1x1x1xf32>
    %270 = vector.extract %269[0, 0, 0] : f32 from vector<1x1x1xf32>
    %271 = vector.broadcast %270 : f32 to vector<1x1xf32>
    %cst_108 = arith.constant 0.166666672 : f32
    %272 = vector.broadcast %cst_108 : f32 to vector<1x1xf32>
    %273 = arith.mulf %271, %272 : vector<1x1xf32>
    %cst_109 = arith.constant 1.000000e-01 : f32
    %274 = vector.broadcast %cst_109 : f32 to vector<1x1xf32>
    %275 = arith.mulf %274, %273 : vector<1x1xf32>
    %276 = arith.addf %253, %275 : vector<1x1xf32>
    %cst_110 = arith.constant 1.000000e+00 : f32
    %277 = vector.broadcast %cst_110 : f32 to vector<1x16xf32>
    %278 = arith.addf %277, %121 : vector<1x16xf32>
    %279 = arith.mulf %113, %113 : vector<1x16xf32>
    %280 = arith.subf %278, %279 : vector<1x16xf32>
    %281 = math.exp %121 : vector<1x16xf32>
    %282 = arith.subf %280, %281 : vector<1x16xf32>
    %283 = vector.shape_cast %282 : vector<1x16xf32> to vector<1x1x16xf32>
    %cst_111 = arith.constant dense<0.000000e+00> : vector<1xf32>
    %284 = vector.multi_reduction <add>, %283, %cst_111 [1, 2] : vector<1x1x16xf32> to vector<1xf32>
    %285 = vector.shape_cast %284 : vector<1xf32> to vector<1x1x1xf32>
    %286 = vector.extract %285[0, 0, 0] : f32 from vector<1x1x1xf32>
    %287 = vector.broadcast %286 : f32 to vector<1x1xf32>
    %cst_112 = arith.constant -5.000000e-01 : f32
    %288 = vector.broadcast %cst_112 : f32 to vector<1x1xf32>
    %289 = arith.mulf %288, %287 : vector<1x1xf32>
    %cst_113 = arith.constant 1.600000e+01 : f32
    %290 = vector.broadcast %cst_113 : f32 to vector<1x1xf32>
    %291 = arith.divf %289, %290 : vector<1x1xf32>
    %292 = math.absf %137 : vector<1x40xf32>
    %293 = vector.shape_cast %292 : vector<1x40xf32> to vector<1x1x40xf32>
    %cst_114 = arith.constant dense<0xFF800000> : vector<1xf32>
    %294 = vector.multi_reduction <maximumf>, %293, %cst_114 [1, 2] : vector<1x1x40xf32> to vector<1xf32>
    %295 = vector.shape_cast %294 : vector<1xf32> to vector<1x1x1xf32>
    %296 = vector.extract %295[0, 0, 0] : f32 from vector<1x1x1xf32>
    %297 = vector.broadcast %296 : f32 to vector<1x1xf32>
    %298 = vector.shape_cast %121 : vector<1x16xf32> to vector<1x1x16xf32>
    %cst_115 = arith.constant dense<0xFF800000> : vector<1xf32>
    %299 = vector.multi_reduction <maximumf>, %298, %cst_115 [1, 2] : vector<1x1x16xf32> to vector<1xf32>
    %300 = vector.shape_cast %299 : vector<1xf32> to vector<1x1x1xf32>
    %301 = vector.extract %300[0, 0, 0] : f32 from vector<1x1x1xf32>
    %302 = vector.broadcast %301 : f32 to vector<1x1xf32>
    %303 = arith.addf %276, %291 : vector<1x1xf32>
    %cst_116 = arith.constant 0.000000e+00 : f32
    %304 = vector.broadcast %cst_116 : f32 to vector<1x27xf32>
    %305 = tpu.concatenate %276, %291, %303, %297, %302, %113, %121, %137, %304 in 1 : vector<1x1xf32>, vector<1x1xf32>, vector<1x1xf32>, vector<1x1xf32>, vector<1x1xf32>, vector<1x16xf32>, vector<1x16xf32>, vector<1x40xf32>, vector<1x27xf32> -> vector<1x104xf32>
    %cst_117 = arith.constant 0.000000e+00 : f32
    %306 = vector.broadcast %cst_117 : f32 to vector<7x104xf32>
    %307 = tpu.concatenate %305, %306 in 0 : vector<1x104xf32>, vector<7x104xf32> -> vector<8x104xf32>
    %308 = tpu.concatenate %147, %177#0, %207, %307 in 1 : vector<8x8xf32>, vector<8x8xf32>, vector<8x8xf32>, vector<8x104xf32> -> vector<8x128xf32>
    %c0_118 = arith.constant 0 : index
    %c0_119 = arith.constant 0 : index
    %c0_120 = arith.constant 0 : index
    %309 = vector.load %arg5[%c0_118, %c0_119, %c0_120] : memref<1x8x128xf32, #tpu.memory_space<vmem>>, vector<1x8x128xf32>
    %310 = vector.shape_cast %309 : vector<1x8x128xf32> to vector<8x128xf32>
    %311 = vector.shape_cast %308 : vector<8x128xf32> to vector<1x8x128xf32>
    tpu.vector_store %arg5[%c0_118, %c0_119, %c0_120], %311 {strides = array<i32>} : memref<1x8x128xf32, #tpu.memory_space<vmem>>, vector<1x8x128xf32>,
    return
  }
  func.func @transform_0(%arg0: i32) -> (i32, i32) {
    %c0_i32 = arith.constant 0 : i32
    %c0_i32_0 = arith.constant 0 : i32
    %c0_i32_1 = arith.constant 0 : i32
    return %c0_i32, %c0_i32_0 : i32, i32
  }
  func.func @transform_1(%arg0: i32) -> (i32, i32) {
    %c0_i32 = arith.constant 0 : i32
    %c0_i32_0 = arith.constant 0 : i32
    %c0_i32_1 = arith.constant 0 : i32
    return %c0_i32, %c0_i32_0 : i32, i32
  }
  func.func @transform_2(%arg0: i32) -> (i32, i32) {
    %c0_i32 = arith.constant 0 : i32
    %c0_i32_0 = arith.constant 0 : i32
    %c0_i32_1 = arith.constant 0 : i32
    return %c0_i32, %c0_i32_0 : i32, i32
  }
  func.func @transform_3(%arg0: i32) -> (i32, i32, i32) {
    %c0_i32 = arith.constant 0 : i32
    %c0_i32_0 = arith.constant 0 : i32
    %c0_i32_1 = arith.constant 0 : i32
    return %arg0, %c0_i32, %c0_i32_0 : i32, i32, i32
  }
  func.func @transform_4(%arg0: i32) -> (i32, i32, i32) {
    %c0_i32 = arith.constant 0 : i32
    %c0_i32_0 = arith.constant 0 : i32
    %c0_i32_1 = arith.constant 0 : i32
    return %arg0, %c0_i32, %c0_i32_0 : i32, i32, i32
  }
}

</mosaic_0001>

<llo_original>
// kernel: forward.1
$region0: #{forward.1}
  #allocation0 [shape = 'u32[]', space=smem, size = 0x4, offset = 0x4, fixed_abs, tag = 'smem constant byte address 0x4 - core index']
  #allocation1 [shape = 'u32[144,128]{1,0:T(1,128)}', space=vmem, size = 0x12000, scoped, tag = 'internal scratch']
  %s0 = inlined_call_operand.vmem [shape: f32[472,128], index: 0, kind: input, shape index: {}]
  %s1 = inlined_call_operand.vmem [shape: f32[64,768], index: 1, kind: input, shape index: {}]
  %s2 = inlined_call_operand.vmem [shape: f32[768,64], index: 2, kind: input, shape index: {}]
  %s3 = inlined_call_operand.vmem [shape: f32[2,8,128], index: 3, kind: input, shape index: {}]
  %s4 = inlined_call_operand.vmem [shape: f32[2,8,128], index: 4, kind: output, shape index: {}]
  %s5 = sld [smem:[#allocation0]]
  $region56: #{forward.1} parent=0
    _
  %s7 = ssub.s32 1, %s5
  %s8 = scalar_select 0, %s7, %s5
  loop: start=0, step=1, limit=4
  $region2: #{forward.1} parent=0 // loop_pre_header
    _
  $region3: #{forward.1} parent=0 // loop_header
    %s10 = sphi 0, %s14
    %p11 = scmp.ge.s32.totalorder %s10, 4
    %s18 = sphi 0, %s18
    %s20 = sphi 0, %s18
    %s21 = sphi 0, %s20
    %s35 = sphi 0, %s21
    %s39 = sphi 0, %s39
    %s41 = sphi 0, %s39
    %s42 = sphi 0, %s41
    %s56 = sphi 0, %s42
    %s60 = sphi 0, %s60
    %s62 = sphi 0, %s60
    %s63 = sphi 0, %s62
    %s77 = sphi 0, %s63
    %s83 = sphi 0, %s85
    %s86 = sphi 0, %s83
    %s87 = sphi 0, %s86
    %s103 = sphi 0, %s87
    %s109 = sphi 0, %s111
    %s112 = sphi 0, %s109
    %s113 = sphi 0, %s112
    %s129 = sphi 0, %s113
  $region4: #{forward.1} parent=0 // loop_header_branch
    %13 = sbr.rel (%p11) target = $region8
  $region5: #{forward.1} parent=0 // loop_body
    %s15 = ssub.s32 %s10, 1
    %s16 = ssub.s32 %s10, 2
    %s17 = sadd.s32 %s10, 1
    %s19 = sadd.s32 %s18, 1
    %p22 = scmp.eq.s32.totalorder %s10, 1
    %p23 = scmp.ne.s32.totalorder %s18, %s20
    %p24 = scmp.eq.s32.totalorder %s10, 0
    %p25 = por %p23, %p24
    %p26 = scmp.ne.s32.totalorder %s18, %s20
    %p27 = scmp.eq.s32.totalorder %s15, 1
    %p28 = por %p26, %p27
    %p29 = scmp.ne.s32.totalorder %s20, %s21
    %p30 = scmp.eq.s32.totalorder %s15, 0
    %p31 = por %p29, %p30
    %p32 = scmp.ne.s32.totalorder %s20, %s21
    %p33 = scmp.eq.s32.totalorder %s16, 1
    %p34 = por %p32, %p33
    %p36 = scmp.ne.s32.totalorder %s21, %s35
    %p37 = scmp.eq.s32.totalorder %s16, 0
    %p38 = por %p36, %p37
    %s40 = sadd.s32 %s39, 1
    %p43 = scmp.eq.s32.totalorder %s10, 1
    %p44 = scmp.ne.s32.totalorder %s39, %s41
    %p45 = scmp.eq.s32.totalorder %s10, 0
    %p46 = por %p44, %p45
    %p47 = scmp.ne.s32.totalorder %s39, %s41
    %p48 = scmp.eq.s32.totalorder %s15, 1
    %p49 = por %p47, %p48
    %p50 = scmp.ne.s32.totalorder %s41, %s42
    %p51 = scmp.eq.s32.totalorder %s15, 0
    %p52 = por %p50, %p51
    %p53 = scmp.ne.s32.totalorder %s41, %s42
    %p54 = scmp.eq.s32.totalorder %s16, 1
    %p55 = por %p53, %p54
    %p57 = scmp.ne.s32.totalorder %s42, %s56
    %p58 = scmp.eq.s32.totalorder %s16, 0
    %p59 = por %p57, %p58
    %s61 = sadd.s32 %s60, 1
    %p64 = scmp.eq.s32.totalorder %s10, 1
    %p65 = scmp.ne.s32.totalorder %s60, %s62
    %p66 = scmp.eq.s32.totalorder %s10, 0
    %p67 = por %p65, %p66
    %p68 = scmp.ne.s32.totalorder %s60, %s62
    %p69 = scmp.eq.s32.totalorder %s15, 1
    %p70 = por %p68, %p69
    %p71 = scmp.ne.s32.totalorder %s62, %s63
    %p72 = scmp.eq.s32.totalorder %s15, 0
    %p73 = por %p71, %p72
    %p74 = scmp.ne.s32.totalorder %s62, %s63
    %p75 = scmp.eq.s32.totalorder %s16, 1
    %p76 = por %p74, %p75
    %p78 = scmp.ne.s32.totalorder %s63, %s77
    %p79 = scmp.eq.s32.totalorder %s16, 0
    %p80 = por %p78, %p79
    %s81 = ssub.s32 %s10, %s17
    %p82 = scmp.eq.s32.totalorder %s81, 0
    %s84 = sadd.s32 %s83, 1
    %s85 = scalar_select %p82, %s83, %s84
    %p88 = pneg %p82
    %p89 = scmp.eq.s32.totalorder %s10, 1
    %p90 = por %p88, %p89
    %p91 = scmp.ne.s32.totalorder %s83, %s86
    %p92 = scmp.eq.s32.totalorder %s10, 0
    %p93 = por %p91, %p92
    %p94 = scmp.ne.s32.totalorder %s83, %s86
    %p95 = scmp.eq.s32.totalorder %s15, 1
    %p96 = por %p94, %p95
    %p97 = scmp.ne.s32.totalorder %s86, %s87
    %p98 = scmp.eq.s32.totalorder %s15, 0
    %p99 = por %p97, %p98
    %p100 = scmp.ne.s32.totalorder %s86, %s87
    %p101 = scmp.eq.s32.totalorder %s16, 1
    %p102 = por %p100, %p101
    %p104 = scmp.ne.s32.totalorder %s87, %s103
    %p105 = scmp.eq.s32.totalorder %s16, 0
    %p106 = por %p104, %p105
    %s107 = ssub.s32 %s10, %s17
    %p108 = scmp.eq.s32.totalorder %s107, 0
    %s110 = sadd.s32 %s109, 1
    %s111 = scalar_select %p108, %s109, %s110
    %p114 = pneg %p108
    %p115 = scmp.eq.s32.totalorder %s10, 1
    %p116 = por %p114, %p115
    %p117 = scmp.ne.s32.totalorder %s109, %s112
    %p118 = scmp.eq.s32.totalorder %s10, 0
    %p119 = por %p117, %p118
    %p120 = scmp.ne.s32.totalorder %s109, %s112
    %p121 = scmp.eq.s32.totalorder %s15, 1
    %p122 = por %p120, %p121
    %p123 = scmp.ne.s32.totalorder %s112, %s113
    %p124 = scmp.eq.s32.totalorder %s15, 0
    %p125 = por %p123, %p124
    %p126 = scmp.ne.s32.totalorder %s112, %s113
    %p127 = scmp.eq.s32.totalorder %s16, 1
    %p128 = por %p126, %p127
    %p130 = scmp.ne.s32.totalorder %s113, %s129
    %p131 = scmp.eq.s32.totalorder %s16, 0
    %p132 = por %p130, %p131
    %p133 = scmp.le.s32.totalorder 1, %s10
    %p134 = scmp.lt.s32.totalorder %s10, 3
    %p135 = pnand %p133, %p134
    %p136 = pneg %p135
    // Predicated region
    $region9: #{forward.1} parent=5 // pred_check
      _
    $region10: #{forward.1} parent=5 // pred_check_branch
      %138 = sbr.rel (%p135) target = $region12
    $region11: #{forward.1} parent=5 // pred_region
      %s139 = ssub.s32 %s10, 1
      // Predicated region
      $region13: #{forward.1} parent=11 // pred_check
        %p140 = pneg %p31
      $region14: #{forward.1} parent=11 // pred_check_branch
        %142 = sbr.rel (%p140) target = $region16
      $region15: #{forward.1} parent=11 // pred_region
        _
      $region16: #{forward.1} parent=11 // pred_fallthru
        _
      // Predicated region
      $region17: #{forward.1} parent=11 // pred_check
        %p143 = pneg %p52
      $region18: #{forward.1} parent=11 // pred_check_branch
        %145 = sbr.rel (%p143) target = $region20
      $region19: #{forward.1} parent=11 // pred_region
        _
      $region20: #{forward.1} parent=11 // pred_fallthru
        _
      // Predicated region
      $region21: #{forward.1} parent=11 // pred_check
        %p146 = pneg %p73
      $region22: #{forward.1} parent=11 // pred_check_branch
        %148 = sbr.rel (%p146) target = $region24
      $region23: #{forward.1} parent=11 // pred_region
        _
      $region24: #{forward.1} parent=11 // pred_fallthru
        _
    $region12: #{forward.1} parent=5 // pred_fallthru
      _
    %p149 = scmp.lt.s32.totalorder %s10, 2
    // Predicated region
    $region25: #{forward.1} parent=5 // pred_check
      %p150 = pneg %p149
    $region26: #{forward.1} parent=5 // pred_check_branch
      %152 = sbr.rel (%p150) target = $region28
    $region27: #{forward.1} parent=5 // pred_region
      // Predicated region
      $region29: #{forward.1} parent=27 // pred_check
        %p153 = pneg %p93
      $region30: #{forward.1} parent=27 // pred_check_branch
        %155 = sbr.rel (%p153) target = $region32
      $region31: #{forward.1} parent=27 // pred_region
        %p156 = scmp.lt.s32.totalorder %s10, 1
        %s157 = scalar_select %p156, %s10, 1
        %s158 = smul.addr %s157, 8
        %s159 = scalar_lea.vmem %s3, %s158
      $region32: #{forward.1} parent=27 // pred_fallthru
        _
    $region28: #{forward.1} parent=5 // pred_fallthru
      _
    %p160 = scmp.le.s32.totalorder 1, %s10
    %p161 = scmp.lt.s32.totalorder %s10, 3
    %p162 = pnand %p160, %p161
    %p163 = pneg %p162
    // Predicated region
    $region33: #{forward.1} parent=5 // pred_check
      _
    $region34: #{forward.1} parent=5 // pred_check_branch
      %165 = sbr.rel (%p162) target = $region36
    $region35: #{forward.1} parent=5 // pred_region
      %s166 = ssub.s32 %s10, 1
      %p167 = pneg %p31
      %p168 = pneg %p28
      %p169 = pneg %p52
      %p170 = pneg %p49
      %p171 = pneg %p73
      %p172 = pneg %p70
      %p173 = scmp.lt.s32.totalorder %s15, 1
      %s174 = scalar_select %p173, %s15, 1
      %s175 = smul.addr %s174, 8
      %s176 = scalar_lea.vmem %s3, %s175
      %p177 = pneg %p99
      %p178 = pneg %p96
      %p179 = pneg %p125
      %p180 = pneg %p122
      %p181 = scmp.lt.s32.totalorder %s15, 1
      %s182 = scalar_select %p181, %s15, 1
      %s183 = smul.addr %s182, 8
      %s184 = scalar_lea.vmem %s4, %s183
      %p185 = scmp.lt.s32.totalorder %s15, 1
      %s186 = scalar_select %p185, %s15, 1
      %s187 = smul.addr %s186, 8
      %s188 = scalar_lea.vmem %s3, %s187
      %p189 = scmp.lt.s32.totalorder %s15, 1
      %s190 = scalar_select %p189, %s15, 1
      %s191 = smul.addr %s190, 8
      %s192 = scalar_lea.vmem %s4, %s191
      %v193 = vlaneseq
      %v194 = vshrl.u32 %v193, 7
      %v195 = vlaneseq
      %v196 = vand.u32 %v195, 127
      %vm197 = vcmp.eq.s32.totalorder %v194, %v196
      %v198 = vsel %vm197, 1, 0
      %v199 = vcvt.s32.f32 %v198
      %vm200 = vcmp.lt.s32.totalorder %v194, 6
      %vm201 = vcmp.lt.s32.totalorder %v196, 6
      %vm202 = vmand %vm200, %vm201
      %v203 = vsel %vm202, 1, 0
      %v204 = vcvt.s32.f32 %v203
      %v205 = vsub.f32 1.0, %v199
      %v206 = vmul.f32 %v204, %v205
      %vm207 = vcmp.lt.s32.totalorder %v194, %v196
      %vm208 = vmand %vm207, %vm201
      %v209 = vsel %vm208, 1, 0
      %v210 = vcvt.s32.f32 %v209
      %v211 = vmul.f32 %v199, %v204
      %v212 = vld [vmem:[%s188] sm:$0xff]
      %v213 = vld [vmem:[%s188] sm:$0x1]
      %v214 = vld [vmem:[%s0 + $0x1d0] sm:$0x1]
      %216 = vrot.lane.b32.xlu0 %v199, 8
      %v217 = vpop.permute.xlu0 %216
      %v219 = vadd.f32 %v212, %v217
      %221 = vrot.lane.b32.xlu0 %v219, 120
      %v222 = vpop.permute.xlu0 %221
      %vm224 = vcmask 64512
      %v225 = vsel %vm224, %v222, 0.0
      %226 = vadd.xlane.f32.xlu0 %v225
      %v227 = vpop.xlane.xlu0 %226
      %v228 = vrsqrt.pop %v227
      %vm229 = vcmask 130112
      %v230 = vsel %vm229, %v219, 0.0
      %v231 = vrot.slane %v230, 4
      %v232 = vadd.f32 %v230, %v231
      %v233 = vrot.slane %v232, 2
      %v234 = vadd.f32 %v232, %v233
      %v235 = vrot.slane %v234, 1
      %v236 = vadd.f32 %v234, %v235
      %v237 = vrsqrt.pop %v236
      %v238 = vmul.f32 %v219, %v228
      %v239 = vmul.f32 %v238, %v237
      %v240 = vld [vmem:[%s0] sm:$0xf]
      %vm241 = vcmask 31744
      %v243 = vsel %vm241, %v212, 0
      %vm245 = vcmask 1043456
      %v247 = vsel %vm245, %v240, 0
      %249 = vmatprep.subr.mxu0 0.0
      %250 = vmatpush1.msra.mxu0 %v247
      %251 = vmatprep.subr.mxu0 0.0
      %252 = vmatpush1.msra.mxu0 0.0
      %253 = vmatprep.subr.mxu0 0.0
      %254 = vmatpush1.msra.mxu0 0.0
      %255 = vmatprep.subr.mxu0 0.0
      %256 = vmatpush1.msra.mxu0 0.0
      %257 = vmatprep.subr.mxu0 0.0
      %258 = vmatpush1.msra.mxu0 0.0
      %259 = vmatprep.subr.mxu0 0.0
      %260 = vmatpush1.msra.mxu0 0.0
      %261 = vmatprep.subr.mxu0 0.0
      %262 = vmatpush1.msra.mxu0 0.0
      %263 = vmatprep.subr.mxu0 0.0
      %264 = vmatpush1.msra.mxu0 0.0
      %265 = vmatprep.subr.mxu0 0.0
      %266 = vmatpush1.msra.mxu0 0.0
      %267 = vmatprep.subr.mxu0 0.0
      %268 = vmatpush1.msra.mxu0 0.0
      %269 = vmatprep.subr.mxu0 0.0
      %270 = vmatpush1.msra.mxu0 0.0
      %271 = vmatprep.subr.mxu0 0.0
      %272 = vmatpush1.msra.mxu0 0.0
      %273 = vmatprep.subr.mxu0 0.0
      %274 = vmatpush1.msra.mxu0 0.0
      %275 = vmatprep.subr.mxu0 0.0
      %276 = vmatpush1.msra.mxu0 0.0
      %277 = vmatprep.subr.mxu0 0.0
      %278 = vmatpush1.msra.mxu0 0.0
      %279 = vmatprep.subr.mxu0 0.0
      %280 = vmatpush1.msra.mxu0 0.0
      %281 = vmatprep.subr.mxu0 0.0
      %282 = vmatpush1.msra.mxu0 0.0
      %283 = vmatprep.subr.mxu0 0.0
      %284 = vmatpush1.msra.mxu0 0.0
      %285 = vmatprep.subr.mxu0 0.0
      %286 = vmatpush1.msra.mxu0 0.0
      %287 = vmatprep.subr.mxu0 0.0
      %288 = vmatpush1.msra.mxu0 0.0
      %289 = vmatprep.subr.mxu0 0.0
      %290 = vmatpush1.msra.mxu0 0.0
      %291 = vmatprep.subr.mxu0 0.0
      %292 = vmatpush1.msra.mxu0 0.0
      %293 = vmatprep.subr.mxu0 0.0
      %294 = vmatpush1.msra.mxu0 0.0
      %295 = vmatprep.subr.mxu0 0.0
      %296 = vmatpush1.msra.mxu0 0.0
      %297 = vmatprep.subr.mxu0 0.0
      %298 = vmatpush1.msra.mxu0 0.0
      %299 = vmatprep.subr.mxu0 0.0
      %300 = vmatpush1.msra.mxu0 0.0
      %301 = vmatprep.subr.mxu0 0.0
      %302 = vmatpush1.msra.mxu0 0.0
      %303 = vmatprep.subr.mxu0 0.0
      %304 = vmatpush1.msra.mxu0 0.0
      %305 = vmatprep.subr.mxu0 0.0
      %306 = vmatpush1.msra.mxu0 0.0
      %307 = vmatprep.subr.mxu0 0.0
      %308 = vmatpush1.msra.mxu0 0.0
      %309 = vmatprep.subr.mxu0 0.0
      %310 = vmatpush1.msra.mxu0 0.0
      %311 = vmatprep.subr.mxu0 0.0
      %312 = vmatpush1.msra.mxu0 0.0
      %313 = vmatprep.mubr.f32.mxu0 0.0
      %314 = vmatmul.mubr.f32.gmra.mrb[0].mxu0 %v243
      %v315 = vpop.f32.mrb[0].mxu0
      %v316 = vadd.f32 0.0, %v315
      %v317 = vpop.f32.mrb[0].mxu0
      %318 = vdwg.mxu0
      %v319 = vld [vmem:[%s0 + $0x8] sm:$0x1]
      %v320 = vlaneseq
      %v321 = vshrl.u32 %v320, 7
      %v322 = vsub.s32 0, %v321
      %v323 = vrot.slane %v319, %v322
      %325 = vrot.lane.b32.xlu0 %v239, 120
      %v326 = vpop.permute.xlu0 %325
      %v327 = vsel %vm224, %v326, 0
      %329 = vmatprep.subr.mxu0 0.0
      %330 = vmatpush1.msra.mxu0 %v316
      %331 = vmatprep.subr.mxu0 0.0
      %332 = vmatpush1.msra.mxu0 0.0
      %333 = vmatprep.subr.mxu0 0.0
      %334 = vmatpush1.msra.mxu0 0.0
      %335 = vmatprep.subr.mxu0 0.0
      %336 = vmatpush1.msra.mxu0 0.0
      %337 = vmatprep.subr.mxu0 0.0
      %338 = vmatpush1.msra.mxu0 0.0
      %339 = vmatprep.subr.mxu0 0.0
      %340 = vmatpush1.msra.mxu0 0.0
      %341 = vmatprep.subr.mxu0 0.0
      %342 = vmatpush1.msra.mxu0 0.0
      %343 = vmatprep.subr.mxu0 0.0
      %344 = vmatpush1.msra.mxu0 0.0
      %345 = vmatprep.subr.mxu0 0.0
      %346 = vmatpush1.msra.mxu0 0.0
      %347 = vmatprep.subr.mxu0 0.0
      %348 = vmatpush1.msra.mxu0 0.0
      %349 = vmatprep.subr.mxu0 0.0
      %350 = vmatpush1.msra.mxu0 0.0
      %351 = vmatprep.subr.mxu0 0.0
      %352 = vmatpush1.msra.mxu0 0.0
      %353 = vmatprep.subr.mxu0 0.0
      %354 = vmatpush1.msra.mxu0 0.0
      %355 = vmatprep.subr.mxu0 0.0
      %356 = vmatpush1.msra.mxu0 0.0
      %357 = vmatprep.subr.mxu0 0.0
      %358 = vmatpush1.msra.mxu0 0.0
      %359 = vmatprep.subr.mxu0 0.0
      %360 = vmatpush1.msra.mxu0 0.0
      %361 = vmatprep.subr.mxu0 0.0
      %362 = vmatpush1.msra.mxu0 0.0
      %363 = vmatprep.subr.mxu0 0.0
      %364 = vmatpush1.msra.mxu0 0.0
      %365 = vmatprep.subr.mxu0 0.0
      %366 = vmatpush1.msra.mxu0 0.0
      %367 = vmatprep.subr.mxu0 0.0
      %368 = vmatpush1.msra.mxu0 0.0
      %369 = vmatprep.subr.mxu0 0.0
      %370 = vmatpush1.msra.mxu0 0.0
      %371 = vmatprep.subr.mxu0 0.0
      %372 = vmatpush1.msra.mxu0 0.0
      %373 = vmatprep.subr.mxu0 0.0
      %374 = vmatpush1.msra.mxu0 0.0
      %375 = vmatprep.subr.mxu0 0.0
      %376 = vmatpush1.msra.mxu0 0.0
      %377 = vmatprep.subr.mxu0 0.0
      %378 = vmatpush1.msra.mxu0 0.0
      %379 = vmatprep.subr.mxu0 0.0
      %380 = vmatpush1.msra.mxu0 0.0
      %381 = vmatprep.subr.mxu0 0.0
      %382 = vmatpush1.msra.mxu0 0.0
      %383 = vmatprep.subr.mxu0 0.0
      %384 = vmatpush1.msra.mxu0 0.0
      %385 = vmatprep.subr.mxu0 0.0
      %386 = vmatpush1.msra.mxu0 0.0
      %387 = vmatprep.subr.mxu0 0.0
      %388 = vmatpush1.msra.mxu0 0.0
      %389 = vmatprep.subr.mxu0 0.0
      %390 = vmatpush1.msra.mxu0 0.0
      %391 = vmatprep.subr.mxu0 0.0
      %392 = vmatpush1.msra.mxu0 0.0
      %393 = vmatprep.mubr.f32.mxu0 0.0
      %394 = vmatmul.mubr.f32.gmra.mrb[0].mxu0 %v327
      %v395 = vpop.f32.mrb[0].mxu0
      %v396 = vadd.f32 %v323, %v395
      %v397 = vpop.f32.mrb[0].mxu0
      %398 = vdwg.mxu0
      %v399 = vld [vmem:[%s0 + $0x10] sm:$0x1]
      %v400 = vld [vmem:[%s0 + $0x18] sm:$0x1]
      %vm401 = vcmask 261120
      %v402 = vsel %vm401, %v396, 0.0
      %v403 = vrot.slane %v402, 4
      %v404 = vadd.f32 %v402, %v403
      %v405 = vrot.slane %v404, 2
      %v406 = vadd.f32 %v404, %v405
      %v407 = vrot.slane %v406, 1
      %v408 = vadd.f32 %v406, %v407
      %v409 = vrcp.pop 8.0
      %v410 = vmul.f32 %v408, %v409
      %v411 = vsub.f32 %v396, %v410
      %v412 = vmul.f32 %v411, %v411
      %v413 = vsel %vm401, %v412, 0.0
      %v414 = vrot.slane %v413, 4
      %v415 = vadd.f32 %v413, %v414
      %v416 = vrot.slane %v415, 2
      %v417 = vadd.f32 %v415, %v416
      %v418 = vrot.slane %v417, 1
      %v419 = vadd.f32 %v417, %v418
      %v420 = vmul.f32 %v419, %v409
      %v421 = vadd.f32 %v420, 1e-05
      %v422 = vrsqrt.pop %v421
      %v423 = vmul.f32 %v399, %v422
      %v424 = vmul.f32 %v410, %v423
      %v425 = vsub.f32 %v400, %v424
      %v426 = vlaneseq
      %v427 = vshrl.u32 %v426, 7
      %v428 = vsub.s32 0, %v427
      %v429 = vrot.slane %v423, %v428
      %v430 = vmul.f32 %v396, %v429
      %v431 = vlaneseq
      %v432 = vshrl.u32 %v431, 7
      %v433 = vsub.s32 0, %v432
      %v434 = vrot.slane %v425, %v433
      %v435 = vadd.f32 %v430, %v434
      %v436 = vmax.f32 %v435, 0.0
      %v437 = vld [vmem:[%s0 + $0x20] sm:$0xff]
      %v438 = vld [vmem:[%s0 + $0x28] sm:$0xff]
      %v439 = vld [vmem:[%s0 + $0x30] sm:$0xff]
      %v440 = vld [vmem:[%s0 + $0x38] sm:$0xff]
      %v442 = vsel %vm401, %v436, 0
      %444 = vmatprep.subr.mxu0 0.0
      %445 = vmatpush1.msra.mxu0 %v437
      %446 = vmatprep.subr.mxu0 0.0
      %447 = vmatpush1.msra.mxu0 %v438
      %448 = vmatprep.subr.mxu0 0.0
      %449 = vmatpush1.msra.mxu0 %v439
      %450 = vmatprep.subr.mxu0 0.0
      %451 = vmatpush1.msra.mxu0 %v440
      %452 = vmatprep.subr.mxu0 0.0
      %453 = vmatpush1.msra.mxu0 0.0
      %454 = vmatprep.subr.mxu0 0.0
      %455 = vmatpush1.msra.mxu0 0.0
      %456 = vmatprep.subr.mxu0 0.0
      %457 = vmatpush1.msra.mxu0 0.0
      %458 = vmatprep.subr.mxu0 0.0
      %459 = vmatpush1.msra.mxu0 0.0
      %460 = vmatprep.subr.mxu0 0.0
      %461 = vmatpush1.msra.mxu0 0.0
      %462 = vmatprep.subr.mxu0 0.0
      %463 = vmatpush1.msra.mxu0 0.0
      %464 = vmatprep.subr.mxu0 0.0
      %465 = vmatpush1.msra.mxu0 0.0
      %466 = vmatprep.subr.mxu0 0.0
      %467 = vmatpush1.msra.mxu0 0.0
      %468 = vmatprep.subr.mxu0 0.0
      %469 = vmatpush1.msra.mxu0 0.0
      %470 = vmatprep.subr.mxu0 0.0
      %471 = vmatpush1.msra.mxu0 0.0
      %472 = vmatprep.subr.mxu0 0.0
      %473 = vmatpush1.msra.mxu0 0.0
      %474 = vmatprep.subr.mxu0 0.0
      %475 = vmatpush1.msra.mxu0 0.0
      %476 = vmatprep.subr.mxu0 0.0
      %477 = vmatpush1.msra.mxu0 0.0
      %478 = vmatprep.subr.mxu0 0.0
      %479 = vmatpush1.msra.mxu0 0.0
      %480 = vmatprep.subr.mxu0 0.0
      %481 = vmatpush1.msra.mxu0 0.0
      %482 = vmatprep.subr.mxu0 0.0
      %483 = vmatpush1.msra.mxu0 0.0
      %484 = vmatprep.subr.mxu0 0.0
      %485 = vmatpush1.msra.mxu0 0.0
      %486 = vmatprep.subr.mxu0 0.0
      %487 = vmatpush1.msra.mxu0 0.0
      %488 = vmatprep.subr.mxu0 0.0
      %489 = vmatpush1.msra.mxu0 0.0
      %490 = vmatprep.subr.mxu0 0.0
      %491 = vmatpush1.msra.mxu0 0.0
      %492 = vmatprep.subr.mxu0 0.0
      %493 = vmatpush1.msra.mxu0 0.0
      %494 = vmatprep.subr.mxu0 0.0
      %495 = vmatpush1.msra.mxu0 0.0
      %496 = vmatprep.subr.mxu0 0.0
      %497 = vmatpush1.msra.mxu0 0.0
      %498 = vmatprep.subr.mxu0 0.0
      %499 = vmatpush1.msra.mxu0 0.0
      %500 = vmatprep.subr.mxu0 0.0
      %501 = vmatpush1.msra.mxu0 0.0
      %502 = vmatprep.subr.mxu0 0.0
      %503 = vmatpush1.msra.mxu0 0.0
      %504 = vmatprep.subr.mxu0 0.0
      %505 = vmatpush1.msra.mxu0 0.0
      %506 = vmatprep.subr.mxu0 0.0
      %507 = vmatpush1.msra.mxu0 0.0
      %508 = vmatprep.mubr.f32.mxu0 0.0
      %509 = vmatmul.mubr.f32.gmra.mrb[0].mxu0 %v442
      %v510 = vpop.f32.mrb[0].mxu0
      %v511 = vadd.f32 0.0, %v510
      %v512 = vpop.f32.mrb[0].mxu0
      %513 = vdwg.mxu0
      %v514 = vld [vmem:[%s0 + $0x40] sm:$0x1]
      %v515 = vlaneseq
      %v516 = vshrl.u32 %v515, 7
      %v517 = vsub.s32 0, %v516
      %v518 = vrot.slane %v514, %v517
      %519 = vmatprep.subr.mxu0 0.0
      %520 = vmatpush1.msra.mxu0 %v511
      %521 = vmatprep.subr.mxu0 0.0
      %522 = vmatpush1.msra.mxu0 0.0
      %523 = vmatprep.subr.mxu0 0.0
      %524 = vmatpush1.msra.mxu0 0.0
      %525 = vmatprep.subr.mxu0 0.0
      %526 = vmatpush1.msra.mxu0 0.0
      %527 = vmatprep.subr.mxu0 0.0
      %528 = vmatpush1.msra.mxu0 0.0
      %529 = vmatprep.subr.mxu0 0.0
      %530 = vmatpush1.msra.mxu0 0.0
      %531 = vmatprep.subr.mxu0 0.0
      %532 = vmatpush1.msra.mxu0 0.0
      %533 = vmatprep.subr.mxu0 0.0
      %534 = vmatpush1.msra.mxu0 0.0
      %535 = vmatprep.subr.mxu0 0.0
      %536 = vmatpush1.msra.mxu0 0.0
      %537 = vmatprep.subr.mxu0 0.0
      %538 = vmatpush1.msra.mxu0 0.0
      %539 = vmatprep.subr.mxu0 0.0
      %540 = vmatpush1.msra.mxu0 0.0
      %541 = vmatprep.subr.mxu0 0.0
      %542 = vmatpush1.msra.mxu0 0.0
      %543 = vmatprep.subr.mxu0 0.0
      %544 = vmatpush1.msra.mxu0 0.0
      %545 = vmatprep.subr.mxu0 0.0
      %546 = vmatpush1.msra.mxu0 0.0
      %547 = vmatprep.subr.mxu0 0.0
      %548 = vmatpush1.msra.mxu0 0.0
      %549 = vmatprep.subr.mxu0 0.0
      %550 = vmatpush1.msra.mxu0 0.0
      %551 = vmatprep.subr.mxu0 0.0
      %552 = vmatpush1.msra.mxu0 0.0
      %553 = vmatprep.subr.mxu0 0.0
      %554 = vmatpush1.msra.mxu0 0.0
      %555 = vmatprep.subr.mxu0 0.0
      %556 = vmatpush1.msra.mxu0 0.0
      %557 = vmatprep.subr.mxu0 0.0
      %558 = vmatpush1.msra.mxu0 0.0
      %559 = vmatprep.subr.mxu0 0.0
      %560 = vmatpush1.msra.mxu0 0.0
      %561 = vmatprep.subr.mxu0 0.0
      %562 = vmatpush1.msra.mxu0 0.0
      %563 = vmatprep.subr.mxu0 0.0
      %564 = vmatpush1.msra.mxu0 0.0
      %565 = vmatprep.subr.mxu0 0.0
      %566 = vmatpush1.msra.mxu0 0.0
      %567 = vmatprep.subr.mxu0 0.0
      %568 = vmatpush1.msra.mxu0 0.0
      %569 = vmatprep.subr.mxu0 0.0
      %570 = vmatpush1.msra.mxu0 0.0
      %571 = vmatprep.subr.mxu0 0.0
      %572 = vmatpush1.msra.mxu0 0.0
      %573 = vmatprep.subr.mxu0 0.0
      %574 = vmatpush1.msra.mxu0 0.0
      %575 = vmatprep.subr.mxu0 0.0
      %576 = vmatpush1.msra.mxu0 0.0
      %577 = vmatprep.subr.mxu0 0.0
      %578 = vmatpush1.msra.mxu0 0.0
      %579 = vmatprep.subr.mxu0 0.0
      %580 = vmatpush1.msra.mxu0 0.0
      %581 = vmatprep.subr.mxu0 0.0
      %582 = vmatpush1.msra.mxu0 0.0
      %583 = vmatprep.mubr.f32.mxu0 0.0
      %584 = vmatmul.mubr.f32.gmra.mrb[0].mxu0 %v327
      %v585 = vpop.f32.mrb[0].mxu0
      %v586 = vadd.f32 %v518, %v585
      %v587 = vpop.f32.mrb[0].mxu0
      %588 = vdwg.mxu0
      %v589 = vld [vmem:[%s0 + $0x48] sm:$0x1]
      %v590 = vld [vmem:[%s0 + $0x50] sm:$0x1]
      %v591 = vsel %vm401, %v586, 0.0
      %v592 = vrot.slane %v591, 4
      %v593 = vadd.f32 %v591, %v592
      %v594 = vrot.slane %v593, 2
      %v595 = vadd.f32 %v593, %v594
      %v596 = vrot.slane %v595, 1
      %v597 = vadd.f32 %v595, %v596
      %v598 = vmul.f32 %v597, %v409
      %v599 = vsub.f32 %v586, %v598
      %v600 = vmul.f32 %v599, %v599
      %v601 = vsel %vm401, %v600, 0.0
      %v602 = vrot.slane %v601, 4
      %v603 = vadd.f32 %v601, %v602
      %v604 = vrot.slane %v603, 2
      %v605 = vadd.f32 %v603, %v604
      %v606 = vrot.slane %v605, 1
      %v607 = vadd.f32 %v605, %v606
      %v608 = vmul.f32 %v607, %v409
      %v609 = vadd.f32 %v608, 1e-05
      %v610 = vrsqrt.pop %v609
      %v611 = vmul.f32 %v589, %v610
      %v612 = vmul.f32 %v598, %v611
      %v613 = vsub.f32 %v590, %v612
      %v614 = vlaneseq
      %v615 = vshrl.u32 %v614, 7
      %v616 = vsub.s32 0, %v615
      %v617 = vrot.slane %v611, %v616
      %v618 = vmul.f32 %v586, %v617
      %v619 = vlaneseq
      %v620 = vshrl.u32 %v619, 7
      %v621 = vsub.s32 0, %v620
      %v622 = vrot.slane %v613, %v621
      %v623 = vadd.f32 %v618, %v622
      %v624 = vmax.f32 %v623, 0.0
      %v625 = vsel %vm401, %v624, 0.0
      %v626 = vrot.slane %v625, 4
      %v627 = vadd.f32 %v625, %v626
      %v628 = vrot.slane %v627, 2
      %v629 = vadd.f32 %v627, %v628
      %v630 = vrot.slane %v629, 1
      %v631 = vadd.f32 %v629, %v630
      %v632 = vmul.f32 %v631, 0.16666667
      %v633 = vld [vmem:[%s0 + $0x58] sm:$0xff]
      %v634 = vld [vmem:[%s0 + $0x60] sm:$0xff]
      %v635 = vld [vmem:[%s0 + $0x68] sm:$0xff]
      %v636 = vld [vmem:[%s0 + $0x70] sm:$0xff]
      %v637 = vld [vmem:[%s0 + $0x78] sm:$0x1]
      %v639 = vsel %vm401, %v632, 0
      %641 = vmatprep.subr.mxu0 0.0
      %642 = vmatpush1.msra.mxu0 %v633
      %643 = vmatprep.subr.mxu0 0.0
      %644 = vmatpush1.msra.mxu0 %v634
      %645 = vmatprep.subr.mxu0 0.0
      %646 = vmatpush1.msra.mxu0 %v635
      %647 = vmatprep.subr.mxu0 0.0
      %648 = vmatpush1.msra.mxu0 %v636
      %649 = vmatprep.subr.mxu0 0.0
      %650 = vmatpush1.msra.mxu0 0.0
      %651 = vmatprep.subr.mxu0 0.0
      %652 = vmatpush1.msra.mxu0 0.0
      %653 = vmatprep.subr.mxu0 0.0
      %654 = vmatpush1.msra.mxu0 0.0
      %655 = vmatprep.subr.mxu0 0.0
      %656 = vmatpush1.msra.mxu0 0.0
      %657 = vmatprep.subr.mxu0 0.0
      %658 = vmatpush1.msra.mxu0 0.0
      %659 = vmatprep.subr.mxu0 0.0
      %660 = vmatpush1.msra.mxu0 0.0
      %661 = vmatprep.subr.mxu0 0.0
      %662 = vmatpush1.msra.mxu0 0.0
      %663 = vmatprep.subr.mxu0 0.0
      %664 = vmatpush1.msra.mxu0 0.0
      %665 = vmatprep.subr.mxu0 0.0
      %666 = vmatpush1.msra.mxu0 0.0
      %667 = vmatprep.subr.mxu0 0.0
      %668 = vmatpush1.msra.mxu0 0.0
      %669 = vmatprep.subr.mxu0 0.0
      %670 = vmatpush1.msra.mxu0 0.0
      %671 = vmatprep.subr.mxu0 0.0
      %672 = vmatpush1.msra.mxu0 0.0
      %673 = vmatprep.subr.mxu0 0.0
      %674 = vmatpush1.msra.mxu0 0.0
      %675 = vmatprep.subr.mxu0 0.0
      %676 = vmatpush1.msra.mxu0 0.0
      %677 = vmatprep.subr.mxu0 0.0
      %678 = vmatpush1.msra.mxu0 0.0
      %679 = vmatprep.subr.mxu0 0.0
      %680 = vmatpush1.msra.mxu0 0.0
      %681 = vmatprep.subr.mxu0 0.0
      %682 = vmatpush1.msra.mxu0 0.0
      %683 = vmatprep.subr.mxu0 0.0
      %684 = vmatpush1.msra.mxu0 0.0
      %685 = vmatprep.subr.mxu0 0.0
      %686 = vmatpush1.msra.mxu0 0.0
      %687 = vmatprep.subr.mxu0 0.0
      %688 = vmatpush1.msra.mxu0 0.0
      %689 = vmatprep.subr.mxu0 0.0
      %690 = vmatpush1.msra.mxu0 0.0
      %691 = vmatprep.subr.mxu0 0.0
      %692 = vmatpush1.msra.mxu0 0.0
      %693 = vmatprep.subr.mxu0 0.0
      %694 = vmatpush1.msra.mxu0 0.0
      %695 = vmatprep.subr.mxu0 0.0
      %696 = vmatpush1.msra.mxu0 0.0
      %697 = vmatprep.subr.mxu0 0.0
      %698 = vmatpush1.msra.mxu0 0.0
      %699 = vmatprep.subr.mxu0 0.0
      %700 = vmatpush1.msra.mxu0 0.0
      %701 = vmatprep.subr.mxu0 0.0
      %702 = vmatpush1.msra.mxu0 0.0
      %703 = vmatprep.subr.mxu0 0.0
      %704 = vmatpush1.msra.mxu0 0.0
      %705 = vmatprep.mubr.f32.mxu0 0.0
      %706 = vmatmul.mubr.f32.gmra.mrb[0].mxu0 %v639
      %v707 = vpop.f32.mrb[0].mxu0
      %v708 = vadd.f32 %v637, %v707
      %v709 = vpop.f32.mrb[0].mxu0
      %710 = vdwg.mxu0
      %v711 = vld [vmem:[%s0 + $0x80] sm:$0xff]
      %v712 = vld [vmem:[%s0 + $0x88] sm:$0xff]
      %v713 = vld [vmem:[%s0 + $0x90] sm:$0xff]
      %v714 = vld [vmem:[%s0 + $0x98] sm:$0xff]
      %v715 = vld [vmem:[%s0 + $0xa0] sm:$0x1]
      %716 = vmatprep.subr.mxu0 0.0
      %717 = vmatpush1.msra.mxu0 %v711
      %718 = vmatprep.subr.mxu0 0.0
      %719 = vmatpush1.msra.mxu0 %v712
      %720 = vmatprep.subr.mxu0 0.0
      %721 = vmatpush1.msra.mxu0 %v713
      %722 = vmatprep.subr.mxu0 0.0
      %723 = vmatpush1.msra.mxu0 %v714
      %724 = vmatprep.subr.mxu0 0.0
      %725 = vmatpush1.msra.mxu0 0.0
      %726 = vmatprep.subr.mxu0 0.0
      %727 = vmatpush1.msra.mxu0 0.0
      %728 = vmatprep.subr.mxu0 0.0
      %729 = vmatpush1.msra.mxu0 0.0
      %730 = vmatprep.subr.mxu0 0.0
      %731 = vmatpush1.msra.mxu0 0.0
      %732 = vmatprep.subr.mxu0 0.0
      %733 = vmatpush1.msra.mxu0 0.0
      %734 = vmatprep.subr.mxu0 0.0
      %735 = vmatpush1.msra.mxu0 0.0
      %736 = vmatprep.subr.mxu0 0.0
      %737 = vmatpush1.msra.mxu0 0.0
      %738 = vmatprep.subr.mxu0 0.0
      %739 = vmatpush1.msra.mxu0 0.0
      %740 = vmatprep.subr.mxu0 0.0
      %741 = vmatpush1.msra.mxu0 0.0
      %742 = vmatprep.subr.mxu0 0.0
      %743 = vmatpush1.msra.mxu0 0.0
      %744 = vmatprep.subr.mxu0 0.0
      %745 = vmatpush1.msra.mxu0 0.0
      %746 = vmatprep.subr.mxu0 0.0
      %747 = vmatpush1.msra.mxu0 0.0
      %748 = vmatprep.subr.mxu0 0.0
      %749 = vmatpush1.msra.mxu0 0.0
      %750 = vmatprep.subr.mxu0 0.0
      %751 = vmatpush1.msra.mxu0 0.0
      %752 = vmatprep.subr.mxu0 0.0
      %753 = vmatpush1.msra.mxu0 0.0
      %754 = vmatprep.subr.mxu0 0.0
      %755 = vmatpush1.msra.mxu0 0.0
      %756 = vmatprep.subr.mxu0 0.0
      %757 = vmatpush1.msra.mxu0 0.0
      %758 = vmatprep.subr.mxu0 0.0
      %759 = vmatpush1.msra.mxu0 0.0
      %760 = vmatprep.subr.mxu0 0.0
      %761 = vmatpush1.msra.mxu0 0.0
      %762 = vmatprep.subr.mxu0 0.0
      %763 = vmatpush1.msra.mxu0 0.0
      %764 = vmatprep.subr.mxu0 0.0
      %765 = vmatpush1.msra.mxu0 0.0
      %766 = vmatprep.subr.mxu0 0.0
      %767 = vmatpush1.msra.mxu0 0.0
      %768 = vmatprep.subr.mxu0 0.0
      %769 = vmatpush1.msra.mxu0 0.0
      %770 = vmatprep.subr.mxu0 0.0
      %771 = vmatpush1.msra.mxu0 0.0
      %772 = vmatprep.subr.mxu0 0.0
      %773 = vmatpush1.msra.mxu0 0.0
      %774 = vmatprep.subr.mxu0 0.0
      %775 = vmatpush1.msra.mxu0 0.0
      %776 = vmatprep.subr.mxu0 0.0
      %777 = vmatpush1.msra.mxu0 0.0
      %778 = vmatprep.subr.mxu0 0.0
      %779 = vmatpush1.msra.mxu0 0.0
      %780 = vmatprep.mubr.f32.mxu0 0.0
      %781 = vmatmul.mubr.f32.gmra.mrb[0].mxu0 %v639
      %v782 = vpop.f32.mrb[0].mxu0
      %v783 = vadd.f32 %v715, %v782
      %v784 = vpop.f32.mrb[0].mxu0
      %785 = vdwg.mxu0
      %v786 = vmax.f32 %v783, -4.0
      %v787 = vmin.f32 %v786, 4.0
      %v788 = vmul.f32 %v787, 0.5
      %v789 = vmul.f32 %v788, 1.442695
      %v790 = vpow.pop %v789
      %792 = vrot.lane.b32.xlu0 %v790, 16
      %v793 = vpop.permute.xlu0 %792
      %v795 = vmul.f32 %v213, %v793
      %797 = vrot.lane.b32.xlu0 %v795, 112
      %v798 = vpop.permute.xlu0 %797
      %v800 = vadd.f32 %v708, %v798
      %v801 = vld [vmem:[%s0 + $0xa8] sm:$0xff]
      %v802 = vld [vmem:[%s0 + $0xb0] sm:$0xff]
      %v803 = vld [vmem:[%s0 + $0xb8] sm:$0x1]
      %vm804 = vcmask 130048
      %v806 = vsel %vm804, %v800, 0
      %808 = vmatprep.subr.mxu0 0.0
      %809 = vmatpush1.msra.mxu0 %v801
      %810 = vmatprep.subr.mxu0 0.0
      %811 = vmatpush1.msra.mxu0 %v802
      %812 = vmatprep.subr.mxu0 0.0
      %813 = vmatpush1.msra.mxu0 0.0
      %814 = vmatprep.subr.mxu0 0.0
      %815 = vmatpush1.msra.mxu0 0.0
      %816 = vmatprep.subr.mxu0 0.0
      %817 = vmatpush1.msra.mxu0 0.0
      %818 = vmatprep.subr.mxu0 0.0
      %819 = vmatpush1.msra.mxu0 0.0
      %820 = vmatprep.subr.mxu0 0.0
      %821 = vmatpush1.msra.mxu0 0.0
      %822 = vmatprep.subr.mxu0 0.0
      %823 = vmatpush1.msra.mxu0 0.0
      %824 = vmatprep.subr.mxu0 0.0
      %825 = vmatpush1.msra.mxu0 0.0
      %826 = vmatprep.subr.mxu0 0.0
      %827 = vmatpush1.msra.mxu0 0.0
      %828 = vmatprep.subr.mxu0 0.0
      %829 = vmatpush1.msra.mxu0 0.0
      %830 = vmatprep.subr.mxu0 0.0
      %831 = vmatpush1.msra.mxu0 0.0
      %832 = vmatprep.subr.mxu0 0.0
      %833 = vmatpush1.msra.mxu0 0.0
      %834 = vmatprep.subr.mxu0 0.0
      %835 = vmatpush1.msra.mxu0 0.0
      %836 = vmatprep.subr.mxu0 0.0
      %837 = vmatpush1.msra.mxu0 0.0
      %838 = vmatprep.subr.mxu0 0.0
      %839 = vmatpush1.msra.mxu0 0.0
      %840 = vmatprep.subr.mxu0 0.0
      %841 = vmatpush1.msra.mxu0 0.0
      %842 = vmatprep.subr.mxu0 0.0
      %843 = vmatpush1.msra.mxu0 0.0
      %844 = vmatprep.subr.mxu0 0.0
      %845 = vmatpush1.msra.mxu0 0.0
      %846 = vmatprep.subr.mxu0 0.0
      %847 = vmatpush1.msra.mxu0 0.0
      %848 = vmatprep.subr.mxu0 0.0
      %849 = vmatpush1.msra.mxu0 0.0
      %850 = vmatprep.subr.mxu0 0.0
      %851 = vmatpush1.msra.mxu0 0.0
      %852 = vmatprep.subr.mxu0 0.0
      %853 = vmatpush1.msra.mxu0 0.0
      %854 = vmatprep.subr.mxu0 0.0
      %855 = vmatpush1.msra.mxu0 0.0
      %856 = vmatprep.subr.mxu0 0.0
      %857 = vmatpush1.msra.mxu0 0.0
      %858 = vmatprep.subr.mxu0 0.0
      %859 = vmatpush1.msra.mxu0 0.0
      %860 = vmatprep.subr.mxu0 0.0
      %861 = vmatpush1.msra.mxu0 0.0
      %862 = vmatprep.subr.mxu0 0.0
      %863 = vmatpush1.msra.mxu0 0.0
      %864 = vmatprep.subr.mxu0 0.0
      %865 = vmatpush1.msra.mxu0 0.0
      %866 = vmatprep.subr.mxu0 0.0
      %867 = vmatpush1.msra.mxu0 0.0
      %868 = vmatprep.subr.mxu0 0.0
      %869 = vmatpush1.msra.mxu0 0.0
      %870 = vmatprep.subr.mxu0 0.0
      %871 = vmatpush1.msra.mxu0 0.0
      %872 = vmatprep.mubr.f32.mxu0 0.0
      %873 = vmatmul.mubr.f32.gmra.mrb[0].mxu0 %v806
      %v874 = vpop.f32.mrb[0].mxu0
      %v875 = vadd.f32 %v803, %v874
      %v876 = vpop.f32.mrb[0].mxu0
      %877 = vdwg.mxu0
      %v878 = vmax.f32 %v875, 0.0
      %v879 = vld [vmem:[%s0 + $0xc0] sm:$0xff]
      %v880 = vld [vmem:[%s0 + $0xc8] sm:$0xff]
      %v881 = vld [vmem:[%s0 + $0xd0] sm:$0xff]
      %v882 = vld [vmem:[%s0 + $0xd8] sm:$0xff]
      %v883 = vld [vmem:[%s0 + $0xe0] sm:$0x1]
      %v885 = vsel %vm401, %v878, 0
      %887 = vmatprep.subr.mxu0 0.0
      %888 = vmatpush1.msra.mxu0 %v879
      %889 = vmatprep.subr.mxu0 0.0
      %890 = vmatpush1.msra.mxu0 %v880
      %891 = vmatprep.subr.mxu0 0.0
      %892 = vmatpush1.msra.mxu0 %v881
      %893 = vmatprep.subr.mxu0 0.0
      %894 = vmatpush1.msra.mxu0 %v882
      %895 = vmatprep.subr.mxu0 0.0
      %896 = vmatpush1.msra.mxu0 0.0
      %897 = vmatprep.subr.mxu0 0.0
      %898 = vmatpush1.msra.mxu0 0.0
      %899 = vmatprep.subr.mxu0 0.0
      %900 = vmatpush1.msra.mxu0 0.0
      %901 = vmatprep.subr.mxu0 0.0
      %902 = vmatpush1.msra.mxu0 0.0
      %903 = vmatprep.subr.mxu0 0.0
      %904 = vmatpush1.msra.mxu0 0.0
      %905 = vmatprep.subr.mxu0 0.0
      %906 = vmatpush1.msra.mxu0 0.0
      %907 = vmatprep.subr.mxu0 0.0
      %908 = vmatpush1.msra.mxu0 0.0
      %909 = vmatprep.subr.mxu0 0.0
      %910 = vmatpush1.msra.mxu0 0.0
      %911 = vmatprep.subr.mxu0 0.0
      %912 = vmatpush1.msra.mxu0 0.0
      %913 = vmatprep.subr.mxu0 0.0
      %914 = vmatpush1.msra.mxu0 0.0
      %915 = vmatprep.subr.mxu0 0.0
      %916 = vmatpush1.msra.mxu0 0.0
      %917 = vmatprep.subr.mxu0 0.0
      %918 = vmatpush1.msra.mxu0 0.0
      %919 = vmatprep.subr.mxu0 0.0
      %920 = vmatpush1.msra.mxu0 0.0
      %921 = vmatprep.subr.mxu0 0.0
      %922 = vmatpush1.msra.mxu0 0.0
      %923 = vmatprep.subr.mxu0 0.0
      %924 = vmatpush1.msra.mxu0 0.0
      %925 = vmatprep.subr.mxu0 0.0
      %926 = vmatpush1.msra.mxu0 0.0
      %927 = vmatprep.subr.mxu0 0.0
      %928 = vmatpush1.msra.mxu0 0.0
      %929 = vmatprep.subr.mxu0 0.0
      %930 = vmatpush1.msra.mxu0 0.0
      %931 = vmatprep.subr.mxu0 0.0
      %932 = vmatpush1.msra.mxu0 0.0
      %933 = vmatprep.subr.mxu0 0.0
      %934 = vmatpush1.msra.mxu0 0.0
      %935 = vmatprep.subr.mxu0 0.0
      %936 = vmatpush1.msra.mxu0 0.0
      %937 = vmatprep.subr.mxu0 0.0
      %938 = vmatpush1.msra.mxu0 0.0
      %939 = vmatprep.subr.mxu0 0.0
      %940 = vmatpush1.msra.mxu0 0.0
      %941 = vmatprep.subr.mxu0 0.0
      %942 = vmatpush1.msra.mxu0 0.0
      %943 = vmatprep.subr.mxu0 0.0
      %944 = vmatpush1.msra.mxu0 0.0
      %945 = vmatprep.subr.mxu0 0.0
      %946 = vmatpush1.msra.mxu0 0.0
      %947 = vmatprep.subr.mxu0 0.0
      %948 = vmatpush1.msra.mxu0 0.0
      %949 = vmatprep.subr.mxu0 0.0
      %950 = vmatpush1.msra.mxu0 0.0
      %951 = vmatprep.mubr.f32.mxu0 0.0
      %952 = vmatmul.mubr.f32.gmra.mrb[0].mxu0 %v885
      %v953 = vpop.f32.mrb[0].mxu0
      %v954 = vadd.f32 %v883, %v953
      %v955 = vpop.f32.mrb[0].mxu0
      %956 = vdwg.mxu0
      %v957 = vtanh.pop %v954
      %959 = vrot.lane.b32.xlu0 %v957, 40
      %v960 = vpop.permute.xlu0 %959
      %vm962 = vcmask 326656
      %v963 = vsel %vm962, %v957, %v960
      %v964 = vld [vmem:[%s0 + $0xe8] sm:$0xff]
      %v965 = vlaneseq
      %v966 = vshrl.u32 %v965, 7
      %v967 = vsub.s32 0, %v966
      %v968 = vrot.slane %v963, %v967
      %v969 = vmul.f32 %v964, %v968
      %v970 = vld [vmem:[%s0 + $0xf0] sm:$0xff]
      %v971 = vld [vmem:[%s0 + $0xf8] sm:$0xff]
      %v972 = vld [vmem:[%s0 + $0x100] sm:$0xff]
      %v973 = vld [vmem:[%s0 + $0x108] sm:$0xff]
      %v974 = vld [vmem:[%s0 + $0x110] sm:$0xff]
      %v975 = vld [vmem:[%s0 + $0x118] sm:$0xff]
      %v976 = vld [vmem:[%s0 + $0x120] sm:$0xff]
      %v977 = vld [vmem:[%s0 + $0x128] sm:$0xff]
      %v978 = vld [vmem:[%s0 + $0x130] sm:$0xff]
      %v979 = vld [vmem:[%s0 + $0x138] sm:$0xff]
      %vm980 = vcmask 654336
      %v982 = vsel %vm980, %v969, 0
      %984 = vmatprep.subr.mxu0 0.0
      %985 = vmatpush1.msra.mxu0 %v970
      %986 = vmatprep.subr.mxu0 0.0
      %987 = vmatpush1.msra.mxu0 %v971
      %988 = vmatprep.subr.mxu0 0.0
      %989 = vmatpush1.msra.mxu0 %v972
      %990 = vmatprep.subr.mxu0 0.0
      %991 = vmatpush1.msra.mxu0 %v973
      %992 = vmatprep.subr.mxu0 0.0
      %993 = vmatpush1.msra.mxu0 %v974
      %994 = vmatprep.subr.mxu0 0.0
      %995 = vmatpush1.msra.mxu0 %v975
      %996 = vmatprep.subr.mxu0 0.0
      %997 = vmatpush1.msra.mxu0 %v976
      %998 = vmatprep.subr.mxu0 0.0
      %999 = vmatpush1.msra.mxu0 %v977
      %1000 = vmatprep.subr.mxu0 0.0
      %1001 = vmatpush1.msra.mxu0 %v978
      %1002 = vmatprep.subr.mxu0 0.0
      %1003 = vmatpush1.msra.mxu0 %v979
      %1004 = vmatprep.subr.mxu0 0.0
      %1005 = vmatpush1.msra.mxu0 0.0
      %1006 = vmatprep.subr.mxu0 0.0
      %1007 = vmatpush1.msra.mxu0 0.0
      %1008 = vmatprep.subr.mxu0 0.0
      %1009 = vmatpush1.msra.mxu0 0.0
      %1010 = vmatprep.subr.mxu0 0.0
      %1011 = vmatpush1.msra.mxu0 0.0
      %1012 = vmatprep.subr.mxu0 0.0
      %1013 = vmatpush1.msra.mxu0 0.0
      %1014 = vmatprep.subr.mxu0 0.0
      %1015 = vmatpush1.msra.mxu0 0.0
      %1016 = vmatprep.subr.mxu0 0.0
      %1017 = vmatpush1.msra.mxu0 0.0
      %1018 = vmatprep.subr.mxu0 0.0
      %1019 = vmatpush1.msra.mxu0 0.0
      %1020 = vmatprep.subr.mxu0 0.0
      %1021 = vmatpush1.msra.mxu0 0.0
      %1022 = vmatprep.subr.mxu0 0.0
      %1023 = vmatpush1.msra.mxu0 0.0
      %1024 = vmatprep.subr.mxu0 0.0
      %1025 = vmatpush1.msra.mxu0 0.0
      %1026 = vmatprep.subr.mxu0 0.0
      %1027 = vmatpush1.msra.mxu0 0.0
      %1028 = vmatprep.subr.mxu0 0.0
      %1029 = vmatpush1.msra.mxu0 0.0
      %1030 = vmatprep.subr.mxu0 0.0
      %1031 = vmatpush1.msra.mxu0 0.0
      %1032 = vmatprep.subr.mxu0 0.0
      %1033 = vmatpush1.msra.mxu0 0.0
      %1034 = vmatprep.subr.mxu0 0.0
      %1035 = vmatpush1.msra.mxu0 0.0
      %1036 = vmatprep.subr.mxu0 0.0
      %1037 = vmatpush1.msra.mxu0 0.0
      %1038 = vmatprep.subr.mxu0 0.0
      %1039 = vmatpush1.msra.mxu0 0.0
      %1040 = vmatprep.subr.mxu0 0.0
      %1041 = vmatpush1.msra.mxu0 0.0
      %1042 = vmatprep.subr.mxu0 0.0
      %1043 = vmatpush1.msra.mxu0 0.0
      %1044 = vmatprep.subr.mxu0 0.0
      %1045 = vmatpush1.msra.mxu0 0.0
      %1046 = vmatprep.subr.mxu0 0.0
      %1047 = vmatpush1.msra.mxu0 0.0
      %1048 = vmatprep.mubr.f32.mxu0 0.0
      %1049 = vmatmul.mubr.f32.gmra.mrb[0].mxu0 %v982
      %v1050 = vpop.f32.mrb[0].mxu0
      %v1051 = vadd.f32 0.0, %v1050
      %v1052 = vpop.f32.mrb[0].mxu0
      %1053 = vdwg.mxu0
      %vm1054 = vcmp.gt.f32.partialorder %v204, 0.5
      %v1055 = vsel %vm1054, %v1051, -10.0
      %v1056 = vsub.f32 0.0, %v1055
      %v1057 = vmul.f32 %v1056, 1.442695
      %v1058 = vpow.pop %v1057
      %v1059 = vadd.f32 %v1058, 1.0
      %v1060 = vrcp.pop %v1059
      %v1061 = vmul.f32 %v206, %v1060
      %1063 = vrot.lane.b32.xlu0 %v206, 8
      %v1064 = vpop.permute.xlu0 %1063
      %v1066 = vmul.f32 %v212, %v1064
      %1068 = vrot.lane.b32.xlu0 %v1066, 120
      %v1069 = vpop.permute.xlu0 %1068
      %v1071 = vsel %vm224, %v1069, 0.0
      %1072 = vadd.xlane.f32.xlu0 %v1071
      %v1073 = vpop.xlane.xlu0 %1072
      %v1074 = vadd.f32 %v1073, 1.0
      %v1075 = vsel %vm224, %v1061, 0.0
      %v1076 = vrot.slane %v1075, 4
      %v1077 = vadd.f32 %v1075, %v1076
      %v1078 = vrot.slane %v1077, 2
      %v1079 = vadd.f32 %v1077, %v1078
      %v1080 = vrot.slane %v1079, 1
      %v1081 = vadd.f32 %v1079, %v1080
      %v1082 = vadd.f32 %v1081, 1.0
      %v1083 = vsub.f32 %v1074, %v1082
      %v1084 = vand.u32 2147483647, %v1083
      %v1085 = vadd.f32 %v1084, 1.0
      %v1086 = vrcp.pop %v1085
      %v1087 = vmul.f32 1.0, %v1086
      %v1088 = vmul.f32 %v204, 0.16666667
      %v1089 = vld [vmem:[%s0 + $0x140] sm:$0xff]
      %1091 = vrot.lane.b32.xlu0 %v1061, 8
      %v1092 = vpop.permute.xlu0 %1091
      %1094 = vrot.lane.b32.xlu0 %v1061, 16
      %v1095 = vpop.permute.xlu0 %1094
      %1097 = vrot.lane.b32.xlu0 %v1061, 24
      %v1098 = vpop.permute.xlu0 %1097
      %1100 = vrot.lane.b32.xlu0 %v1061, 32
      %v1101 = vpop.permute.xlu0 %1100
      %1103 = vrot.lane.b32.xlu0 %v1061, 40
      %v1104 = vpop.permute.xlu0 %1103
      %v1106 = vsel %vm224, %v1061, %v1092
      %v1107 = vsel %vm804, %v1106, %v1095
      %vm1108 = vcmask 195584
      %v1109 = vsel %vm1108, %v1107, %v1098
      %v1110 = vsel %vm401, %v1109, %v1101
      %v1111 = vsel %vm962, %v1110, %v1104
      %v1112 = vmul.f32 %v1111, %v1089
      // While loop
      $region37: #{forward.1} parent=35 // loop_pre_header
        _
      $region38: #{forward.1} parent=35 // loop_header
        %v1114 = vphi %v1088, %v2034
        %s1115 = sphi 0, %s2035
        %s1116 = sphi inf, %s2047
        %p1117 = scmp.lt.s32.totalorder %s1115, 50
        %p1118 = scmp.ge.f32.partialorder %s1116, 0.0001
        %p1119 = pnand %p1117, %p1118
        %p1120 = pneg %p1119
      $region39: #{forward.1} parent=35 // loop_header_branch
        %1122 = sbr.rel (%p1119) target = $region43
      $region40: #{forward.1} parent=35 // loop_body
        %v1124 = vsel %vm224, %v1114, 0
        %1126 = vmatprep.subr.mxu0 0.0
        %1127 = vmatpush1.msra.mxu0 %v1112
        %1128 = vmatprep.subr.mxu0 0.0
        %1129 = vmatpush1.msra.mxu0 0.0
        %1130 = vmatprep.subr.mxu0 0.0
        %1131 = vmatpush1.msra.mxu0 0.0
        %1132 = vmatprep.subr.mxu0 0.0
        %1133 = vmatpush1.msra.mxu0 0.0
        %1134 = vmatprep.subr.mxu0 0.0
        %1135 = vmatpush1.msra.mxu0 0.0
        %1136 = vmatprep.subr.mxu0 0.0
        %1137 = vmatpush1.msra.mxu0 0.0
        %1138 = vmatprep.subr.mxu0 0.0
        %1139 = vmatpush1.msra.mxu0 0.0
        %1140 = vmatprep.subr.mxu0 0.0
        %1141 = vmatpush1.msra.mxu0 0.0
        %1142 = vmatprep.subr.mxu0 0.0
        %1143 = vmatpush1.msra.mxu0 0.0
        %1144 = vmatprep.subr.mxu0 0.0
        %1145 = vmatpush1.msra.mxu0 0.0
        %1146 = vmatprep.subr.mxu0 0.0
        %1147 = vmatpush1.msra.mxu0 0.0
        %1148 = vmatprep.subr.mxu0 0.0
        %1149 = vmatpush1.msra.mxu0 0.0
        %1150 = vmatprep.subr.mxu0 0.0
        %1151 = vmatpush1.msra.mxu0 0.0
        %1152 = vmatprep.subr.mxu0 0.0
        %1153 = vmatpush1.msra.mxu0 0.0
        %1154 = vmatprep.subr.mxu0 0.0
        %1155 = vmatpush1.msra.mxu0 0.0
        %1156 = vmatprep.subr.mxu0 0.0
        %1157 = vmatpush1.msra.mxu0 0.0
        %1158 = vmatprep.subr.mxu0 0.0
        %1159 = vmatpush1.msra.mxu0 0.0
        %1160 = vmatprep.subr.mxu0 0.0
        %1161 = vmatpush1.msra.mxu0 0.0
        %1162 = vmatprep.subr.mxu0 0.0
        %1163 = vmatpush1.msra.mxu0 0.0
        %1164 = vmatprep.subr.mxu0 0.0
        %1165 = vmatpush1.msra.mxu0 0.0
        %1166 = vmatprep.subr.mxu0 0.0
        %1167 = vmatpush1.msra.mxu0 0.0
        %1168 = vmatprep.subr.mxu0 0.0
        %1169 = vmatpush1.msra.mxu0 0.0
        %1170 = vmatprep.subr.mxu0 0.0
        %1171 = vmatpush1.msra.mxu0 0.0
        %1172 = vmatprep.subr.mxu0 0.0
        %1173 = vmatpush1.msra.mxu0 0.0
        %1174 = vmatprep.subr.mxu0 0.0
        %1175 = vmatpush1.msra.mxu0 0.0
        %1176 = vmatprep.subr.mxu0 0.0
        %1177 = vmatpush1.msra.mxu0 0.0
        %1178 = vmatprep.subr.mxu0 0.0
        %1179 = vmatpush1.msra.mxu0 0.0
        %1180 = vmatprep.subr.mxu0 0.0
        %1181 = vmatpush1.msra.mxu0 0.0
        %1182 = vmatprep.subr.mxu0 0.0
        %1183 = vmatpush1.msra.mxu0 0.0
        %1184 = vmatprep.subr.mxu0 0.0
        %1185 = vmatpush1.msra.mxu0 0.0
        %1186 = vmatprep.subr.mxu0 0.0
        %1187 = vmatpush1.msra.mxu0 0.0
        %1188 = vmatprep.subr.mxu0 0.0
        %1189 = vmatpush1.msra.mxu0 0.0
        %1190 = vmatprep.mubr.f32.mxu0 0.0
        %1191 = vmatmul.mubr.f32.gmra.mrb[0].mxu0 %v1124
        %v1192 = vpop.f32.mrb[0].mxu0
        %v1193 = vadd.f32 0.0, %v1192
        %v1194 = vpop.f32.mrb[0].mxu0
        %1195 = vdwg.mxu0
        %1197 = vrot.lane.b32.xlu0 %v1193, 120
        %v1198 = vpop.permute.xlu0 %1197
        %v1200 = vmax.f32 %v1193, %v1198
        %1201 = vrot.lane.b32.xlu0 %v1193, 112
        %v1202 = vpop.permute.xlu0 %1201
        %v1204 = vmax.f32 %v1200, %v1202
        %1205 = vrot.lane.b32.xlu0 %v1193, 104
        %v1206 = vpop.permute.xlu0 %1205
        %v1208 = vmax.f32 %v1204, %v1206
        %1209 = vrot.lane.b32.xlu0 %v1193, 96
        %v1210 = vpop.permute.xlu0 %1209
        %v1212 = vmax.f32 %v1208, %v1210
        %1213 = vrot.lane.b32.xlu0 %v1193, 88
        %v1214 = vpop.permute.xlu0 %1213
        %v1216 = vmax.f32 %v1212, %v1214
        %v1217 = vmul.f32 %v1114, %v1087
        %v1218 = vsel %vm224, %v1069, 0
        %1220 = vmatprep.subr.mxu0 0.0
        %1221 = vmatpush1.msra.mxu0 %v1216
        %1222 = vmatprep.subr.mxu0 0.0
        %1223 = vmatpush1.msra.mxu0 0.0
        %1224 = vmatprep.subr.mxu0 0.0
        %1225 = vmatpush1.msra.mxu0 0.0
        %1226 = vmatprep.subr.mxu0 0.0
        %1227 = vmatpush1.msra.mxu0 0.0
        %1228 = vmatprep.subr.mxu0 0.0
        %1229 = vmatpush1.msra.mxu0 0.0
        %1230 = vmatprep.subr.mxu0 0.0
        %1231 = vmatpush1.msra.mxu0 0.0
        %1232 = vmatprep.subr.mxu0 0.0
        %1233 = vmatpush1.msra.mxu0 0.0
        %1234 = vmatprep.subr.mxu0 0.0
        %1235 = vmatpush1.msra.mxu0 0.0
        %1236 = vmatprep.subr.mxu0 0.0
        %1237 = vmatpush1.msra.mxu0 0.0
        %1238 = vmatprep.subr.mxu0 0.0
        %1239 = vmatpush1.msra.mxu0 0.0
        %1240 = vmatprep.subr.mxu0 0.0
        %1241 = vmatpush1.msra.mxu0 0.0
        %1242 = vmatprep.subr.mxu0 0.0
        %1243 = vmatpush1.msra.mxu0 0.0
        %1244 = vmatprep.subr.mxu0 0.0
        %1245 = vmatpush1.msra.mxu0 0.0
        %1246 = vmatprep.subr.mxu0 0.0
        %1247 = vmatpush1.msra.mxu0 0.0
        %1248 = vmatprep.subr.mxu0 0.0
        %1249 = vmatpush1.msra.mxu0 0.0
        %1250 = vmatprep.subr.mxu0 0.0
        %1251 = vmatpush1.msra.mxu0 0.0
        %1252 = vmatprep.subr.mxu0 0.0
        %1253 = vmatpush1.msra.mxu0 0.0
        %1254 = vmatprep.subr.mxu0 0.0
        %1255 = vmatpush1.msra.mxu0 0.0
        %1256 = vmatprep.subr.mxu0 0.0
        %1257 = vmatpush1.msra.mxu0 0.0
        %1258 = vmatprep.subr.mxu0 0.0
        %1259 = vmatpush1.msra.mxu0 0.0
        %1260 = vmatprep.subr.mxu0 0.0
        %1261 = vmatpush1.msra.mxu0 0.0
        %1262 = vmatprep.subr.mxu0 0.0
        %1263 = vmatpush1.msra.mxu0 0.0
        %1264 = vmatprep.subr.mxu0 0.0
        %1265 = vmatpush1.msra.mxu0 0.0
        %1266 = vmatprep.subr.mxu0 0.0
        %1267 = vmatpush1.msra.mxu0 0.0
        %1268 = vmatprep.subr.mxu0 0.0
        %1269 = vmatpush1.msra.mxu0 0.0
        %1270 = vmatprep.subr.mxu0 0.0
        %1271 = vmatpush1.msra.mxu0 0.0
        %1272 = vmatprep.subr.mxu0 0.0
        %1273 = vmatpush1.msra.mxu0 0.0
        %1274 = vmatprep.subr.mxu0 0.0
        %1275 = vmatpush1.msra.mxu0 0.0
        %1276 = vmatprep.subr.mxu0 0.0
        %1277 = vmatpush1.msra.mxu0 0.0
        %1278 = vmatprep.subr.mxu0 0.0
        %1279 = vmatpush1.msra.mxu0 0.0
        %1280 = vmatprep.subr.mxu0 0.0
        %1281 = vmatpush1.msra.mxu0 0.0
        %1282 = vmatprep.subr.mxu0 0.0
        %1283 = vmatpush1.msra.mxu0 0.0
        %1284 = vmatprep.mubr.f32.mxu0 0.0
        %1285 = vmatmul.mubr.f32.gmra.mrb[0].mxu0 %v1218
        %v1286 = vpop.f32.mrb[0].mxu0
        %v1287 = vadd.f32 0.0, %v1286
        %v1288 = vpop.f32.mrb[0].mxu0
        %1289 = vdwg.mxu0
        %v1290 = vadd.f32 %v1217, %v1287
        %v1291 = vmul.f32 %v1290, %v1290
        %v1292 = vsel %vm224, %v1291, 0.0
        %1293 = vadd.xlane.f32.xlu0 %v1292
        %v1294 = vpop.xlane.xlu0 %1293
        %v1295 = vrot.slane %v1294, 4
        %v1296 = vadd.f32 %v1294, %v1295
        %v1297 = vrot.slane %v1296, 2
        %v1298 = vadd.f32 %v1296, %v1297
        %v1299 = vrot.slane %v1298, 1
        %v1300 = vadd.f32 %v1298, %v1299
        %s1301 = vtos %v1300
        %v1302 = vstv %s1301
        %v1303 = vrsqrt.pop %v1302
        %s1304 = vtos %v1303
        %v1305 = vstv %s1304
        %v1306 = vmul.f32 %v1290, %v1305
        %v1308 = vsel %vm224, %v1306, 0
        %1310 = vmatprep.subr.mxu0 0.0
        %1311 = vmatpush1.msra.mxu0 %v1112
        %1312 = vmatprep.subr.mxu0 0.0
        %1313 = vmatpush1.msra.mxu0 0.0
        %1314 = vmatprep.subr.mxu0 0.0
        %1315 = vmatpush1.msra.mxu0 0.0
        %1316 = vmatprep.subr.mxu0 0.0
        %1317 = vmatpush1.msra.mxu0 0.0
        %1318 = vmatprep.subr.mxu0 0.0
        %1319 = vmatpush1.msra.mxu0 0.0
        %1320 = vmatprep.subr.mxu0 0.0
        %1321 = vmatpush1.msra.mxu0 0.0
        %1322 = vmatprep.subr.mxu0 0.0
        %1323 = vmatpush1.msra.mxu0 0.0
        %1324 = vmatprep.subr.mxu0 0.0
        %1325 = vmatpush1.msra.mxu0 0.0
        %1326 = vmatprep.subr.mxu0 0.0
        %1327 = vmatpush1.msra.mxu0 0.0
        %1328 = vmatprep.subr.mxu0 0.0
        %1329 = vmatpush1.msra.mxu0 0.0
        %1330 = vmatprep.subr.mxu0 0.0
        %1331 = vmatpush1.msra.mxu0 0.0
        %1332 = vmatprep.subr.mxu0 0.0
        %1333 = vmatpush1.msra.mxu0 0.0
        %1334 = vmatprep.subr.mxu0 0.0
        %1335 = vmatpush1.msra.mxu0 0.0
        %1336 = vmatprep.subr.mxu0 0.0
        %1337 = vmatpush1.msra.mxu0 0.0
        %1338 = vmatprep.subr.mxu0 0.0
        %1339 = vmatpush1.msra.mxu0 0.0
        %1340 = vmatprep.subr.mxu0 0.0
        %1341 = vmatpush1.msra.mxu0 0.0
        %1342 = vmatprep.subr.mxu0 0.0
        %1343 = vmatpush1.msra.mxu0 0.0
        %1344 = vmatprep.subr.mxu0 0.0
        %1345 = vmatpush1.msra.mxu0 0.0
        %1346 = vmatprep.subr.mxu0 0.0
        %1347 = vmatpush1.msra.mxu0 0.0
        %1348 = vmatprep.subr.mxu0 0.0
        %1349 = vmatpush1.msra.mxu0 0.0
        %1350 = vmatprep.subr.mxu0 0.0
        %1351 = vmatpush1.msra.mxu0 0.0
        %1352 = vmatprep.subr.mxu0 0.0
        %1353 = vmatpush1.msra.mxu0 0.0
        %1354 = vmatprep.subr.mxu0 0.0
        %1355 = vmatpush1.msra.mxu0 0.0
        %1356 = vmatprep.subr.mxu0 0.0
        %1357 = vmatpush1.msra.mxu0 0.0
        %1358 = vmatprep.subr.mxu0 0.0
        %1359 = vmatpush1.msra.mxu0 0.0
        %1360 = vmatprep.subr.mxu0 0.0
        %1361 = vmatpush1.msra.mxu0 0.0
        %1362 = vmatprep.subr.mxu0 0.0
        %1363 = vmatpush1.msra.mxu0 0.0
        %1364 = vmatprep.subr.mxu0 0.0
        %1365 = vmatpush1.msra.mxu0 0.0
        %1366 = vmatprep.subr.mxu0 0.0
        %1367 = vmatpush1.msra.mxu0 0.0
        %1368 = vmatprep.subr.mxu0 0.0
        %1369 = vmatpush1.msra.mxu0 0.0
        %1370 = vmatprep.subr.mxu0 0.0
        %1371 = vmatpush1.msra.mxu0 0.0
        %1372 = vmatprep.subr.mxu0 0.0
        %1373 = vmatpush1.msra.mxu0 0.0
        %1374 = vmatprep.mubr.f32.mxu0 0.0
        %1375 = vmatmul.mubr.f32.gmra.mrb[0].mxu0 %v1308
        %v1376 = vpop.f32.mrb[0].mxu0
        %v1377 = vadd.f32 0.0, %v1376
        %v1378 = vpop.f32.mrb[0].mxu0
        %1379 = vdwg.mxu0
        %1381 = vrot.lane.b32.xlu0 %v1377, 120
        %v1382 = vpop.permute.xlu0 %1381
        %v1384 = vmax.f32 %v1377, %v1382
        %1385 = vrot.lane.b32.xlu0 %v1377, 112
        %v1386 = vpop.permute.xlu0 %1385
        %v1388 = vmax.f32 %v1384, %v1386
        %1389 = vrot.lane.b32.xlu0 %v1377, 104
        %v1390 = vpop.permute.xlu0 %1389
        %v1392 = vmax.f32 %v1388, %v1390
        %1393 = vrot.lane.b32.xlu0 %v1377, 96
        %v1394 = vpop.permute.xlu0 %1393
        %v1396 = vmax.f32 %v1392, %v1394
        %1397 = vrot.lane.b32.xlu0 %v1377, 88
        %v1398 = vpop.permute.xlu0 %1397
        %v1400 = vmax.f32 %v1396, %v1398
        %v1401 = vmul.f32 %v1306, %v1087
        %1402 = vmatprep.subr.mxu0 0.0
        %1403 = vmatpush1.msra.mxu0 %v1400
        %1404 = vmatprep.subr.mxu0 0.0
        %1405 = vmatpush1.msra.mxu0 0.0
        %1406 = vmatprep.subr.mxu0 0.0
        %1407 = vmatpush1.msra.mxu0 0.0
        %1408 = vmatprep.subr.mxu0 0.0
        %1409 = vmatpush1.msra.mxu0 0.0
        %1410 = vmatprep.subr.mxu0 0.0
        %1411 = vmatpush1.msra.mxu0 0.0
        %1412 = vmatprep.subr.mxu0 0.0
        %1413 = vmatpush1.msra.mxu0 0.0
        %1414 = vmatprep.subr.mxu0 0.0
        %1415 = vmatpush1.msra.mxu0 0.0
        %1416 = vmatprep.subr.mxu0 0.0
        %1417 = vmatpush1.msra.mxu0 0.0
        %1418 = vmatprep.subr.mxu0 0.0
        %1419 = vmatpush1.msra.mxu0 0.0
        %1420 = vmatprep.subr.mxu0 0.0
        %1421 = vmatpush1.msra.mxu0 0.0
        %1422 = vmatprep.subr.mxu0 0.0
        %1423 = vmatpush1.msra.mxu0 0.0
        %1424 = vmatprep.subr.mxu0 0.0
        %1425 = vmatpush1.msra.mxu0 0.0
        %1426 = vmatprep.subr.mxu0 0.0
        %1427 = vmatpush1.msra.mxu0 0.0
        %1428 = vmatprep.subr.mxu0 0.0
        %1429 = vmatpush1.msra.mxu0 0.0
        %1430 = vmatprep.subr.mxu0 0.0
        %1431 = vmatpush1.msra.mxu0 0.0
        %1432 = vmatprep.subr.mxu0 0.0
        %1433 = vmatpush1.msra.mxu0 0.0
        %1434 = vmatprep.subr.mxu0 0.0
        %1435 = vmatpush1.msra.mxu0 0.0
        %1436 = vmatprep.subr.mxu0 0.0
        %1437 = vmatpush1.msra.mxu0 0.0
        %1438 = vmatprep.subr.mxu0 0.0
        %1439 = vmatpush1.msra.mxu0 0.0
        %1440 = vmatprep.subr.mxu0 0.0
        %1441 = vmatpush1.msra.mxu0 0.0
        %1442 = vmatprep.subr.mxu0 0.0
        %1443 = vmatpush1.msra.mxu0 0.0
        %1444 = vmatprep.subr.mxu0 0.0
        %1445 = vmatpush1.msra.mxu0 0.0
        %1446 = vmatprep.subr.mxu0 0.0
        %1447 = vmatpush1.msra.mxu0 0.0
        %1448 = vmatprep.subr.mxu0 0.0
        %1449 = vmatpush1.msra.mxu0 0.0
        %1450 = vmatprep.subr.mxu0 0.0
        %1451 = vmatpush1.msra.mxu0 0.0
        %1452 = vmatprep.subr.mxu0 0.0
        %1453 = vmatpush1.msra.mxu0 0.0
        %1454 = vmatprep.subr.mxu0 0.0
        %1455 = vmatpush1.msra.mxu0 0.0
        %1456 = vmatprep.subr.mxu0 0.0
        %1457 = vmatpush1.msra.mxu0 0.0
        %1458 = vmatprep.subr.mxu0 0.0
        %1459 = vmatpush1.msra.mxu0 0.0
        %1460 = vmatprep.subr.mxu0 0.0
        %1461 = vmatpush1.msra.mxu0 0.0
        %1462 = vmatprep.subr.mxu0 0.0
        %1463 = vmatpush1.msra.mxu0 0.0
        %1464 = vmatprep.subr.mxu0 0.0
        %1465 = vmatpush1.msra.mxu0 0.0
        %1466 = vmatprep.mubr.f32.mxu0 0.0
        %1467 = vmatmul.mubr.f32.gmra.mrb[0].mxu0 %v1218
        %v1468 = vpop.f32.mrb[0].mxu0
        %v1469 = vadd.f32 0.0, %v1468
        %v1470 = vpop.f32.mrb[0].mxu0
        %1471 = vdwg.mxu0
        %v1472 = vadd.f32 %v1401, %v1469
        %v1473 = vmul.f32 %v1472, %v1472
        %v1474 = vsel %vm224, %v1473, 0.0
        %1475 = vadd.xlane.f32.xlu0 %v1474
        %v1476 = vpop.xlane.xlu0 %1475
        %v1477 = vrot.slane %v1476, 4
        %v1478 = vadd.f32 %v1476, %v1477
        %v1479 = vrot.slane %v1478, 2
        %v1480 = vadd.f32 %v1478, %v1479
        %v1481 = vrot.slane %v1480, 1
        %v1482 = vadd.f32 %v1480, %v1481
        %s1483 = vtos %v1482
        %v1484 = vstv %s1483
        %v1485 = vrsqrt.pop %v1484
        %s1486 = vtos %v1485
        %v1487 = vstv %s1486
        %v1488 = vmul.f32 %v1472, %v1487
        %v1490 = vsel %vm224, %v1488, 0
        %1492 = vmatprep.subr.mxu0 0.0
        %1493 = vmatpush1.msra.mxu0 %v1112
        %1494 = vmatprep.subr.mxu0 0.0
        %1495 = vmatpush1.msra.mxu0 0.0
        %1496 = vmatprep.subr.mxu0 0.0
        %1497 = vmatpush1.msra.mxu0 0.0
        %1498 = vmatprep.subr.mxu0 0.0
        %1499 = vmatpush1.msra.mxu0 0.0
        %1500 = vmatprep.subr.mxu0 0.0
        %1501 = vmatpush1.msra.mxu0 0.0
        %1502 = vmatprep.subr.mxu0 0.0
        %1503 = vmatpush1.msra.mxu0 0.0
        %1504 = vmatprep.subr.mxu0 0.0
        %1505 = vmatpush1.msra.mxu0 0.0
        %1506 = vmatprep.subr.mxu0 0.0
        %1507 = vmatpush1.msra.mxu0 0.0
        %1508 = vmatprep.subr.mxu0 0.0
        %1509 = vmatpush1.msra.mxu0 0.0
        %1510 = vmatprep.subr.mxu0 0.0
        %1511 = vmatpush1.msra.mxu0 0.0
        %1512 = vmatprep.subr.mxu0 0.0
        %1513 = vmatpush1.msra.mxu0 0.0
        %1514 = vmatprep.subr.mxu0 0.0
        %1515 = vmatpush1.msra.mxu0 0.0
        %1516 = vmatprep.subr.mxu0 0.0
        %1517 = vmatpush1.msra.mxu0 0.0
        %1518 = vmatprep.subr.mxu0 0.0
        %1519 = vmatpush1.msra.mxu0 0.0
        %1520 = vmatprep.subr.mxu0 0.0
        %1521 = vmatpush1.msra.mxu0 0.0
        %1522 = vmatprep.subr.mxu0 0.0
        %1523 = vmatpush1.msra.mxu0 0.0
        %1524 = vmatprep.subr.mxu0 0.0
        %1525 = vmatpush1.msra.mxu0 0.0
        %1526 = vmatprep.subr.mxu0 0.0
        %1527 = vmatpush1.msra.mxu0 0.0
        %1528 = vmatprep.subr.mxu0 0.0
        %1529 = vmatpush1.msra.mxu0 0.0
        %1530 = vmatprep.subr.mxu0 0.0
        %1531 = vmatpush1.msra.mxu0 0.0
        %1532 = vmatprep.subr.mxu0 0.0
        %1533 = vmatpush1.msra.mxu0 0.0
        %1534 = vmatprep.subr.mxu0 0.0
        %1535 = vmatpush1.msra.mxu0 0.0
        %1536 = vmatprep.subr.mxu0 0.0
        %1537 = vmatpush1.msra.mxu0 0.0
        %1538 = vmatprep.subr.mxu0 0.0
        %1539 = vmatpush1.msra.mxu0 0.0
        %1540 = vmatprep.subr.mxu0 0.0
        %1541 = vmatpush1.msra.mxu0 0.0
        %1542 = vmatprep.subr.mxu0 0.0
        %1543 = vmatpush1.msra.mxu0 0.0
        %1544 = vmatprep.subr.mxu0 0.0
        %1545 = vmatpush1.msra.mxu0 0.0
        %1546 = vmatprep.subr.mxu0 0.0
        %1547 = vmatpush1.msra.mxu0 0.0
        %1548 = vmatprep.subr.mxu0 0.0
        %1549 = vmatpush1.msra.mxu0 0.0
        %1550 = vmatprep.subr.mxu0 0.0
        %1551 = vmatpush1.msra.mxu0 0.0
        %1552 = vmatprep.subr.mxu0 0.0
        %1553 = vmatpush1.msra.mxu0 0.0
        %1554 = vmatprep.subr.mxu0 0.0
        %1555 = vmatpush1.msra.mxu0 0.0
        %1556 = vmatprep.mubr.f32.mxu0 0.0
        %1557 = vmatmul.mubr.f32.gmra.mrb[0].mxu0 %v1490
        %v1558 = vpop.f32.mrb[0].mxu0
        %v1559 = vadd.f32 0.0, %v1558
        %v1560 = vpop.f32.mrb[0].mxu0
        %1561 = vdwg.mxu0
        %1563 = vrot.lane.b32.xlu0 %v1559, 120
        %v1564 = vpop.permute.xlu0 %1563
        %v1566 = vmax.f32 %v1559, %v1564
        %1567 = vrot.lane.b32.xlu0 %v1559, 112
        %v1568 = vpop.permute.xlu0 %1567
        %v1570 = vmax.f32 %v1566, %v1568
        %1571 = vrot.lane.b32.xlu0 %v1559, 104
        %v1572 = vpop.permute.xlu0 %1571
        %v1574 = vmax.f32 %v1570, %v1572
        %1575 = vrot.lane.b32.xlu0 %v1559, 96
        %v1576 = vpop.permute.xlu0 %1575
        %v1578 = vmax.f32 %v1574, %v1576
        %1579 = vrot.lane.b32.xlu0 %v1559, 88
        %v1580 = vpop.permute.xlu0 %1579
        %v1582 = vmax.f32 %v1578, %v1580
        %v1583 = vmul.f32 %v1488, %v1087
        %1584 = vmatprep.subr.mxu0 0.0
        %1585 = vmatpush1.msra.mxu0 %v1582
        %1586 = vmatprep.subr.mxu0 0.0
        %1587 = vmatpush1.msra.mxu0 0.0
        %1588 = vmatprep.subr.mxu0 0.0
        %1589 = vmatpush1.msra.mxu0 0.0
        %1590 = vmatprep.subr.mxu0 0.0
        %1591 = vmatpush1.msra.mxu0 0.0
        %1592 = vmatprep.subr.mxu0 0.0
        %1593 = vmatpush1.msra.mxu0 0.0
        %1594 = vmatprep.subr.mxu0 0.0
        %1595 = vmatpush1.msra.mxu0 0.0
        %1596 = vmatprep.subr.mxu0 0.0
        %1597 = vmatpush1.msra.mxu0 0.0
        %1598 = vmatprep.subr.mxu0 0.0
        %1599 = vmatpush1.msra.mxu0 0.0
        %1600 = vmatprep.subr.mxu0 0.0
        %1601 = vmatpush1.msra.mxu0 0.0
        %1602 = vmatprep.subr.mxu0 0.0
        %1603 = vmatpush1.msra.mxu0 0.0
        %1604 = vmatprep.subr.mxu0 0.0
        %1605 = vmatpush1.msra.mxu0 0.0
        %1606 = vmatprep.subr.mxu0 0.0
        %1607 = vmatpush1.msra.mxu0 0.0
        %1608 = vmatprep.subr.mxu0 0.0
        %1609 = vmatpush1.msra.mxu0 0.0
        %1610 = vmatprep.subr.mxu0 0.0
        %1611 = vmatpush1.msra.mxu0 0.0
        %1612 = vmatprep.subr.mxu0 0.0
        %1613 = vmatpush1.msra.mxu0 0.0
        %1614 = vmatprep.subr.mxu0 0.0
        %1615 = vmatpush1.msra.mxu0 0.0
        %1616 = vmatprep.subr.mxu0 0.0
        %1617 = vmatpush1.msra.mxu0 0.0
        %1618 = vmatprep.subr.mxu0 0.0
        %1619 = vmatpush1.msra.mxu0 0.0
        %1620 = vmatprep.subr.mxu0 0.0
        %1621 = vmatpush1.msra.mxu0 0.0
        %1622 = vmatprep.subr.mxu0 0.0
        %1623 = vmatpush1.msra.mxu0 0.0
        %1624 = vmatprep.subr.mxu0 0.0
        %1625 = vmatpush1.msra.mxu0 0.0
        %1626 = vmatprep.subr.mxu0 0.0
        %1627 = vmatpush1.msra.mxu0 0.0
        %1628 = vmatprep.subr.mxu0 0.0
        %1629 = vmatpush1.msra.mxu0 0.0
        %1630 = vmatprep.subr.mxu0 0.0
        %1631 = vmatpush1.msra.mxu0 0.0
        %1632 = vmatprep.subr.mxu0 0.0
        %1633 = vmatpush1.msra.mxu0 0.0
        %1634 = vmatprep.subr.mxu0 0.0
        %1635 = vmatpush1.msra.mxu0 0.0
        %1636 = vmatprep.subr.mxu0 0.0
        %1637 = vmatpush1.msra.mxu0 0.0
        %1638 = vmatprep.subr.mxu0 0.0
        %1639 = vmatpush1.msra.mxu0 0.0
        %1640 = vmatprep.subr.mxu0 0.0
        %1641 = vmatpush1.msra.mxu0 0.0
        %1642 = vmatprep.subr.mxu0 0.0
        %1643 = vmatpush1.msra.mxu0 0.0
        %1644 = vmatprep.subr.mxu0 0.0
        %1645 = vmatpush1.msra.mxu0 0.0
        %1646 = vmatprep.subr.mxu0 0.0
        %1647 = vmatpush1.msra.mxu0 0.0
        %1648 = vmatprep.mubr.f32.mxu0 0.0
        %1649 = vmatmul.mubr.f32.gmra.mrb[0].mxu0 %v1218
        %v1650 = vpop.f32.mrb[0].mxu0
        %v1651 = vadd.f32 0.0, %v1650
        %v1652 = vpop.f32.mrb[0].mxu0
        %1653 = vdwg.mxu0
        %v1654 = vadd.f32 %v1583, %v1651
        %v1655 = vmul.f32 %v1654, %v1654
        %v1656 = vsel %vm224, %v1655, 0.0
        %1657 = vadd.xlane.f32.xlu0 %v1656
        %v1658 = vpop.xlane.xlu0 %1657
        %v1659 = vrot.slane %v1658, 4
        %v1660 = vadd.f32 %v1658, %v1659
        %v1661 = vrot.slane %v1660, 2
        %v1662 = vadd.f32 %v1660, %v1661
        %v1663 = vrot.slane %v1662, 1
        %v1664 = vadd.f32 %v1662, %v1663
        %s1665 = vtos %v1664
        %v1666 = vstv %s1665
        %v1667 = vrsqrt.pop %v1666
        %s1668 = vtos %v1667
        %v1669 = vstv %s1668
        %v1670 = vmul.f32 %v1654, %v1669
        %v1672 = vsel %vm224, %v1670, 0
        %1674 = vmatprep.subr.mxu0 0.0
        %1675 = vmatpush1.msra.mxu0 %v1112
        %1676 = vmatprep.subr.mxu0 0.0
        %1677 = vmatpush1.msra.mxu0 0.0
        %1678 = vmatprep.subr.mxu0 0.0
        %1679 = vmatpush1.msra.mxu0 0.0
        %1680 = vmatprep.subr.mxu0 0.0
        %1681 = vmatpush1.msra.mxu0 0.0
        %1682 = vmatprep.subr.mxu0 0.0
        %1683 = vmatpush1.msra.mxu0 0.0
        %1684 = vmatprep.subr.mxu0 0.0
        %1685 = vmatpush1.msra.mxu0 0.0
        %1686 = vmatprep.subr.mxu0 0.0
        %1687 = vmatpush1.msra.mxu0 0.0
        %1688 = vmatprep.subr.mxu0 0.0
        %1689 = vmatpush1.msra.mxu0 0.0
        %1690 = vmatprep.subr.mxu0 0.0
        %1691 = vmatpush1.msra.mxu0 0.0
        %1692 = vmatprep.subr.mxu0 0.0
        %1693 = vmatpush1.msra.mxu0 0.0
        %1694 = vmatprep.subr.mxu0 0.0
        %1695 = vmatpush1.msra.mxu0 0.0
        %1696 = vmatprep.subr.mxu0 0.0
        %1697 = vmatpush1.msra.mxu0 0.0
        %1698 = vmatprep.subr.mxu0 0.0
        %1699 = vmatpush1.msra.mxu0 0.0
        %1700 = vmatprep.subr.mxu0 0.0
        %1701 = vmatpush1.msra.mxu0 0.0
        %1702 = vmatprep.subr.mxu0 0.0
        %1703 = vmatpush1.msra.mxu0 0.0
        %1704 = vmatprep.subr.mxu0 0.0
        %1705 = vmatpush1.msra.mxu0 0.0
        %1706 = vmatprep.subr.mxu0 0.0
        %1707 = vmatpush1.msra.mxu0 0.0
        %1708 = vmatprep.subr.mxu0 0.0
        %1709 = vmatpush1.msra.mxu0 0.0
        %1710 = vmatprep.subr.mxu0 0.0
        %1711 = vmatpush1.msra.mxu0 0.0
        %1712 = vmatprep.subr.mxu0 0.0
        %1713 = vmatpush1.msra.mxu0 0.0
        %1714 = vmatprep.subr.mxu0 0.0
        %1715 = vmatpush1.msra.mxu0 0.0
        %1716 = vmatprep.subr.mxu0 0.0
        %1717 = vmatpush1.msra.mxu0 0.0
        %1718 = vmatprep.subr.mxu0 0.0
        %1719 = vmatpush1.msra.mxu0 0.0
        %1720 = vmatprep.subr.mxu0 0.0
        %1721 = vmatpush1.msra.mxu0 0.0
        %1722 = vmatprep.subr.mxu0 0.0
        %1723 = vmatpush1.msra.mxu0 0.0
        %1724 = vmatprep.subr.mxu0 0.0
        %1725 = vmatpush1.msra.mxu0 0.0
        %1726 = vmatprep.subr.mxu0 0.0
        %1727 = vmatpush1.msra.mxu0 0.0
        %1728 = vmatprep.subr.mxu0 0.0
        %1729 = vmatpush1.msra.mxu0 0.0
        %1730 = vmatprep.subr.mxu0 0.0
        %1731 = vmatpush1.msra.mxu0 0.0
        %1732 = vmatprep.subr.mxu0 0.0
        %1733 = vmatpush1.msra.mxu0 0.0
        %1734 = vmatprep.subr.mxu0 0.0
        %1735 = vmatpush1.msra.mxu0 0.0
        %1736 = vmatprep.subr.mxu0 0.0
        %1737 = vmatpush1.msra.mxu0 0.0
        %1738 = vmatprep.mubr.f32.mxu0 0.0
        %1739 = vmatmul.mubr.f32.gmra.mrb[0].mxu0 %v1672
        %v1740 = vpop.f32.mrb[0].mxu0
        %v1741 = vadd.f32 0.0, %v1740
        %v1742 = vpop.f32.mrb[0].mxu0
        %1743 = vdwg.mxu0
        %1745 = vrot.lane.b32.xlu0 %v1741, 120
        %v1746 = vpop.permute.xlu0 %1745
        %v1748 = vmax.f32 %v1741, %v1746
        %1749 = vrot.lane.b32.xlu0 %v1741, 112
        %v1750 = vpop.permute.xlu0 %1749
        %v1752 = vmax.f32 %v1748, %v1750
        %1753 = vrot.lane.b32.xlu0 %v1741, 104
        %v1754 = vpop.permute.xlu0 %1753
        %v1756 = vmax.f32 %v1752, %v1754
        %1757 = vrot.lane.b32.xlu0 %v1741, 96
        %v1758 = vpop.permute.xlu0 %1757
        %v1760 = vmax.f32 %v1756, %v1758
        %1761 = vrot.lane.b32.xlu0 %v1741, 88
        %v1762 = vpop.permute.xlu0 %1761
        %v1764 = vmax.f32 %v1760, %v1762
        %v1765 = vmul.f32 %v1670, %v1087
        %1766 = vmatprep.subr.mxu0 0.0
        %1767 = vmatpush1.msra.mxu0 %v1764
        %1768 = vmatprep.subr.mxu0 0.0
        %1769 = vmatpush1.msra.mxu0 0.0
        %1770 = vmatprep.subr.mxu0 0.0
        %1771 = vmatpush1.msra.mxu0 0.0
        %1772 = vmatprep.subr.mxu0 0.0
        %1773 = vmatpush1.msra.mxu0 0.0
        %1774 = vmatprep.subr.mxu0 0.0
        %1775 = vmatpush1.msra.mxu0 0.0
        %1776 = vmatprep.subr.mxu0 0.0
        %1777 = vmatpush1.msra.mxu0 0.0
        %1778 = vmatprep.subr.mxu0 0.0
        %1779 = vmatpush1.msra.mxu0 0.0
        %1780 = vmatprep.subr.mxu0 0.0
        %1781 = vmatpush1.msra.mxu0 0.0
        %1782 = vmatprep.subr.mxu0 0.0
        %1783 = vmatpush1.msra.mxu0 0.0
        %1784 = vmatprep.subr.mxu0 0.0
        %1785 = vmatpush1.msra.mxu0 0.0
        %1786 = vmatprep.subr.mxu0 0.0
        %1787 = vmatpush1.msra.mxu0 0.0
        %1788 = vmatprep.subr.mxu0 0.0
        %1789 = vmatpush1.msra.mxu0 0.0
        %1790 = vmatprep.subr.mxu0 0.0
        %1791 = vmatpush1.msra.mxu0 0.0
        %1792 = vmatprep.subr.mxu0 0.0
        %1793 = vmatpush1.msra.mxu0 0.0
        %1794 = vmatprep.subr.mxu0 0.0
        %1795 = vmatpush1.msra.mxu0 0.0
        %1796 = vmatprep.subr.mxu0 0.0
        %1797 = vmatpush1.msra.mxu0 0.0
        %1798 = vmatprep.subr.mxu0 0.0
        %1799 = vmatpush1.msra.mxu0 0.0
        %1800 = vmatprep.subr.mxu0 0.0
        %1801 = vmatpush1.msra.mxu0 0.0
        %1802 = vmatprep.subr.mxu0 0.0
        %1803 = vmatpush1.msra.mxu0 0.0
        %1804 = vmatprep.subr.mxu0 0.0
        %1805 = vmatpush1.msra.mxu0 0.0
        %1806 = vmatprep.subr.mxu0 0.0
        %1807 = vmatpush1.msra.mxu0 0.0
        %1808 = vmatprep.subr.mxu0 0.0
        %1809 = vmatpush1.msra.mxu0 0.0
        %1810 = vmatprep.subr.mxu0 0.0
        %1811 = vmatpush1.msra.mxu0 0.0
        %1812 = vmatprep.subr.mxu0 0.0
        %1813 = vmatpush1.msra.mxu0 0.0
        %1814 = vmatprep.subr.mxu0 0.0
        %1815 = vmatpush1.msra.mxu0 0.0
        %1816 = vmatprep.subr.mxu0 0.0
        %1817 = vmatpush1.msra.mxu0 0.0
        %1818 = vmatprep.subr.mxu0 0.0
        %1819 = vmatpush1.msra.mxu0 0.0
        %1820 = vmatprep.subr.mxu0 0.0
        %1821 = vmatpush1.msra.mxu0 0.0
        %1822 = vmatprep.subr.mxu0 0.0
        %1823 = vmatpush1.msra.mxu0 0.0
        %1824 = vmatprep.subr.mxu0 0.0
        %1825 = vmatpush1.msra.mxu0 0.0
        %1826 = vmatprep.subr.mxu0 0.0
        %1827 = vmatpush1.msra.mxu0 0.0
        %1828 = vmatprep.subr.mxu0 0.0
        %1829 = vmatpush1.msra.mxu0 0.0
        %1830 = vmatprep.mubr.f32.mxu0 0.0
        %1831 = vmatmul.mubr.f32.gmra.mrb[0].mxu0 %v1218
        %v1832 = vpop.f32.mrb[0].mxu0
        %v1833 = vadd.f32 0.0, %v1832
        %v1834 = vpop.f32.mrb[0].mxu0
        %1835 = vdwg.mxu0
        %v1836 = vadd.f32 %v1765, %v1833
        %v1837 = vmul.f32 %v1836, %v1836
        %v1838 = vsel %vm224, %v1837, 0.0
        %1839 = vadd.xlane.f32.xlu0 %v1838
        %v1840 = vpop.xlane.xlu0 %1839
        %v1841 = vrot.slane %v1840, 4
        %v1842 = vadd.f32 %v1840, %v1841
        %v1843 = vrot.slane %v1842, 2
        %v1844 = vadd.f32 %v1842, %v1843
        %v1845 = vrot.slane %v1844, 1
        %v1846 = vadd.f32 %v1844, %v1845
        %s1847 = vtos %v1846
        %v1848 = vstv %s1847
        %v1849 = vrsqrt.pop %v1848
        %s1850 = vtos %v1849
        %v1851 = vstv %s1850
        %v1852 = vmul.f32 %v1836, %v1851
        %v1854 = vsel %vm224, %v1852, 0
        %1856 = vmatprep.subr.mxu0 0.0
        %1857 = vmatpush1.msra.mxu0 %v1112
        %1858 = vmatprep.subr.mxu0 0.0
        %1859 = vmatpush1.msra.mxu0 0.0
        %1860 = vmatprep.subr.mxu0 0.0
        %1861 = vmatpush1.msra.mxu0 0.0
        %1862 = vmatprep.subr.mxu0 0.0
        %1863 = vmatpush1.msra.mxu0 0.0
        %1864 = vmatprep.subr.mxu0 0.0
        %1865 = vmatpush1.msra.mxu0 0.0
        %1866 = vmatprep.subr.mxu0 0.0
        %1867 = vmatpush1.msra.mxu0 0.0
        %1868 = vmatprep.subr.mxu0 0.0
        %1869 = vmatpush1.msra.mxu0 0.0
        %1870 = vmatprep.subr.mxu0 0.0
        %1871 = vmatpush1.msra.mxu0 0.0
        %1872 = vmatprep.subr.mxu0 0.0
        %1873 = vmatpush1.msra.mxu0 0.0
        %1874 = vmatprep.subr.mxu0 0.0
        %1875 = vmatpush1.msra.mxu0 0.0
        %1876 = vmatprep.subr.mxu0 0.0
        %1877 = vmatpush1.msra.mxu0 0.0
        %1878 = vmatprep.subr.mxu0 0.0
        %1879 = vmatpush1.msra.mxu0 0.0
        %1880 = vmatprep.subr.mxu0 0.0
        %1881 = vmatpush1.msra.mxu0 0.0
        %1882 = vmatprep.subr.mxu0 0.0
        %1883 = vmatpush1.msra.mxu0 0.0
        %1884 = vmatprep.subr.mxu0 0.0
        %1885 = vmatpush1.msra.mxu0 0.0
        %1886 = vmatprep.subr.mxu0 0.0
        %1887 = vmatpush1.msra.mxu0 0.0
        %1888 = vmatprep.subr.mxu0 0.0
        %1889 = vmatpush1.msra.mxu0 0.0
        %1890 = vmatprep.subr.mxu0 0.0
        %1891 = vmatpush1.msra.mxu0 0.0
        %1892 = vmatprep.subr.mxu0 0.0
        %1893 = vmatpush1.msra.mxu0 0.0
        %1894 = vmatprep.subr.mxu0 0.0
        %1895 = vmatpush1.msra.mxu0 0.0
        %1896 = vmatprep.subr.mxu0 0.0
        %1897 = vmatpush1.msra.mxu0 0.0
        %1898 = vmatprep.subr.mxu0 0.0
        %1899 = vmatpush1.msra.mxu0 0.0
        %1900 = vmatprep.subr.mxu0 0.0
        %1901 = vmatpush1.msra.mxu0 0.0
        %1902 = vmatprep.subr.mxu0 0.0
        %1903 = vmatpush1.msra.mxu0 0.0
        %1904 = vmatprep.subr.mxu0 0.0
        %1905 = vmatpush1.msra.mxu0 0.0
        %1906 = vmatprep.subr.mxu0 0.0
        %1907 = vmatpush1.msra.mxu0 0.0
        %1908 = vmatprep.subr.mxu0 0.0
        %1909 = vmatpush1.msra.mxu0 0.0
        %1910 = vmatprep.subr.mxu0 0.0
        %1911 = vmatpush1.msra.mxu0 0.0
        %1912 = vmatprep.subr.mxu0 0.0
        %1913 = vmatpush1.msra.mxu0 0.0
        %1914 = vmatprep.subr.mxu0 0.0
        %1915 = vmatpush1.msra.mxu0 0.0
        %1916 = vmatprep.subr.mxu0 0.0
        %1917 = vmatpush1.msra.mxu0 0.0
        %1918 = vmatprep.subr.mxu0 0.0
        %1919 = vmatpush1.msra.mxu0 0.0
        %1920 = vmatprep.mubr.f32.mxu0 0.0
        %1921 = vmatmul.mubr.f32.gmra.mrb[0].mxu0 %v1854
        %v1922 = vpop.f32.mrb[0].mxu0
        %v1923 = vadd.f32 0.0, %v1922
        %v1924 = vpop.f32.mrb[0].mxu0
        %1925 = vdwg.mxu0
        %1927 = vrot.lane.b32.xlu0 %v1923, 120
        %v1928 = vpop.permute.xlu0 %1927
        %v1930 = vmax.f32 %v1923, %v1928
        %1931 = vrot.lane.b32.xlu0 %v1923, 112
        %v1932 = vpop.permute.xlu0 %1931
        %v1934 = vmax.f32 %v1930, %v1932
        %1935 = vrot.lane.b32.xlu0 %v1923, 104
        %v1936 = vpop.permute.xlu0 %1935
        %v1938 = vmax.f32 %v1934, %v1936
        %1939 = vrot.lane.b32.xlu0 %v1923, 96
        %v1940 = vpop.permute.xlu0 %1939
        %v1942 = vmax.f32 %v1938, %v1940
        %1943 = vrot.lane.b32.xlu0 %v1923, 88
        %v1944 = vpop.permute.xlu0 %1943
        %v1946 = vmax.f32 %v1942, %v1944
        %v1947 = vmul.f32 %v1852, %v1087
        %1948 = vmatprep.subr.mxu0 0.0
        %1949 = vmatpush1.msra.mxu0 %v1946
        %1950 = vmatprep.subr.mxu0 0.0
        %1951 = vmatpush1.msra.mxu0 0.0
        %1952 = vmatprep.subr.mxu0 0.0
        %1953 = vmatpush1.msra.mxu0 0.0
        %1954 = vmatprep.subr.mxu0 0.0
        %1955 = vmatpush1.msra.mxu0 0.0
        %1956 = vmatprep.subr.mxu0 0.0
        %1957 = vmatpush1.msra.mxu0 0.0
        %1958 = vmatprep.subr.mxu0 0.0
        %1959 = vmatpush1.msra.mxu0 0.0
        %1960 = vmatprep.subr.mxu0 0.0
        %1961 = vmatpush1.msra.mxu0 0.0
        %1962 = vmatprep.subr.mxu0 0.0
        %1963 = vmatpush1.msra.mxu0 0.0
        %1964 = vmatprep.subr.mxu0 0.0
        %1965 = vmatpush1.msra.mxu0 0.0
        %1966 = vmatprep.subr.mxu0 0.0
        %1967 = vmatpush1.msra.mxu0 0.0
        %1968 = vmatprep.subr.mxu0 0.0
        %1969 = vmatpush1.msra.mxu0 0.0
        %1970 = vmatprep.subr.mxu0 0.0
        %1971 = vmatpush1.msra.mxu0 0.0
        %1972 = vmatprep.subr.mxu0 0.0
        %1973 = vmatpush1.msra.mxu0 0.0
        %1974 = vmatprep.subr.mxu0 0.0
        %1975 = vmatpush1.msra.mxu0 0.0
        %1976 = vmatprep.subr.mxu0 0.0
        %1977 = vmatpush1.msra.mxu0 0.0
        %1978 = vmatprep.subr.mxu0 0.0
        %1979 = vmatpush1.msra.mxu0 0.0
        %1980 = vmatprep.subr.mxu0 0.0
        %1981 = vmatpush1.msra.mxu0 0.0
        %1982 = vmatprep.subr.mxu0 0.0
        %1983 = vmatpush1.msra.mxu0 0.0
        %1984 = vmatprep.subr.mxu0 0.0
        %1985 = vmatpush1.msra.mxu0 0.0
        %1986 = vmatprep.subr.mxu0 0.0
        %1987 = vmatpush1.msra.mxu0 0.0
        %1988 = vmatprep.subr.mxu0 0.0
        %1989 = vmatpush1.msra.mxu0 0.0
        %1990 = vmatprep.subr.mxu0 0.0
        %1991 = vmatpush1.msra.mxu0 0.0
        %1992 = vmatprep.subr.mxu0 0.0
        %1993 = vmatpush1.msra.mxu0 0.0
        %1994 = vmatprep.subr.mxu0 0.0
        %1995 = vmatpush1.msra.mxu0 0.0
        %1996 = vmatprep.subr.mxu0 0.0
        %1997 = vmatpush1.msra.mxu0 0.0
        %1998 = vmatprep.subr.mxu0 0.0
        %1999 = vmatpush1.msra.mxu0 0.0
        %2000 = vmatprep.subr.mxu0 0.0
        %2001 = vmatpush1.msra.mxu0 0.0
        %2002 = vmatprep.subr.mxu0 0.0
        %2003 = vmatpush1.msra.mxu0 0.0
        %2004 = vmatprep.subr.mxu0 0.0
        %2005 = vmatpush1.msra.mxu0 0.0
        %2006 = vmatprep.subr.mxu0 0.0
        %2007 = vmatpush1.msra.mxu0 0.0
        %2008 = vmatprep.subr.mxu0 0.0
        %2009 = vmatpush1.msra.mxu0 0.0
        %2010 = vmatprep.subr.mxu0 0.0
        %2011 = vmatpush1.msra.mxu0 0.0
        %2012 = vmatprep.mubr.f32.mxu0 0.0
        %2013 = vmatmul.mubr.f32.gmra.mrb[0].mxu0 %v1218
        %v2014 = vpop.f32.mrb[0].mxu0
        %v2015 = vadd.f32 0.0, %v2014
        %v2016 = vpop.f32.mrb[0].mxu0
        %2017 = vdwg.mxu0
        %v2018 = vadd.f32 %v1947, %v2015
        %v2019 = vmul.f32 %v2018, %v2018
        %v2020 = vsel %vm224, %v2019, 0.0
        %2021 = vadd.xlane.f32.xlu0 %v2020
        %v2022 = vpop.xlane.xlu0 %2021
        %v2023 = vrot.slane %v2022, 4
        %v2024 = vadd.f32 %v2022, %v2023
        %v2025 = vrot.slane %v2024, 2
        %v2026 = vadd.f32 %v2024, %v2025
        %v2027 = vrot.slane %v2026, 1
        %v2028 = vadd.f32 %v2026, %v2027
        %s2029 = vtos %v2028
        %v2030 = vstv %s2029
        %v2031 = vrsqrt.pop %v2030
        %s2032 = vtos %v2031
        %v2033 = vstv %s2032
        %v2034 = vmul.f32 %v2018, %v2033
        %s2035 = sadd.s32 %s1115, 5
        %v2036 = vsub.f32 %v2034, %v1114
        %v2037 = vand.u32 2147483647, %v2036
        %v2038 = vsel %vm224, %v2037, -inf
        %2039 = vmax.xlane.f32.xlu0 %v2038
        %v2040 = vpop.xlane.xlu0 %2039
        %v2041 = vrot.slane %v2040, 4
        %v2042 = vmax.f32 %v2040, %v2041
        %v2043 = vrot.slane %v2042, 2
        %v2044 = vmax.f32 %v2042, %v2043
        %v2045 = vrot.slane %v2044, 1
        %v2046 = vmax.f32 %v2044, %v2045
        %s2047 = vtos %v2046
      $region41: #{forward.1} parent=35 // loop_footer
        _
      $region42: #{forward.1} parent=35 // loop_footer_branch
        %1113 = sbr.rel target = $region38
      $region43: #{forward.1} parent=35 // loop_exit
        _
      %2049 = vrot.lane.b32.xlu0 %v1114, 8
      %v2050 = vpop.permute.xlu0 %2049
      %2052 = vrot.lane.b32.xlu0 %v1114, 16
      %v2053 = vpop.permute.xlu0 %2052
      %2055 = vrot.lane.b32.xlu0 %v1114, 24
      %v2056 = vpop.permute.xlu0 %2055
      %2058 = vrot.lane.b32.xlu0 %v1114, 32
      %v2059 = vpop.permute.xlu0 %2058
      %2061 = vrot.lane.b32.xlu0 %v1114, 40
      %v2062 = vpop.permute.xlu0 %2061
      %2064 = vrot.lane.b32.xlu0 %v1114, 48
      %v2065 = vpop.permute.xlu0 %2064
      %2067 = vrot.lane.b32.xlu0 %v1114, 56
      %v2068 = vpop.permute.xlu0 %2067
      %v2070 = vsel %vm224, %v1114, %v2050
      %v2071 = vsel %vm804, %v2070, %v2053
      %v2072 = vsel %vm1108, %v2071, %v2056
      %v2073 = vsel %vm401, %v2072, %v2059
      %v2074 = vsel %vm962, %v2073, %v2062
      %vm2075 = vcmask 392192
      %v2076 = vsel %vm2075, %v2074, %v2065
      %vm2077 = vcmask 457728
      %v2078 = vsel %vm2077, %v2076, %v2068
      %v2079 = vmul.f32 %v2078, %v1089
      %vm2080 = vcmask 523264
      %v2081 = vsel %vm2080, %v2079, 0.0
      %v2082 = vrot.slane %v2081, 4
      %v2083 = vadd.f32 %v2081, %v2082
      %v2084 = vrot.slane %v2083, 2
      %v2085 = vadd.f32 %v2083, %v2084
      %v2086 = vrot.slane %v2085, 1
      %v2087 = vadd.f32 %v2085, %v2086
      %v2088 = vld [vmem:[%s1] sm:$0xff]
      %v2089 = vld [vmem:[%s1 + $0x8] sm:$0xff]
      %v2090 = vld [vmem:[%s1 + $0x10] sm:$0xff]
      %v2091 = vld [vmem:[%s1 + $0x18] sm:$0xff]
      %v2092 = vld [vmem:[%s1 + $0x20] sm:$0xff]
      %v2093 = vld [vmem:[%s1 + $0x28] sm:$0xff]
      %v2094 = vld [vmem:[%s1 + $0x30] sm:$0xff]
      %v2095 = vld [vmem:[%s1 + $0x38] sm:$0xff]
      %v2096 = vld [vmem:[%s1 + $0x40] sm:$0xff]
      %v2097 = vld [vmem:[%s1 + $0x48] sm:$0xff]
      %v2098 = vld [vmem:[%s1 + $0x50] sm:$0xff]
      %v2099 = vld [vmem:[%s1 + $0x58] sm:$0xff]
      %v2100 = vld [vmem:[%s1 + $0x60] sm:$0xff]
      %v2101 = vld [vmem:[%s1 + $0x68] sm:$0xff]
      %v2102 = vld [vmem:[%s1 + $0x70] sm:$0xff]
      %v2103 = vld [vmem:[%s1 + $0x78] sm:$0xff]
      %v2104 = vld [vmem:[%s1 + $0x80] sm:$0xff]
      %v2105 = vld [vmem:[%s1 + $0x88] sm:$0xff]
      %v2106 = vld [vmem:[%s1 + $0x90] sm:$0xff]
      %v2107 = vld [vmem:[%s1 + $0x98] sm:$0xff]
      %v2108 = vld [vmem:[%s1 + $0xa0] sm:$0xff]
      %v2109 = vld [vmem:[%s1 + $0xa8] sm:$0xff]
      %v2110 = vld [vmem:[%s1 + $0xb0] sm:$0xff]
      %v2111 = vld [vmem:[%s1 + $0xb8] sm:$0xff]
      %v2112 = vld [vmem:[%s1 + $0xc0] sm:$0xff]
      %v2113 = vld [vmem:[%s1 + $0xc8] sm:$0xff]
      %v2114 = vld [vmem:[%s1 + $0xd0] sm:$0xff]
      %v2115 = vld [vmem:[%s1 + $0xd8] sm:$0xff]
      %v2116 = vld [vmem:[%s1 + $0xe0] sm:$0xff]
      %v2117 = vld [vmem:[%s1 + $0xe8] sm:$0xff]
      %v2118 = vld [vmem:[%s1 + $0xf0] sm:$0xff]
      %v2119 = vld [vmem:[%s1 + $0xf8] sm:$0xff]
      %v2120 = vld [vmem:[%s1 + $0x100] sm:$0xff]
      %v2121 = vld [vmem:[%s1 + $0x108] sm:$0xff]
      %v2122 = vld [vmem:[%s1 + $0x110] sm:$0xff]
      %v2123 = vld [vmem:[%s1 + $0x118] sm:$0xff]
      %v2124 = vld [vmem:[%s1 + $0x120] sm:$0xff]
      %v2125 = vld [vmem:[%s1 + $0x128] sm:$0xff]
      %v2126 = vld [vmem:[%s1 + $0x130] sm:$0xff]
      %v2127 = vld [vmem:[%s1 + $0x138] sm:$0xff]
      %v2128 = vld [vmem:[%s1 + $0x140] sm:$0xff]
      %v2129 = vld [vmem:[%s1 + $0x148] sm:$0xff]
      %v2130 = vld [vmem:[%s1 + $0x150] sm:$0xff]
      %v2131 = vld [vmem:[%s1 + $0x158] sm:$0xff]
      %v2132 = vld [vmem:[%s1 + $0x160] sm:$0xff]
      %v2133 = vld [vmem:[%s1 + $0x168] sm:$0xff]
      %v2134 = vld [vmem:[%s1 + $0x170] sm:$0xff]
      %v2135 = vld [vmem:[%s1 + $0x178] sm:$0xff]
      %v2137 = vsel %vm2080, %v2087, 0
      %2139 = vmatprep.subr.mxu0 %v2089
      %2140 = vmatpush1.msra.mxu0 %v2088
      %2141 = vmatprep.subr.mxu0 %v2095
      %2142 = vmatpush1.msra.mxu0 %v2094
      %2143 = vmatprep.subr.mxu0 %v2101
      %2144 = vmatpush1.msra.mxu0 %v2100
      %2145 = vmatprep.subr.mxu0 %v2107
      %2146 = vmatpush1.msra.mxu0 %v2106
      %2147 = vmatprep.subr.mxu0 %v2113
      %2148 = vmatpush1.msra.mxu0 %v2112
      %2149 = vmatprep.subr.mxu0 %v2119
      %2150 = vmatpush1.msra.mxu0 %v2118
      %2151 = vmatprep.subr.mxu0 %v2125
      %2152 = vmatpush1.msra.mxu0 %v2124
      %2153 = vmatprep.subr.mxu0 %v2131
      %2154 = vmatpush1.msra.mxu0 %v2130
      %2155 = vmatprep.subr.mxu0 0.0
      %2156 = vmatpush1.msra.mxu0 0.0
      %2157 = vmatprep.subr.mxu0 0.0
      %2158 = vmatpush1.msra.mxu0 0.0
      %2159 = vmatprep.subr.mxu0 0.0
      %2160 = vmatpush1.msra.mxu0 0.0
      %2161 = vmatprep.subr.mxu0 0.0
      %2162 = vmatpush1.msra.mxu0 0.0
      %2163 = vmatprep.subr.mxu0 0.0
      %2164 = vmatpush1.msra.mxu0 0.0
      %2165 = vmatprep.subr.mxu0 0.0
      %2166 = vmatpush1.msra.mxu0 0.0
      %2167 = vmatprep.subr.mxu0 0.0
      %2168 = vmatpush1.msra.mxu0 0.0
      %2169 = vmatprep.subr.mxu0 0.0
      %2170 = vmatpush1.msra.mxu0 0.0
      %2171 = vmatprep.subr.mxu0 0.0
      %2172 = vmatpush1.msra.mxu0 0.0
      %2173 = vmatprep.subr.mxu0 0.0
      %2174 = vmatpush1.msra.mxu0 0.0
      %2175 = vmatprep.subr.mxu0 0.0
      %2176 = vmatpush1.msra.mxu0 0.0
      %2177 = vmatprep.subr.mxu0 0.0
      %2178 = vmatpush1.msra.mxu0 0.0
      %2179 = vmatprep.subr.mxu0 0.0
      %2180 = vmatpush1.msra.mxu0 0.0
      %2181 = vmatprep.subr.mxu0 0.0
      %2182 = vmatpush1.msra.mxu0 0.0
      %2183 = vmatprep.subr.mxu0 0.0
      %2184 = vmatpush1.msra.mxu0 0.0
      %2185 = vmatprep.subr.mxu0 0.0
      %2186 = vmatpush1.msra.mxu0 0.0
      %2187 = vmatprep.subr.mxu0 0.0
      %2188 = vmatpush1.msra.mxu0 0.0
      %2189 = vmatprep.subr.mxu0 0.0
      %2190 = vmatpush1.msra.mxu0 0.0
      %2191 = vmatprep.subr.mxu0 0.0
      %2192 = vmatpush1.msra.mxu0 0.0
      %2193 = vmatprep.subr.mxu0 0.0
      %2194 = vmatpush1.msra.mxu0 0.0
      %2195 = vmatprep.subr.mxu0 0.0
      %2196 = vmatpush1.msra.mxu0 0.0
      %2197 = vmatprep.subr.mxu0 0.0
      %2198 = vmatpush1.msra.mxu0 0.0
      %2199 = vmatprep.subr.mxu0 0.0
      %2200 = vmatpush1.msra.mxu0 0.0
      %2201 = vmatprep.subr.mxu0 0.0
      %2202 = vmatpush1.msra.mxu0 0.0
      %2203 = vmatprep.mubr.f32.mxu0 0.0
      %2204 = vmatmul.mubr.f32.gmra.mrb[0].mxu0 %v2137
      %v2205 = vpop.f32.mrb[0].mxu0
      %v2206 = vadd.f32 0.0, %v2205
      %v2207 = vpop.f32.mrb[0].mxu0
      %v2208 = vadd.f32 0.0, %v2207
      %2209 = vdwg.mxu0
      %2210 = vmatprep.subr.mxu0 %v2091
      %2211 = vmatpush1.msra.mxu0 %v2090
      %2212 = vmatprep.subr.mxu0 %v2097
      %2213 = vmatpush1.msra.mxu0 %v2096
      %2214 = vmatprep.subr.mxu0 %v2103
      %2215 = vmatpush1.msra.mxu0 %v2102
      %2216 = vmatprep.subr.mxu0 %v2109
      %2217 = vmatpush1.msra.mxu0 %v2108
      %2218 = vmatprep.subr.mxu0 %v2115
      %2219 = vmatpush1.msra.mxu0 %v2114
      %2220 = vmatprep.subr.mxu0 %v2121
      %2221 = vmatpush1.msra.mxu0 %v2120
      %2222 = vmatprep.subr.mxu0 %v2127
      %2223 = vmatpush1.msra.mxu0 %v2126
      %2224 = vmatprep.subr.mxu0 %v2133
      %2225 = vmatpush1.msra.mxu0 %v2132
      %2226 = vmatprep.subr.mxu0 0.0
      %2227 = vmatpush1.msra.mxu0 0.0
      %2228 = vmatprep.subr.mxu0 0.0
      %2229 = vmatpush1.msra.mxu0 0.0
      %2230 = vmatprep.subr.mxu0 0.0
      %2231 = vmatpush1.msra.mxu0 0.0
      %2232 = vmatprep.subr.mxu0 0.0
      %2233 = vmatpush1.msra.mxu0 0.0
      %2234 = vmatprep.subr.mxu0 0.0
      %2235 = vmatpush1.msra.mxu0 0.0
      %2236 = vmatprep.subr.mxu0 0.0
      %2237 = vmatpush1.msra.mxu0 0.0
      %2238 = vmatprep.subr.mxu0 0.0
      %2239 = vmatpush1.msra.mxu0 0.0
      %2240 = vmatprep.subr.mxu0 0.0
      %2241 = vmatpush1.msra.mxu0 0.0
      %2242 = vmatprep.subr.mxu0 0.0
      %2243 = vmatpush1.msra.mxu0 0.0
      %2244 = vmatprep.subr.mxu0 0.0
      %2245 = vmatpush1.msra.mxu0 0.0
      %2246 = vmatprep.subr.mxu0 0.0
      %2247 = vmatpush1.msra.mxu0 0.0
      %2248 = vmatprep.subr.mxu0 0.0
      %2249 = vmatpush1.msra.mxu0 0.0
      %2250 = vmatprep.subr.mxu0 0.0
      %2251 = vmatpush1.msra.mxu0 0.0
      %2252 = vmatprep.subr.mxu0 0.0
      %2253 = vmatpush1.msra.mxu0 0.0
      %2254 = vmatprep.subr.mxu0 0.0
      %2255 = vmatpush1.msra.mxu0 0.0
      %2256 = vmatprep.subr.mxu0 0.0
      %2257 = vmatpush1.msra.mxu0 0.0
      %2258 = vmatprep.subr.mxu0 0.0
      %2259 = vmatpush1.msra.mxu0 0.0
      %2260 = vmatprep.subr.mxu0 0.0
      %2261 = vmatpush1.msra.mxu0 0.0
      %2262 = vmatprep.subr.mxu0 0.0
      %2263 = vmatpush1.msra.mxu0 0.0
      %2264 = vmatprep.subr.mxu0 0.0
      %2265 = vmatpush1.msra.mxu0 0.0
      %2266 = vmatprep.subr.mxu0 0.0
      %2267 = vmatpush1.msra.mxu0 0.0
      %2268 = vmatprep.subr.mxu0 0.0
      %2269 = vmatpush1.msra.mxu0 0.0
      %2270 = vmatprep.subr.mxu0 0.0
      %2271 = vmatpush1.msra.mxu0 0.0
      %2272 = vmatprep.subr.mxu0 0.0
      %2273 = vmatpush1.msra.mxu0 0.0
      %2274 = vmatprep.mubr.f32.mxu0 0.0
      %2275 = vmatmul.mubr.f32.gmra.mrb[0].mxu0 %v2137
      %v2276 = vpop.f32.mrb[0].mxu0
      %v2277 = vadd.f32 0.0, %v2276
      %v2278 = vpop.f32.mrb[0].mxu0
      %v2279 = vadd.f32 0.0, %v2278
      %2280 = vdwg.mxu0
      %2281 = vmatprep.subr.mxu0 %v2093
      %2282 = vmatpush1.msra.mxu0 %v2092
      %2283 = vmatprep.subr.mxu0 %v2099
      %2284 = vmatpush1.msra.mxu0 %v2098
      %2285 = vmatprep.subr.mxu0 %v2105
      %2286 = vmatpush1.msra.mxu0 %v2104
      %2287 = vmatprep.subr.mxu0 %v2111
      %2288 = vmatpush1.msra.mxu0 %v2110
      %2289 = vmatprep.subr.mxu0 %v2117
      %2290 = vmatpush1.msra.mxu0 %v2116
      %2291 = vmatprep.subr.mxu0 %v2123
      %2292 = vmatpush1.msra.mxu0 %v2122
      %2293 = vmatprep.subr.mxu0 %v2129
      %2294 = vmatpush1.msra.mxu0 %v2128
      %2295 = vmatprep.subr.mxu0 %v2135
      %2296 = vmatpush1.msra.mxu0 %v2134
      %2297 = vmatprep.subr.mxu0 0.0
      %2298 = vmatpush1.msra.mxu0 0.0
      %2299 = vmatprep.subr.mxu0 0.0
      %2300 = vmatpush1.msra.mxu0 0.0
      %2301 = vmatprep.subr.mxu0 0.0
      %2302 = vmatpush1.msra.mxu0 0.0
      %2303 = vmatprep.subr.mxu0 0.0
      %2304 = vmatpush1.msra.mxu0 0.0
      %2305 = vmatprep.subr.mxu0 0.0
      %2306 = vmatpush1.msra.mxu0 0.0
      %2307 = vmatprep.subr.mxu0 0.0
      %2308 = vmatpush1.msra.mxu0 0.0
      %2309 = vmatprep.subr.mxu0 0.0
      %2310 = vmatpush1.msra.mxu0 0.0
      %2311 = vmatprep.subr.mxu0 0.0
      %2312 = vmatpush1.msra.mxu0 0.0
      %2313 = vmatprep.subr.mxu0 0.0
      %2314 = vmatpush1.msra.mxu0 0.0
      %2315 = vmatprep.subr.mxu0 0.0
      %2316 = vmatpush1.msra.mxu0 0.0
      %2317 = vmatprep.subr.mxu0 0.0
      %2318 = vmatpush1.msra.mxu0 0.0
      %2319 = vmatprep.subr.mxu0 0.0
      %2320 = vmatpush1.msra.mxu0 0.0
      %2321 = vmatprep.subr.mxu0 0.0
      %2322 = vmatpush1.msra.mxu0 0.0
      %2323 = vmatprep.subr.mxu0 0.0
      %2324 = vmatpush1.msra.mxu0 0.0
      %2325 = vmatprep.subr.mxu0 0.0
      %2326 = vmatpush1.msra.mxu0 0.0
      %2327 = vmatprep.subr.mxu0 0.0
      %2328 = vmatpush1.msra.mxu0 0.0
      %2329 = vmatprep.subr.mxu0 0.0
      %2330 = vmatpush1.msra.mxu0 0.0
      %2331 = vmatprep.subr.mxu0 0.0
      %2332 = vmatpush1.msra.mxu0 0.0
      %2333 = vmatprep.subr.mxu0 0.0
      %2334 = vmatpush1.msra.mxu0 0.0
      %2335 = vmatprep.subr.mxu0 0.0
      %2336 = vmatpush1.msra.mxu0 0.0
      %2337 = vmatprep.subr.mxu0 0.0
      %2338 = vmatpush1.msra.mxu0 0.0
      %2339 = vmatprep.subr.mxu0 0.0
      %2340 = vmatpush1.msra.mxu0 0.0
      %2341 = vmatprep.subr.mxu0 0.0
      %2342 = vmatpush1.msra.mxu0 0.0
      %2343 = vmatprep.subr.mxu0 0.0
      %2344 = vmatpush1.msra.mxu0 0.0
      %2345 = vmatprep.mubr.f32.mxu0 0.0
      %2346 = vmatmul.mubr.f32.gmra.mrb[0].mxu0 %v2137
      %v2347 = vpop.f32.mrb[0].mxu0
      %v2348 = vadd.f32 0.0, %v2347
      %v2349 = vpop.f32.mrb[0].mxu0
      %v2350 = vadd.f32 0.0, %v2349
      %2351 = vdwg.mxu0
      %v2352 = vadd.s32 %v196, 128
      %v2353 = vadd.s32 %v196, 256
      %v2354 = vadd.s32 %v196, 384
      %v2355 = vadd.s32 %v196, 512
      %v2356 = vadd.s32 %v196, 640
      %v2357 = vcvt.s32.f32 %v196
      %v2358 = vcvt.s32.f32 %v2352
      %v2359 = vcvt.s32.f32 %v2353
      %v2360 = vcvt.s32.f32 %v2354
      %v2361 = vcvt.s32.f32 %v2355
      %v2362 = vcvt.s32.f32 %v2356
      %vm2363 = vcmp.lt.f32.partialorder %v2357, 720.0
      %vm2364 = vcmp.lt.f32.partialorder %v2358, 720.0
      %vm2365 = vcmp.lt.f32.partialorder %v2359, 720.0
      %vm2366 = vcmp.lt.f32.partialorder %v2360, 720.0
      %vm2367 = vcmp.lt.f32.partialorder %v2361, 720.0
      %vm2368 = vcmp.lt.f32.partialorder %v2362, 720.0
      %v2369 = vsel %vm2363, %v2206, -1e+30
      %v2370 = vsel %vm2364, %v2208, -1e+30
      %v2371 = vsel %vm2365, %v2277, -1e+30
      %v2372 = vsel %vm2366, %v2279, -1e+30
      %v2373 = vsel %vm2367, %v2348, -1e+30
      %v2374 = vsel %vm2368, %v2350, -1e+30
      %vm2375 = vcmask 1040384
      %v2376 = vsel %vm2375, %v2369, -inf
      %v2377 = vsel %vm2375, %v2370, -inf
      %v2378 = vsel %vm2375, %v2371, -inf
      %v2379 = vsel %vm2375, %v2372, -inf
      %v2380 = vsel %vm2375, %v2373, -inf
      %v2381 = vmax.f32 %v2376, %v2380
      %v2382 = vsel %vm2375, %v2374, -inf
      %v2383 = vmax.f32 %v2377, %v2382
      %v2384 = vmax.f32 %v2381, %v2383
      %v2385 = vmax.f32 %v2378, %v2379
      %v2386 = vmax.f32 %v2384, %v2385
      %2387 = vmax.xlane.f32.xlu0 %v2386
      %v2388 = vpop.xlane.xlu0 %2387
      %vm2389 = vcmp.ge.f32.partialorder %v2369, %v2388
      %vm2390 = vcmp.ge.f32.partialorder %v2370, %v2388
      %vm2391 = vcmp.ge.f32.partialorder %v2371, %v2388
      %vm2392 = vcmp.ge.f32.partialorder %v2372, %v2388
      %vm2393 = vcmp.ge.f32.partialorder %v2373, %v2388
      %vm2394 = vcmp.ge.f32.partialorder %v2374, %v2388
      %v2395 = vsel %vm2389, %v2357, 768.0
      %v2396 = vsel %vm2390, %v2358, 768.0
      %v2397 = vsel %vm2391, %v2359, 768.0
      %v2398 = vsel %vm2392, %v2360, 768.0
      %v2399 = vsel %vm2393, %v2361, 768.0
      %v2400 = vsel %vm2394, %v2362, 768.0
      %v2401 = vsel %vm2375, %v2395, inf
      %v2402 = vsel %vm2375, %v2396, inf
      %v2403 = vsel %vm2375, %v2397, inf
      %v2404 = vsel %vm2375, %v2398, inf
      %v2405 = vsel %vm2375, %v2399, inf
      %v2406 = vmin.f32 %v2401, %v2405
      %v2407 = vsel %vm2375, %v2400, inf
      %v2408 = vmin.f32 %v2402, %v2407
      %v2409 = vmin.f32 %v2406, %v2408
      %v2410 = vmin.f32 %v2403, %v2404
      %v2411 = vmin.f32 %v2409, %v2410
      %2412 = vmin.xlane.f32.xlu0 %v2411
      %v2413 = vpop.xlane.xlu0 %2412
      %vm2414 = vcmp.eq.f32.partialorder %v2357, %v2413
      %vm2415 = vcmp.eq.f32.partialorder %v2358, %v2413
      %vm2416 = vcmp.eq.f32.partialorder %v2359, %v2413
      %vm2417 = vcmp.eq.f32.partialorder %v2360, %v2413
      %vm2418 = vcmp.eq.f32.partialorder %v2361, %v2413
      %vm2419 = vcmp.eq.f32.partialorder %v2362, %v2413
      %v2420 = vsel %vm2414, 1, 0
      %v2421 = vsel %vm2415, 1, 0
      %v2422 = vsel %vm2416, 1, 0
      %v2423 = vsel %vm2417, 1, 0
      %v2424 = vsel %vm2418, 1, 0
      %v2425 = vsel %vm2419, 1, 0
      %v2426 = vcvt.s32.f32 %v2420
      %v2427 = vcvt.s32.f32 %v2421
      %v2428 = vcvt.s32.f32 %v2422
      %v2429 = vcvt.s32.f32 %v2423
      %v2430 = vcvt.s32.f32 %v2424
      %v2431 = vcvt.s32.f32 %v2425
      %v2432 = vld [vmem:[%s2] sm:$0xff]
      %v2433 = vld [vmem:[%s2 + $0x8] sm:$0xff]
      %v2434 = vld [vmem:[%s2 + $0x10] sm:$0xff]
      %v2435 = vld [vmem:[%s2 + $0x18] sm:$0xff]
      %v2436 = vld [vmem:[%s2 + $0x20] sm:$0xff]
      %v2437 = vld [vmem:[%s2 + $0x28] sm:$0xff]
      %v2438 = vld [vmem:[%s2 + $0x30] sm:$0xff]
      %v2439 = vld [vmem:[%s2 + $0x38] sm:$0xff]
      %v2440 = vld [vmem:[%s2 + $0x40] sm:$0xff]
      %v2441 = vld [vmem:[%s2 + $0x48] sm:$0xff]
      %v2442 = vld [vmem:[%s2 + $0x50] sm:$0xff]
      %v2443 = vld [vmem:[%s2 + $0x58] sm:$0xff]
      %v2444 = vld [vmem:[%s2 + $0x60] sm:$0xff]
      %v2445 = vld [vmem:[%s2 + $0x68] sm:$0xff]
      %v2446 = vld [vmem:[%s2 + $0x70] sm:$0xff]
      %v2447 = vld [vmem:[%s2 + $0x78] sm:$0xff]
      %v2448 = vld [vmem:[%s2 + $0x80] sm:$0xff]
      %v2449 = vld [vmem:[%s2 + $0x88] sm:$0xff]
      %v2450 = vld [vmem:[%s2 + $0x90] sm:$0xff]
      %v2451 = vld [vmem:[%s2 + $0x98] sm:$0xff]
      %v2452 = vld [vmem:[%s2 + $0xa0] sm:$0xff]
      %v2453 = vld [vmem:[%s2 + $0xa8] sm:$0xff]
      %v2454 = vld [vmem:[%s2 + $0xb0] sm:$0xff]
      %v2455 = vld [vmem:[%s2 + $0xb8] sm:$0xff]
      %v2456 = vld [vmem:[%s2 + $0xc0] sm:$0xff]
      %v2457 = vld [vmem:[%s2 + $0xc8] sm:$0xff]
      %v2458 = vld [vmem:[%s2 + $0xd0] sm:$0xff]
      %v2459 = vld [vmem:[%s2 + $0xd8] sm:$0xff]
      %v2460 = vld [vmem:[%s2 + $0xe0] sm:$0xff]
      %v2461 = vld [vmem:[%s2 + $0xe8] sm:$0xff]
      %v2462 = vld [vmem:[%s2 + $0xf0] sm:$0xff]
      %v2463 = vld [vmem:[%s2 + $0xf8] sm:$0xff]
      %v2464 = vld [vmem:[%s2 + $0x100] sm:$0xff]
      %v2465 = vld [vmem:[%s2 + $0x108] sm:$0xff]
      %v2466 = vld [vmem:[%s2 + $0x110] sm:$0xff]
      %v2467 = vld [vmem:[%s2 + $0x118] sm:$0xff]
      %v2468 = vld [vmem:[%s2 + $0x120] sm:$0xff]
      %v2469 = vld [vmem:[%s2 + $0x128] sm:$0xff]
      %v2470 = vld [vmem:[%s2 + $0x130] sm:$0xff]
      %v2471 = vld [vmem:[%s2 + $0x138] sm:$0xff]
      %v2472 = vld [vmem:[%s2 + $0x140] sm:$0xff]
      %v2473 = vld [vmem:[%s2 + $0x148] sm:$0xff]
      %v2474 = vld [vmem:[%s2 + $0x150] sm:$0xff]
      %v2475 = vld [vmem:[%s2 + $0x158] sm:$0xff]
      %v2476 = vld [vmem:[%s2 + $0x160] sm:$0xff]
      %v2477 = vld [vmem:[%s2 + $0x168] sm:$0xff]
      %v2478 = vld [vmem:[%s2 + $0x170] sm:$0xff]
      %v2479 = vld [vmem:[%s2 + $0x178] sm:$0xff]
      %v2480 = vld [vmem:[%s2 + $0x180] sm:$0xff]
      %v2481 = vld [vmem:[%s2 + $0x188] sm:$0xff]
      %v2482 = vld [vmem:[%s2 + $0x190] sm:$0xff]
      %v2483 = vld [vmem:[%s2 + $0x198] sm:$0xff]
      %v2484 = vld [vmem:[%s2 + $0x1a0] sm:$0xff]
      %v2485 = vld [vmem:[%s2 + $0x1a8] sm:$0xff]
      %v2486 = vld [vmem:[%s2 + $0x1b0] sm:$0xff]
      %v2487 = vld [vmem:[%s2 + $0x1b8] sm:$0xff]
      %v2488 = vld [vmem:[%s2 + $0x1c0] sm:$0xff]
      %v2489 = vld [vmem:[%s2 + $0x1c8] sm:$0xff]
      %v2490 = vld [vmem:[%s2 + $0x1d0] sm:$0xff]
      %v2491 = vld [vmem:[%s2 + $0x1d8] sm:$0xff]
      %v2492 = vld [vmem:[%s2 + $0x1e0] sm:$0xff]
      %v2493 = vld [vmem:[%s2 + $0x1e8] sm:$0xff]
      %v2494 = vld [vmem:[%s2 + $0x1f0] sm:$0xff]
      %v2495 = vld [vmem:[%s2 + $0x1f8] sm:$0xff]
      %v2496 = vld [vmem:[%s2 + $0x200] sm:$0xff]
      %v2497 = vld [vmem:[%s2 + $0x208] sm:$0xff]
      %v2498 = vld [vmem:[%s2 + $0x210] sm:$0xff]
      %v2499 = vld [vmem:[%s2 + $0x218] sm:$0xff]
      %v2500 = vld [vmem:[%s2 + $0x220] sm:$0xff]
      %v2501 = vld [vmem:[%s2 + $0x228] sm:$0xff]
      %v2502 = vld [vmem:[%s2 + $0x230] sm:$0xff]
      %v2503 = vld [vmem:[%s2 + $0x238] sm:$0xff]
      %v2504 = vld [vmem:[%s2 + $0x240] sm:$0xff]
      %v2505 = vld [vmem:[%s2 + $0x248] sm:$0xff]
      %v2506 = vld [vmem:[%s2 + $0x250] sm:$0xff]
      %v2507 = vld [vmem:[%s2 + $0x258] sm:$0xff]
      %v2508 = vld [vmem:[%s2 + $0x260] sm:$0xff]
      %v2509 = vld [vmem:[%s2 + $0x268] sm:$0xff]
      %v2510 = vld [vmem:[%s2 + $0x270] sm:$0xff]
      %v2511 = vld [vmem:[%s2 + $0x278] sm:$0xff]
      %v2512 = vld [vmem:[%s2 + $0x280] sm:$0xff]
      %v2513 = vld [vmem:[%s2 + $0x288] sm:$0xff]
      %v2514 = vld [vmem:[%s2 + $0x290] sm:$0xff]
      %v2515 = vld [vmem:[%s2 + $0x298] sm:$0xff]
      %v2516 = vld [vmem:[%s2 + $0x2a0] sm:$0xff]
      %v2517 = vld [vmem:[%s2 + $0x2a8] sm:$0xff]
      %v2518 = vld [vmem:[%s2 + $0x2b0] sm:$0xff]
      %v2519 = vld [vmem:[%s2 + $0x2b8] sm:$0xff]
      %v2520 = vld [vmem:[%s2 + $0x2c0] sm:$0xff]
      %v2521 = vld [vmem:[%s2 + $0x2c8] sm:$0xff]
      %v2522 = vld [vmem:[%s2 + $0x2d0] sm:$0xff]
      %v2523 = vld [vmem:[%s2 + $0x2d8] sm:$0xff]
      %v2524 = vld [vmem:[%s2 + $0x2e0] sm:$0xff]
      %v2525 = vld [vmem:[%s2 + $0x2e8] sm:$0xff]
      %v2526 = vld [vmem:[%s2 + $0x2f0] sm:$0xff]
      %v2527 = vld [vmem:[%s2 + $0x2f8] sm:$0xff]
      %2528 = vmatprep.subr.mxu0 0.0
      %2529 = vmatpush1.msra.mxu0 %v2432
      %2530 = vmatprep.subr.mxu0 0.0
      %2531 = vmatpush1.msra.mxu0 %v2433
      %2532 = vmatprep.subr.mxu0 0.0
      %2533 = vmatpush1.msra.mxu0 %v2434
      %2534 = vmatprep.subr.mxu0 0.0
      %2535 = vmatpush1.msra.mxu0 %v2435
      %2536 = vmatprep.subr.mxu0 0.0
      %2537 = vmatpush1.msra.mxu0 %v2436
      %2538 = vmatprep.subr.mxu0 0.0
      %2539 = vmatpush1.msra.mxu0 %v2437
      %2540 = vmatprep.subr.mxu0 0.0
      %2541 = vmatpush1.msra.mxu0 %v2438
      %2542 = vmatprep.subr.mxu0 0.0
      %2543 = vmatpush1.msra.mxu0 %v2439
      %2544 = vmatprep.subr.mxu0 0.0
      %2545 = vmatpush1.msra.mxu0 %v2440
      %2546 = vmatprep.subr.mxu0 0.0
      %2547 = vmatpush1.msra.mxu0 %v2441
      %2548 = vmatprep.subr.mxu0 0.0
      %2549 = vmatpush1.msra.mxu0 %v2442
      %2550 = vmatprep.subr.mxu0 0.0
      %2551 = vmatpush1.msra.mxu0 %v2443
      %2552 = vmatprep.subr.mxu0 0.0
      %2553 = vmatpush1.msra.mxu0 %v2444
      %2554 = vmatprep.subr.mxu0 0.0
      %2555 = vmatpush1.msra.mxu0 %v2445
      %2556 = vmatprep.subr.mxu0 0.0
      %2557 = vmatpush1.msra.mxu0 %v2446
      %2558 = vmatprep.subr.mxu0 0.0
      %2559 = vmatpush1.msra.mxu0 %v2447
      %2560 = vmatprep.subr.mxu0 0.0
      %2561 = vmatpush1.msra.mxu0 %v2448
      %2562 = vmatprep.subr.mxu0 0.0
      %2563 = vmatpush1.msra.mxu0 %v2449
      %2564 = vmatprep.subr.mxu0 0.0
      %2565 = vmatpush1.msra.mxu0 %v2450
      %2566 = vmatprep.subr.mxu0 0.0
      %2567 = vmatpush1.msra.mxu0 %v2451
      %2568 = vmatprep.subr.mxu0 0.0
      %2569 = vmatpush1.msra.mxu0 %v2452
      %2570 = vmatprep.subr.mxu0 0.0
      %2571 = vmatpush1.msra.mxu0 %v2453
      %2572 = vmatprep.subr.mxu0 0.0
      %2573 = vmatpush1.msra.mxu0 %v2454
      %2574 = vmatprep.subr.mxu0 0.0
      %2575 = vmatpush1.msra.mxu0 %v2455
      %2576 = vmatprep.subr.mxu0 0.0
      %2577 = vmatpush1.msra.mxu0 %v2456
      %2578 = vmatprep.subr.mxu0 0.0
      %2579 = vmatpush1.msra.mxu0 %v2457
      %2580 = vmatprep.subr.mxu0 0.0
      %2581 = vmatpush1.msra.mxu0 %v2458
      %2582 = vmatprep.subr.mxu0 0.0
      %2583 = vmatpush1.msra.mxu0 %v2459
      %2584 = vmatprep.subr.mxu0 0.0
      %2585 = vmatpush1.msra.mxu0 %v2460
      %2586 = vmatprep.subr.mxu0 0.0
      %2587 = vmatpush1.msra.mxu0 %v2461
      %2588 = vmatprep.subr.mxu0 0.0
      %2589 = vmatpush1.msra.mxu0 %v2462
      %2590 = vmatprep.subr.mxu0 0.0
      %2591 = vmatpush1.msra.mxu0 %v2463
      %2592 = vmatprep.mubr.f32.mxu0 %v2427
      %2593 = vmatmul.mubr.f32.gmra.mrb[0].mxu0 %v2426
      %v2594 = vpop.f32.mrb[0].mxu0
      %v2595 = vadd.f32 0.0, %v2594
      %v2596 = vpop.f32.mrb[0].mxu0
      %2597 = vdwg.mxu0
      %2598 = vmatprep.subr.mxu0 0.0
      %2599 = vmatpush1.msra.mxu0 %v2464
      %2600 = vmatprep.subr.mxu0 0.0
      %2601 = vmatpush1.msra.mxu0 %v2465
      %2602 = vmatprep.subr.mxu0 0.0
      %2603 = vmatpush1.msra.mxu0 %v2466
      %2604 = vmatprep.subr.mxu0 0.0
      %2605 = vmatpush1.msra.mxu0 %v2467
      %2606 = vmatprep.subr.mxu0 0.0
      %2607 = vmatpush1.msra.mxu0 %v2468
      %2608 = vmatprep.subr.mxu0 0.0
      %2609 = vmatpush1.msra.mxu0 %v2469
      %2610 = vmatprep.subr.mxu0 0.0
      %2611 = vmatpush1.msra.mxu0 %v2470
      %2612 = vmatprep.subr.mxu0 0.0
      %2613 = vmatpush1.msra.mxu0 %v2471
      %2614 = vmatprep.subr.mxu0 0.0
      %2615 = vmatpush1.msra.mxu0 %v2472
      %2616 = vmatprep.subr.mxu0 0.0
      %2617 = vmatpush1.msra.mxu0 %v2473
      %2618 = vmatprep.subr.mxu0 0.0
      %2619 = vmatpush1.msra.mxu0 %v2474
      %2620 = vmatprep.subr.mxu0 0.0
      %2621 = vmatpush1.msra.mxu0 %v2475
      %2622 = vmatprep.subr.mxu0 0.0
      %2623 = vmatpush1.msra.mxu0 %v2476
      %2624 = vmatprep.subr.mxu0 0.0
      %2625 = vmatpush1.msra.mxu0 %v2477
      %2626 = vmatprep.subr.mxu0 0.0
      %2627 = vmatpush1.msra.mxu0 %v2478
      %2628 = vmatprep.subr.mxu0 0.0
      %2629 = vmatpush1.msra.mxu0 %v2479
      %2630 = vmatprep.subr.mxu0 0.0
      %2631 = vmatpush1.msra.mxu0 %v2480
      %2632 = vmatprep.subr.mxu0 0.0
      %2633 = vmatpush1.msra.mxu0 %v2481
      %2634 = vmatprep.subr.mxu0 0.0
      %2635 = vmatpush1.msra.mxu0 %v2482
      %2636 = vmatprep.subr.mxu0 0.0
      %2637 = vmatpush1.msra.mxu0 %v2483
      %2638 = vmatprep.subr.mxu0 0.0
      %2639 = vmatpush1.msra.mxu0 %v2484
      %2640 = vmatprep.subr.mxu0 0.0
      %2641 = vmatpush1.msra.mxu0 %v2485
      %2642 = vmatprep.subr.mxu0 0.0
      %2643 = vmatpush1.msra.mxu0 %v2486
      %2644 = vmatprep.subr.mxu0 0.0
      %2645 = vmatpush1.msra.mxu0 %v2487
      %2646 = vmatprep.subr.mxu0 0.0
      %2647 = vmatpush1.msra.mxu0 %v2488
      %2648 = vmatprep.subr.mxu0 0.0
      %2649 = vmatpush1.msra.mxu0 %v2489
      %2650 = vmatprep.subr.mxu0 0.0
      %2651 = vmatpush1.msra.mxu0 %v2490
      %2652 = vmatprep.subr.mxu0 0.0
      %2653 = vmatpush1.msra.mxu0 %v2491
      %2654 = vmatprep.subr.mxu0 0.0
      %2655 = vmatpush1.msra.mxu0 %v2492
      %2656 = vmatprep.subr.mxu0 0.0
      %2657 = vmatpush1.msra.mxu0 %v2493
      %2658 = vmatprep.subr.mxu0 0.0
      %2659 = vmatpush1.msra.mxu0 %v2494
      %2660 = vmatprep.subr.mxu0 0.0
      %2661 = vmatpush1.msra.mxu0 %v2495
      %2662 = vmatprep.mubr.f32.mxu0 %v2429
      %2663 = vmatmul.mubr.f32.gmra.mrb[0].mxu0 %v2428
      %v2664 = vpop.f32.mrb[0].mxu0
      %v2665 = vadd.f32 %v2595, %v2664
      %v2666 = vpop.f32.mrb[0].mxu0
      %2667 = vdwg.mxu0
      %2668 = vmatprep.subr.mxu0 0.0
      %2669 = vmatpush1.msra.mxu0 %v2496
      %2670 = vmatprep.subr.mxu0 0.0
      %2671 = vmatpush1.msra.mxu0 %v2497
      %2672 = vmatprep.subr.mxu0 0.0
      %2673 = vmatpush1.msra.mxu0 %v2498
      %2674 = vmatprep.subr.mxu0 0.0
      %2675 = vmatpush1.msra.mxu0 %v2499
      %2676 = vmatprep.subr.mxu0 0.0
      %2677 = vmatpush1.msra.mxu0 %v2500
      %2678 = vmatprep.subr.mxu0 0.0
      %2679 = vmatpush1.msra.mxu0 %v2501
      %2680 = vmatprep.subr.mxu0 0.0
      %2681 = vmatpush1.msra.mxu0 %v2502
      %2682 = vmatprep.subr.mxu0 0.0
      %2683 = vmatpush1.msra.mxu0 %v2503
      %2684 = vmatprep.subr.mxu0 0.0
      %2685 = vmatpush1.msra.mxu0 %v2504
      %2686 = vmatprep.subr.mxu0 0.0
      %2687 = vmatpush1.msra.mxu0 %v2505
      %2688 = vmatprep.subr.mxu0 0.0
      %2689 = vmatpush1.msra.mxu0 %v2506
      %2690 = vmatprep.subr.mxu0 0.0
      %2691 = vmatpush1.msra.mxu0 %v2507
      %2692 = vmatprep.subr.mxu0 0.0
      %2693 = vmatpush1.msra.mxu0 %v2508
      %2694 = vmatprep.subr.mxu0 0.0
      %2695 = vmatpush1.msra.mxu0 %v2509
      %2696 = vmatprep.subr.mxu0 0.0
      %2697 = vmatpush1.msra.mxu0 %v2510
      %2698 = vmatprep.subr.mxu0 0.0
      %2699 = vmatpush1.msra.mxu0 %v2511
      %2700 = vmatprep.subr.mxu0 0.0
      %2701 = vmatpush1.msra.mxu0 %v2512
      %2702 = vmatprep.subr.mxu0 0.0
      %2703 = vmatpush1.msra.mxu0 %v2513
      %2704 = vmatprep.subr.mxu0 0.0
      %2705 = vmatpush1.msra.mxu0 %v2514
      %2706 = vmatprep.subr.mxu0 0.0
      %2707 = vmatpush1.msra.mxu0 %v2515
      %2708 = vmatprep.subr.mxu0 0.0
      %2709 = vmatpush1.msra.mxu0 %v2516
      %2710 = vmatprep.subr.mxu0 0.0
      %2711 = vmatpush1.msra.mxu0 %v2517
      %2712 = vmatprep.subr.mxu0 0.0
      %2713 = vmatpush1.msra.mxu0 %v2518
      %2714 = vmatprep.subr.mxu0 0.0
      %2715 = vmatpush1.msra.mxu0 %v2519
      %2716 = vmatprep.subr.mxu0 0.0
      %2717 = vmatpush1.msra.mxu0 %v2520
      %2718 = vmatprep.subr.mxu0 0.0
      %2719 = vmatpush1.msra.mxu0 %v2521
      %2720 = vmatprep.subr.mxu0 0.0
      %2721 = vmatpush1.msra.mxu0 %v2522
      %2722 = vmatprep.subr.mxu0 0.0
      %2723 = vmatpush1.msra.mxu0 %v2523
      %2724 = vmatprep.subr.mxu0 0.0
      %2725 = vmatpush1.msra.mxu0 %v2524
      %2726 = vmatprep.subr.mxu0 0.0
      %2727 = vmatpush1.msra.mxu0 %v2525
      %2728 = vmatprep.subr.mxu0 0.0
      %2729 = vmatpush1.msra.mxu0 %v2526
      %2730 = vmatprep.subr.mxu0 0.0
      %2731 = vmatpush1.msra.mxu0 %v2527
      %2732 = vmatprep.mubr.f32.mxu0 %v2431
      %2733 = vmatmul.mubr.f32.gmra.mrb[0].mxu0 %v2430
      %v2734 = vpop.f32.mrb[0].mxu0
      %v2735 = vadd.f32 %v2665, %v2734
      %v2736 = vpop.f32.mrb[0].mxu0
      %2737 = vdwg.mxu0
      %v2738 = vlaneseq
      %v2739 = vshrl.u32 %v2738, 7
      %v2740 = vsub.s32 0, %v2739
      %v2741 = vrot.slane %v2735, %v2740
      %v2742 = vmul.f32 %v1089, %v2741
      %v2743 = vld [vmem:[%s0 + $0x190] sm:$0xff]
      %v2744 = vld [vmem:[%s0 + $0x198] sm:$0xff]
      %v2745 = vld [vmem:[%s0 + $0x1a0] sm:$0xff]
      %v2746 = vld [vmem:[%s0 + $0x1a8] sm:$0xff]
      %v2747 = vld [vmem:[%s0 + $0x1b0] sm:$0xff]
      %v2748 = vld [vmem:[%s0 + $0x1b8] sm:$0xff]
      %v2749 = vld [vmem:[%s0 + $0x1c0] sm:$0xff]
      %v2750 = vld [vmem:[%s0 + $0x1c8] sm:$0xff]
      %v2752 = vsel %vm2080, %v2742, 0
      %2754 = vmatprep.subr.mxu0 0.0
      %2755 = vmatpush1.msra.mxu0 %v2743
      %2756 = vmatprep.subr.mxu0 0.0
      %2757 = vmatpush1.msra.mxu0 %v2744
      %2758 = vmatprep.subr.mxu0 0.0
      %2759 = vmatpush1.msra.mxu0 %v2745
      %2760 = vmatprep.subr.mxu0 0.0
      %2761 = vmatpush1.msra.mxu0 %v2746
      %2762 = vmatprep.subr.mxu0 0.0
      %2763 = vmatpush1.msra.mxu0 %v2747
      %2764 = vmatprep.subr.mxu0 0.0
      %2765 = vmatpush1.msra.mxu0 %v2748
      %2766 = vmatprep.subr.mxu0 0.0
      %2767 = vmatpush1.msra.mxu0 %v2749
      %2768 = vmatprep.subr.mxu0 0.0
      %2769 = vmatpush1.msra.mxu0 %v2750
      %2770 = vmatprep.subr.mxu0 0.0
      %2771 = vmatpush1.msra.mxu0 0.0
      %2772 = vmatprep.subr.mxu0 0.0
      %2773 = vmatpush1.msra.mxu0 0.0
      %2774 = vmatprep.subr.mxu0 0.0
      %2775 = vmatpush1.msra.mxu0 0.0
      %2776 = vmatprep.subr.mxu0 0.0
      %2777 = vmatpush1.msra.mxu0 0.0
      %2778 = vmatprep.subr.mxu0 0.0
      %2779 = vmatpush1.msra.mxu0 0.0
      %2780 = vmatprep.subr.mxu0 0.0
      %2781 = vmatpush1.msra.mxu0 0.0
      %2782 = vmatprep.subr.mxu0 0.0
      %2783 = vmatpush1.msra.mxu0 0.0
      %2784 = vmatprep.subr.mxu0 0.0
      %2785 = vmatpush1.msra.mxu0 0.0
      %2786 = vmatprep.subr.mxu0 0.0
      %2787 = vmatpush1.msra.mxu0 0.0
      %2788 = vmatprep.subr.mxu0 0.0
      %2789 = vmatpush1.msra.mxu0 0.0
      %2790 = vmatprep.subr.mxu0 0.0
      %2791 = vmatpush1.msra.mxu0 0.0
      %2792 = vmatprep.subr.mxu0 0.0
      %2793 = vmatpush1.msra.mxu0 0.0
      %2794 = vmatprep.subr.mxu0 0.0
      %2795 = vmatpush1.msra.mxu0 0.0
      %2796 = vmatprep.subr.mxu0 0.0
      %2797 = vmatpush1.msra.mxu0 0.0
      %2798 = vmatprep.subr.mxu0 0.0
      %2799 = vmatpush1.msra.mxu0 0.0
      %2800 = vmatprep.subr.mxu0 0.0
      %2801 = vmatpush1.msra.mxu0 0.0
      %2802 = vmatprep.subr.mxu0 0.0
      %2803 = vmatpush1.msra.mxu0 0.0
      %2804 = vmatprep.subr.mxu0 0.0
      %2805 = vmatpush1.msra.mxu0 0.0
      %2806 = vmatprep.subr.mxu0 0.0
      %2807 = vmatpush1.msra.mxu0 0.0
      %2808 = vmatprep.subr.mxu0 0.0
      %2809 = vmatpush1.msra.mxu0 0.0
      %2810 = vmatprep.subr.mxu0 0.0
      %2811 = vmatpush1.msra.mxu0 0.0
      %2812 = vmatprep.subr.mxu0 0.0
      %2813 = vmatpush1.msra.mxu0 0.0
      %2814 = vmatprep.subr.mxu0 0.0
      %2815 = vmatpush1.msra.mxu0 0.0
      %2816 = vmatprep.subr.mxu0 0.0
      %2817 = vmatpush1.msra.mxu0 0.0
      %2818 = vmatprep.mubr.f32.mxu0 0.0
      %2819 = vmatmul.mubr.f32.gmra.mrb[0].mxu0 %v2752
      %v2820 = vpop.f32.mrb[0].mxu0
      %v2821 = vadd.f32 0.0, %v2820
      %v2822 = vpop.f32.mrb[0].mxu0
      %2823 = vdwg.mxu0
      %v2824 = vld [vmem:[%s0 + $0x188] sm:$0xff]
      %v2825 = vmul.f32 %v2824, %v2741
      %v2826 = vld [vmem:[%s0 + $0x148] sm:$0xff]
      %v2827 = vld [vmem:[%s0 + $0x150] sm:$0xff]
      %v2828 = vld [vmem:[%s0 + $0x158] sm:$0xff]
      %v2829 = vld [vmem:[%s0 + $0x160] sm:$0xff]
      %v2830 = vld [vmem:[%s0 + $0x168] sm:$0xff]
      %v2831 = vld [vmem:[%s0 + $0x170] sm:$0xff]
      %v2832 = vld [vmem:[%s0 + $0x178] sm:$0xff]
      %v2833 = vld [vmem:[%s0 + $0x180] sm:$0xff]
      %v2835 = vsel %vm2080, %v2825, 0
      %2837 = vmatprep.subr.mxu0 0.0
      %2838 = vmatpush1.msra.mxu0 %v2826
      %2839 = vmatprep.subr.mxu0 0.0
      %2840 = vmatpush1.msra.mxu0 %v2827
      %2841 = vmatprep.subr.mxu0 0.0
      %2842 = vmatpush1.msra.mxu0 %v2828
      %2843 = vmatprep.subr.mxu0 0.0
      %2844 = vmatpush1.msra.mxu0 %v2829
      %2845 = vmatprep.subr.mxu0 0.0
      %2846 = vmatpush1.msra.mxu0 %v2830
      %2847 = vmatprep.subr.mxu0 0.0
      %2848 = vmatpush1.msra.mxu0 %v2831
      %2849 = vmatprep.subr.mxu0 0.0
      %2850 = vmatpush1.msra.mxu0 %v2832
      %2851 = vmatprep.subr.mxu0 0.0
      %2852 = vmatpush1.msra.mxu0 %v2833
      %2853 = vmatprep.subr.mxu0 0.0
      %2854 = vmatpush1.msra.mxu0 0.0
      %2855 = vmatprep.subr.mxu0 0.0
      %2856 = vmatpush1.msra.mxu0 0.0
      %2857 = vmatprep.subr.mxu0 0.0
      %2858 = vmatpush1.msra.mxu0 0.0
      %2859 = vmatprep.subr.mxu0 0.0
      %2860 = vmatpush1.msra.mxu0 0.0
      %2861 = vmatprep.subr.mxu0 0.0
      %2862 = vmatpush1.msra.mxu0 0.0
      %2863 = vmatprep.subr.mxu0 0.0
      %2864 = vmatpush1.msra.mxu0 0.0
      %2865 = vmatprep.subr.mxu0 0.0
      %2866 = vmatpush1.msra.mxu0 0.0
      %2867 = vmatprep.subr.mxu0 0.0
      %2868 = vmatpush1.msra.mxu0 0.0
      %2869 = vmatprep.subr.mxu0 0.0
      %2870 = vmatpush1.msra.mxu0 0.0
      %2871 = vmatprep.subr.mxu0 0.0
      %2872 = vmatpush1.msra.mxu0 0.0
      %2873 = vmatprep.subr.mxu0 0.0
      %2874 = vmatpush1.msra.mxu0 0.0
      %2875 = vmatprep.subr.mxu0 0.0
      %2876 = vmatpush1.msra.mxu0 0.0
      %2877 = vmatprep.subr.mxu0 0.0
      %2878 = vmatpush1.msra.mxu0 0.0
      %2879 = vmatprep.subr.mxu0 0.0
      %2880 = vmatpush1.msra.mxu0 0.0
      %2881 = vmatprep.subr.mxu0 0.0
      %2882 = vmatpush1.msra.mxu0 0.0
      %2883 = vmatprep.subr.mxu0 0.0
      %2884 = vmatpush1.msra.mxu0 0.0
      %2885 = vmatprep.subr.mxu0 0.0
      %2886 = vmatpush1.msra.mxu0 0.0
      %2887 = vmatprep.subr.mxu0 0.0
      %2888 = vmatpush1.msra.mxu0 0.0
      %2889 = vmatprep.subr.mxu0 0.0
      %2890 = vmatpush1.msra.mxu0 0.0
      %2891 = vmatprep.subr.mxu0 0.0
      %2892 = vmatpush1.msra.mxu0 0.0
      %2893 = vmatprep.subr.mxu0 0.0
      %2894 = vmatpush1.msra.mxu0 0.0
      %2895 = vmatprep.subr.mxu0 0.0
      %2896 = vmatpush1.msra.mxu0 0.0
      %2897 = vmatprep.subr.mxu0 0.0
      %2898 = vmatpush1.msra.mxu0 0.0
      %2899 = vmatprep.subr.mxu0 0.0
      %2900 = vmatpush1.msra.mxu0 0.0
      %2901 = vmatprep.mubr.f32.mxu0 0.0
      %2902 = vmatmul.mubr.f32.gmra.mrb[0].mxu0 %v2835
      %v2903 = vpop.f32.mrb[0].mxu0
      %v2904 = vadd.f32 0.0, %v2903
      %v2905 = vpop.f32.mrb[0].mxu0
      %2906 = vdwg.mxu0
      %2907 = vrot.lane.b32.xlu0 %v212, 120
      %v2908 = vpop.permute.xlu0 %2907
      %v2911 = vsel %vm224, %v2821, 0
      %2913 = vmatprep.subr.mxu0 0.0
      %2914 = vmatpush1.msra.mxu0 %v2908
      %2915 = vmatprep.subr.mxu0 0.0
      %2916 = vmatpush1.msra.mxu0 0.0
      %2917 = vmatprep.subr.mxu0 0.0
      %2918 = vmatpush1.msra.mxu0 0.0
      %2919 = vmatprep.subr.mxu0 0.0
      %2920 = vmatpush1.msra.mxu0 0.0
      %2921 = vmatprep.subr.mxu0 0.0
      %2922 = vmatpush1.msra.mxu0 0.0
      %2923 = vmatprep.subr.mxu0 0.0
      %2924 = vmatpush1.msra.mxu0 0.0
      %2925 = vmatprep.subr.mxu0 0.0
      %2926 = vmatpush1.msra.mxu0 0.0
      %2927 = vmatprep.subr.mxu0 0.0
      %2928 = vmatpush1.msra.mxu0 0.0
      %2929 = vmatprep.subr.mxu0 0.0
      %2930 = vmatpush1.msra.mxu0 0.0
      %2931 = vmatprep.subr.mxu0 0.0
      %2932 = vmatpush1.msra.mxu0 0.0
      %2933 = vmatprep.subr.mxu0 0.0
      %2934 = vmatpush1.msra.mxu0 0.0
      %2935 = vmatprep.subr.mxu0 0.0
      %2936 = vmatpush1.msra.mxu0 0.0
      %2937 = vmatprep.subr.mxu0 0.0
      %2938 = vmatpush1.msra.mxu0 0.0
      %2939 = vmatprep.subr.mxu0 0.0
      %2940 = vmatpush1.msra.mxu0 0.0
      %2941 = vmatprep.subr.mxu0 0.0
      %2942 = vmatpush1.msra.mxu0 0.0
      %2943 = vmatprep.subr.mxu0 0.0
      %2944 = vmatpush1.msra.mxu0 0.0
      %2945 = vmatprep.subr.mxu0 0.0
      %2946 = vmatpush1.msra.mxu0 0.0
      %2947 = vmatprep.subr.mxu0 0.0
      %2948 = vmatpush1.msra.mxu0 0.0
      %2949 = vmatprep.subr.mxu0 0.0
      %2950 = vmatpush1.msra.mxu0 0.0
      %2951 = vmatprep.subr.mxu0 0.0
      %2952 = vmatpush1.msra.mxu0 0.0
      %2953 = vmatprep.subr.mxu0 0.0
      %2954 = vmatpush1.msra.mxu0 0.0
      %2955 = vmatprep.subr.mxu0 0.0
      %2956 = vmatpush1.msra.mxu0 0.0
      %2957 = vmatprep.subr.mxu0 0.0
      %2958 = vmatpush1.msra.mxu0 0.0
      %2959 = vmatprep.subr.mxu0 0.0
      %2960 = vmatpush1.msra.mxu0 0.0
      %2961 = vmatprep.subr.mxu0 0.0
      %2962 = vmatpush1.msra.mxu0 0.0
      %2963 = vmatprep.subr.mxu0 0.0
      %2964 = vmatpush1.msra.mxu0 0.0
      %2965 = vmatprep.subr.mxu0 0.0
      %2966 = vmatpush1.msra.mxu0 0.0
      %2967 = vmatprep.subr.mxu0 0.0
      %2968 = vmatpush1.msra.mxu0 0.0
      %2969 = vmatprep.subr.mxu0 0.0
      %2970 = vmatpush1.msra.mxu0 0.0
      %2971 = vmatprep.subr.mxu0 0.0
      %2972 = vmatpush1.msra.mxu0 0.0
      %2973 = vmatprep.subr.mxu0 0.0
      %2974 = vmatpush1.msra.mxu0 0.0
      %2975 = vmatprep.subr.mxu0 0.0
      %2976 = vmatpush1.msra.mxu0 0.0
      %2977 = vmatprep.mubr.f32.mxu0 0.0
      %2978 = vmatmul.mubr.f32.gmra.mrb[0].mxu0 %v2911
      %v2979 = vpop.f32.mrb[0].mxu0
      %v2980 = vadd.f32 0.0, %v2979
      %v2981 = vpop.f32.mrb[0].mxu0
      %2982 = vdwg.mxu0
      %v2984 = vsel %vm224, %v2980, 0
      %2986 = vmatprep.subr.mxu0 0.0
      %2987 = vmatpush1.msra.mxu0 %v2904
      %2988 = vmatprep.subr.mxu0 0.0
      %2989 = vmatpush1.msra.mxu0 0.0
      %2990 = vmatprep.subr.mxu0 0.0
      %2991 = vmatpush1.msra.mxu0 0.0
      %2992 = vmatprep.subr.mxu0 0.0
      %2993 = vmatpush1.msra.mxu0 0.0
      %2994 = vmatprep.subr.mxu0 0.0
      %2995 = vmatpush1.msra.mxu0 0.0
      %2996 = vmatprep.subr.mxu0 0.0
      %2997 = vmatpush1.msra.mxu0 0.0
      %2998 = vmatprep.subr.mxu0 0.0
      %2999 = vmatpush1.msra.mxu0 0.0
      %3000 = vmatprep.subr.mxu0 0.0
      %3001 = vmatpush1.msra.mxu0 0.0
      %3002 = vmatprep.subr.mxu0 0.0
      %3003 = vmatpush1.msra.mxu0 0.0
      %3004 = vmatprep.subr.mxu0 0.0
      %3005 = vmatpush1.msra.mxu0 0.0
      %3006 = vmatprep.subr.mxu0 0.0
      %3007 = vmatpush1.msra.mxu0 0.0
      %3008 = vmatprep.subr.mxu0 0.0
      %3009 = vmatpush1.msra.mxu0 0.0
      %3010 = vmatprep.subr.mxu0 0.0
      %3011 = vmatpush1.msra.mxu0 0.0
      %3012 = vmatprep.subr.mxu0 0.0
      %3013 = vmatpush1.msra.mxu0 0.0
      %3014 = vmatprep.subr.mxu0 0.0
      %3015 = vmatpush1.msra.mxu0 0.0
      %3016 = vmatprep.subr.mxu0 0.0
      %3017 = vmatpush1.msra.mxu0 0.0
      %3018 = vmatprep.subr.mxu0 0.0
      %3019 = vmatpush1.msra.mxu0 0.0
      %3020 = vmatprep.subr.mxu0 0.0
      %3021 = vmatpush1.msra.mxu0 0.0
      %3022 = vmatprep.subr.mxu0 0.0
      %3023 = vmatpush1.msra.mxu0 0.0
      %3024 = vmatprep.subr.mxu0 0.0
      %3025 = vmatpush1.msra.mxu0 0.0
      %3026 = vmatprep.subr.mxu0 0.0
      %3027 = vmatpush1.msra.mxu0 0.0
      %3028 = vmatprep.subr.mxu0 0.0
      %3029 = vmatpush1.msra.mxu0 0.0
      %3030 = vmatprep.subr.mxu0 0.0
      %3031 = vmatpush1.msra.mxu0 0.0
      %3032 = vmatprep.subr.mxu0 0.0
      %3033 = vmatpush1.msra.mxu0 0.0
      %3034 = vmatprep.subr.mxu0 0.0
      %3035 = vmatpush1.msra.mxu0 0.0
      %3036 = vmatprep.subr.mxu0 0.0
      %3037 = vmatpush1.msra.mxu0 0.0
      %3038 = vmatprep.subr.mxu0 0.0
      %3039 = vmatpush1.msra.mxu0 0.0
      %3040 = vmatprep.subr.mxu0 0.0
      %3041 = vmatpush1.msra.mxu0 0.0
      %3042 = vmatprep.subr.mxu0 0.0
      %3043 = vmatpush1.msra.mxu0 0.0
      %3044 = vmatprep.subr.mxu0 0.0
      %3045 = vmatpush1.msra.mxu0 0.0
      %3046 = vmatprep.subr.mxu0 0.0
      %3047 = vmatpush1.msra.mxu0 0.0
      %3048 = vmatprep.subr.mxu0 0.0
      %3049 = vmatpush1.msra.mxu0 0.0
      %3050 = vmatprep.mubr.f32.mxu0 0.0
      %3051 = vmatmul.mubr.f32.gmra.mrb[0].mxu0 %v2984
      %v3052 = vpop.f32.mrb[0].mxu0
      %v3053 = vadd.f32 0.0, %v3052
      %v3054 = vpop.f32.mrb[0].mxu0
      %3055 = vdwg.mxu0
      %3056 = vmatprep.subr.mxu0 0.0
      %3057 = vmatpush1.msra.mxu0 %v1055
      %3058 = vmatprep.subr.mxu0 0.0
      %3059 = vmatpush1.msra.mxu0 0.0
      %3060 = vmatprep.subr.mxu0 0.0
      %3061 = vmatpush1.msra.mxu0 0.0
      %3062 = vmatprep.subr.mxu0 0.0
      %3063 = vmatpush1.msra.mxu0 0.0
      %3064 = vmatprep.subr.mxu0 0.0
      %3065 = vmatpush1.msra.mxu0 0.0
      %3066 = vmatprep.subr.mxu0 0.0
      %3067 = vmatpush1.msra.mxu0 0.0
      %3068 = vmatprep.subr.mxu0 0.0
      %3069 = vmatpush1.msra.mxu0 0.0
      %3070 = vmatprep.subr.mxu0 0.0
      %3071 = vmatpush1.msra.mxu0 0.0
      %3072 = vmatprep.subr.mxu0 0.0
      %3073 = vmatpush1.msra.mxu0 0.0
      %3074 = vmatprep.subr.mxu0 0.0
      %3075 = vmatpush1.msra.mxu0 0.0
      %3076 = vmatprep.subr.mxu0 0.0
      %3077 = vmatpush1.msra.mxu0 0.0
      %3078 = vmatprep.subr.mxu0 0.0
      %3079 = vmatpush1.msra.mxu0 0.0
      %3080 = vmatprep.subr.mxu0 0.0
      %3081 = vmatpush1.msra.mxu0 0.0
      %3082 = vmatprep.subr.mxu0 0.0
      %3083 = vmatpush1.msra.mxu0 0.0
      %3084 = vmatprep.subr.mxu0 0.0
      %3085 = vmatpush1.msra.mxu0 0.0
      %3086 = vmatprep.subr.mxu0 0.0
      %3087 = vmatpush1.msra.mxu0 0.0
      %3088 = vmatprep.subr.mxu0 0.0
      %3089 = vmatpush1.msra.mxu0 0.0
      %3090 = vmatprep.subr.mxu0 0.0
      %3091 = vmatpush1.msra.mxu0 0.0
      %3092 = vmatprep.subr.mxu0 0.0
      %3093 = vmatpush1.msra.mxu0 0.0
      %3094 = vmatprep.subr.mxu0 0.0
      %3095 = vmatpush1.msra.mxu0 0.0
      %3096 = vmatprep.subr.mxu0 0.0
      %3097 = vmatpush1.msra.mxu0 0.0
      %3098 = vmatprep.subr.mxu0 0.0
      %3099 = vmatpush1.msra.mxu0 0.0
      %3100 = vmatprep.subr.mxu0 0.0
      %3101 = vmatpush1.msra.mxu0 0.0
      %3102 = vmatprep.subr.mxu0 0.0
      %3103 = vmatpush1.msra.mxu0 0.0
      %3104 = vmatprep.subr.mxu0 0.0
      %3105 = vmatpush1.msra.mxu0 0.0
      %3106 = vmatprep.subr.mxu0 0.0
      %3107 = vmatpush1.msra.mxu0 0.0
      %3108 = vmatprep.subr.mxu0 0.0
      %3109 = vmatpush1.msra.mxu0 0.0
      %3110 = vmatprep.subr.mxu0 0.0
      %3111 = vmatpush1.msra.mxu0 0.0
      %3112 = vmatprep.subr.mxu0 0.0
      %3113 = vmatpush1.msra.mxu0 0.0
      %3114 = vmatprep.subr.mxu0 0.0
      %3115 = vmatpush1.msra.mxu0 0.0
      %3116 = vmatprep.subr.mxu0 0.0
      %3117 = vmatpush1.msra.mxu0 0.0
      %3118 = vmatprep.subr.mxu0 0.0
      %3119 = vmatpush1.msra.mxu0 0.0
      %3120 = vmatprep.mubr.f32.mxu0 0.0
      %3121 = vmatmul.mubr.f32.gmra.mrb[0].mxu0 %v2911
      %v3122 = vpop.f32.mrb[0].mxu0
      %v3123 = vadd.f32 0.0, %v3122
      %v3124 = vpop.f32.mrb[0].mxu0
      %3125 = vdwg.mxu0
      %v3127 = vsel %vm224, %v3123, 0
      %3129 = vmatprep.subr.mxu0 0.0
      %3130 = vmatpush1.msra.mxu0 %v2904
      %3131 = vmatprep.subr.mxu0 0.0
      %3132 = vmatpush1.msra.mxu0 0.0
      %3133 = vmatprep.subr.mxu0 0.0
      %3134 = vmatpush1.msra.mxu0 0.0
      %3135 = vmatprep.subr.mxu0 0.0
      %3136 = vmatpush1.msra.mxu0 0.0
      %3137 = vmatprep.subr.mxu0 0.0
      %3138 = vmatpush1.msra.mxu0 0.0
      %3139 = vmatprep.subr.mxu0 0.0
      %3140 = vmatpush1.msra.mxu0 0.0
      %3141 = vmatprep.subr.mxu0 0.0
      %3142 = vmatpush1.msra.mxu0 0.0
      %3143 = vmatprep.subr.mxu0 0.0
      %3144 = vmatpush1.msra.mxu0 0.0
      %3145 = vmatprep.subr.mxu0 0.0
      %3146 = vmatpush1.msra.mxu0 0.0
      %3147 = vmatprep.subr.mxu0 0.0
      %3148 = vmatpush1.msra.mxu0 0.0
      %3149 = vmatprep.subr.mxu0 0.0
      %3150 = vmatpush1.msra.mxu0 0.0
      %3151 = vmatprep.subr.mxu0 0.0
      %3152 = vmatpush1.msra.mxu0 0.0
      %3153 = vmatprep.subr.mxu0 0.0
      %3154 = vmatpush1.msra.mxu0 0.0
      %3155 = vmatprep.subr.mxu0 0.0
      %3156 = vmatpush1.msra.mxu0 0.0
      %3157 = vmatprep.subr.mxu0 0.0
      %3158 = vmatpush1.msra.mxu0 0.0
      %3159 = vmatprep.subr.mxu0 0.0
      %3160 = vmatpush1.msra.mxu0 0.0
      %3161 = vmatprep.subr.mxu0 0.0
      %3162 = vmatpush1.msra.mxu0 0.0
      %3163 = vmatprep.subr.mxu0 0.0
      %3164 = vmatpush1.msra.mxu0 0.0
      %3165 = vmatprep.subr.mxu0 0.0
      %3166 = vmatpush1.msra.mxu0 0.0
      %3167 = vmatprep.subr.mxu0 0.0
      %3168 = vmatpush1.msra.mxu0 0.0
      %3169 = vmatprep.subr.mxu0 0.0
      %3170 = vmatpush1.msra.mxu0 0.0
      %3171 = vmatprep.subr.mxu0 0.0
      %3172 = vmatpush1.msra.mxu0 0.0
      %3173 = vmatprep.subr.mxu0 0.0
      %3174 = vmatpush1.msra.mxu0 0.0
      %3175 = vmatprep.subr.mxu0 0.0
      %3176 = vmatpush1.msra.mxu0 0.0
      %3177 = vmatprep.subr.mxu0 0.0
      %3178 = vmatpush1.msra.mxu0 0.0
      %3179 = vmatprep.subr.mxu0 0.0
      %3180 = vmatpush1.msra.mxu0 0.0
      %3181 = vmatprep.subr.mxu0 0.0
      %3182 = vmatpush1.msra.mxu0 0.0
      %3183 = vmatprep.subr.mxu0 0.0
      %3184 = vmatpush1.msra.mxu0 0.0
      %3185 = vmatprep.subr.mxu0 0.0
      %3186 = vmatpush1.msra.mxu0 0.0
      %3187 = vmatprep.subr.mxu0 0.0
      %3188 = vmatpush1.msra.mxu0 0.0
      %3189 = vmatprep.subr.mxu0 0.0
      %3190 = vmatpush1.msra.mxu0 0.0
      %3191 = vmatprep.subr.mxu0 0.0
      %3192 = vmatpush1.msra.mxu0 0.0
      %3193 = vmatprep.mubr.f32.mxu0 0.0
      %3194 = vmatmul.mubr.f32.gmra.mrb[0].mxu0 %v3127
      %v3195 = vpop.f32.mrb[0].mxu0
      %v3196 = vadd.f32 0.0, %v3195
      %v3197 = vpop.f32.mrb[0].mxu0
      %3198 = vdwg.mxu0
      %s3200 = vtos %v214
      %v3201 = vstv %s3200
      %v3203 = vmul.f32 %v3201, %v3053
      %v3204 = vsub.f32 0.0, %v3196
      %v3205 = vmax.f32 %v3204, 0.0
      %v3206 = vand.u32 2147483647, %v3204
      %v3207 = vsub.f32 0.0, %v3206
      %v3208 = vmul.f32 %v3207, 1.442695
      %v3209 = vpow.pop %v3208
      %v3210 = vadd.f32 %v3209, 1.0
      %v3211 = vlog2.pop %v3210
      %v3212 = vmul.f32 %v3211, 0.6931472
      %v3213 = vadd.f32 %v3205, %v3212
      %v3214 = vmul.f32 %v3203, %v3213
      %v3215 = vsub.f32 1.0, %v3053
      %v3216 = vmax.f32 %v3196, 0.0
      %v3217 = vand.u32 2147483647, %v3196
      %v3218 = vsub.f32 0.0, %v3217
      %v3219 = vmul.f32 %v3218, 1.442695
      %v3220 = vpow.pop %v3219
      %v3221 = vadd.f32 %v3220, 1.0
      %v3222 = vlog2.pop %v3221
      %v3223 = vmul.f32 %v3222, 0.6931472
      %v3224 = vadd.f32 %v3216, %v3223
      %v3225 = vmul.f32 %v3215, %v3224
      %v3226 = vadd.f32 %v3214, %v3225
      %v3227 = vmul.f32 %v3226, %v210
      %v3228 = vsel %vm224, %v3227, 0.0
      %3229 = vadd.xlane.f32.xlu0 %v3228
      %v3230 = vpop.xlane.xlu0 %3229
      %v3231 = vrot.slane %v3230, 4
      %v3232 = vadd.f32 %v3230, %v3231
      %v3233 = vrot.slane %v3232, 2
      %v3234 = vadd.f32 %v3232, %v3233
      %v3235 = vrot.slane %v3234, 1
      %v3236 = vadd.f32 %v3234, %v3235
      %s3237 = vtos %v3236
      %v3238 = vstv %s3237
      %v3239 = vmul.f32 %v3238, 0.06666667
      %v3240 = vmul.f32 %v3213, %v211
      %v3241 = vsel %vm224, %v3240, 0.0
      %3242 = vadd.xlane.f32.xlu0 %v3241
      %v3243 = vpop.xlane.xlu0 %3242
      %v3244 = vrot.slane %v3243, 4
      %v3245 = vadd.f32 %v3243, %v3244
      %v3246 = vrot.slane %v3245, 2
      %v3247 = vadd.f32 %v3245, %v3246
      %v3248 = vrot.slane %v3247, 1
      %v3249 = vadd.f32 %v3247, %v3248
      %s3250 = vtos %v3249
      %v3251 = vstv %s3250
      %v3252 = vmul.f32 %v3251, 0.16666667
      %v3253 = vmul.f32 %v3252, 0.1
      %v3254 = vadd.f32 %v3239, %v3253
      %v3255 = vadd.f32 %v787, 1.0
      %v3256 = vmul.f32 %v708, %v708
      %v3257 = vsub.f32 %v3255, %v3256
      %v3258 = vmul.f32 %v787, 1.442695
      %v3259 = vpow.pop %v3258
      %v3260 = vsub.f32 %v3257, %v3259
      %vm3261 = vcmask 122880
      %v3262 = vsel %vm3261, %v3260, 0.0
      %3263 = vadd.xlane.f32.xlu0 %v3262
      %v3264 = vpop.xlane.xlu0 %3263
      %v3265 = vrot.slane %v3264, 4
      %v3266 = vadd.f32 %v3264, %v3265
      %v3267 = vrot.slane %v3266, 2
      %v3268 = vadd.f32 %v3266, %v3267
      %v3269 = vrot.slane %v3268, 1
      %v3270 = vadd.f32 %v3268, %v3269
      %s3271 = vtos %v3270
      %v3272 = vstv %s3271
      %v3273 = vmul.f32 %v3272, -0.5
      %v3274 = vrcp.pop 16.0
      %v3275 = vmul.f32 %v3273, %v3274
      %v3276 = vand.u32 2147483647, %v957
      %vm3277 = vcmask 319488
      %v3278 = vsel %vm3277, %v3276, -inf
      %3279 = vmax.xlane.f32.xlu0 %v3278
      %v3280 = vpop.xlane.xlu0 %3279
      %v3281 = vrot.slane %v3280, 4
      %v3282 = vmax.f32 %v3280, %v3281
      %v3283 = vrot.slane %v3282, 2
      %v3284 = vmax.f32 %v3282, %v3283
      %v3285 = vrot.slane %v3284, 1
      %v3286 = vmax.f32 %v3284, %v3285
      %s3287 = vtos %v3286
      %v3288 = vstv %s3287
      %v3289 = vsel %vm3261, %v787, -inf
      %3290 = vmax.xlane.f32.xlu0 %v3289
      %v3291 = vpop.xlane.xlu0 %3290
      %v3292 = vrot.slane %v3291, 4
      %v3293 = vmax.f32 %v3291, %v3292
      %v3294 = vrot.slane %v3293, 2
      %v3295 = vmax.f32 %v3293, %v3294
      %v3296 = vrot.slane %v3295, 1
      %v3297 = vmax.f32 %v3295, %v3296
      %s3298 = vtos %v3297
      %v3299 = vstv %s3298
      %v3300 = vadd.f32 %v3254, %v3275
      %3302 = vrot.lane.b32.xlu0 %v708, 5
      %v3303 = vpop.permute.xlu0 %3302
      %3306 = vrot.lane.b32.xlu0 %v787, 21
      %v3307 = vpop.permute.xlu0 %3306
      %3309 = vrot.lane.b32.xlu0 %v957, 37
      %v3310 = vpop.permute.xlu0 %3309
      %vm3312 = vcmask 7168
      %v3313 = vsel %vm3312, %v3254, %v3275
      %vm3314 = vcmask 15360
      %v3315 = vsel %vm3314, %v3313, %v3300
      %vm3316 = vcmask 23552
      %v3317 = vsel %vm3316, %v3315, %v3288
      %v3318 = vsel %vm241, %v3317, %v3299
      %vm3319 = vcmask 39936
      %v3320 = vsel %vm3319, %v3318, %v3303
      %vm3321 = vcmask 171008
      %v3322 = vsel %vm3321, %v3320, %v3307
      %vm3323 = vcmask 302080
      %v3324 = vsel %vm3323, %v3322, %v3310
      %vm3325 = vcmask 629760
      %v3326 = vsel %vm3325, %v3324, 0.0
      %v3327 = vsel %vm2375, %v3326, 0.0
      %3328 = vrot.lane.b32.xlu0 %v2821, 16
      %v3329 = vpop.permute.xlu0 %3328
      %3332 = vrot.lane.b32.xlu0 %v3327, 24
      %v3333 = vpop.permute.xlu0 %3332
      %v3335 = vsel %vm224, %v1055, %v2050
      %v3336 = vsel %vm804, %v3335, %v3329
      %v3337 = vsel %vm1108, %v3336, %v3333
      %3338 = vst [vmem:[%s192] sm:$0xff] %v3337
      %p3339 = scmp.lt.s32.totalorder %s15, 1
      %s3340 = scalar_select %p3339, %s15, 1
      %s3341 = smul.addr %s3340, 8
      %s3342 = scalar_lea.vmem %s4, %s3341
      // Predicated region
      $region44: #{forward.1} parent=35 // pred_check
        %p3343 = pneg %p122
      $region45: #{forward.1} parent=35 // pred_check_branch
        %3345 = sbr.rel (%p3343) target = $region47
      $region46: #{forward.1} parent=35 // pred_region
        _
      $region47: #{forward.1} parent=35 // pred_fallthru
        _
    $region36: #{forward.1} parent=5 // pred_fallthru
      _
    %p3346 = scmp.le.s32.totalorder 2, %s10
    // Predicated region
    $region48: #{forward.1} parent=5 // pred_check
      %p3347 = pneg %p3346
    $region49: #{forward.1} parent=5 // pred_check_branch
      %3349 = sbr.rel (%p3347) target = $region51
    $region50: #{forward.1} parent=5 // pred_region
      %s3350 = ssub.s32 %s10, 2
      // Predicated region
      $region52: #{forward.1} parent=50 // pred_check
        %p3351 = pneg %p128
      $region53: #{forward.1} parent=50 // pred_check_branch
        %3353 = sbr.rel (%p3351) target = $region55
      $region54: #{forward.1} parent=50 // pred_region
        %p3354 = scmp.lt.s32.totalorder %s16, 1
        %s3355 = scalar_select %p3354, %s16, 1
        %s3356 = smul.addr %s3355, 8
        %s3357 = scalar_lea.vmem %s4, %s3356
      $region55: #{forward.1} parent=50 // pred_fallthru
        _
    $region51: #{forward.1} parent=5 // pred_fallthru
      _
  $region6: #{forward.1} parent=0 // loop_footer
    %s14 = sadd.s32 1, %s10
  $region7: #{forward.1} parent=0 // loop_footer_branch
    %9 = sbr.rel target = $region3
  $region8: #{forward.1} parent=0 // loop_exit
    _

</llo_original>
